<compile_context>
chip_gen: v7x
topology: tpu7x:2x2x1
jax: 0.10.0
libtpu: 0.0.40
codegen_flags: <defaults>
</compile_context>

<pallas_src>
import functools

import numpy as np

import jax
import jax.numpy as jnp
from jax import lax
from jax.experimental import pallas as pl
from jax.experimental.pallas import tpu as pltpu


def _round_up(x, m):
    return (x + m - 1) // m * m


# ----------------------------------------------------------------------------
# Static conv geometry: per-tap roll amounts (row axis) and 0/1 validity mask.
# Rows are p = b*H*W + h*W + w; tap (dh,dw) reads row p + dh*W + dw, which a
# sublane roll by (-(dh*W+dw)) mod ppad delivers; the mask zeroes image-border
# wraps, cross-batch-image wraps and (if any) padded rows.
# ----------------------------------------------------------------------------
@functools.lru_cache(maxsize=None)
def _tap_geometry(B, H, W, cpad, ppad):
    P = B * H * W
    p = np.arange(ppad)
    h = (p % (H * W)) // W
    w = p % W
    shifts, masks = [], []
    for kh in range(3):
        for kw in range(3):
            dh, dw = kh - 1, kw - 1
            off = dh * W + dw
            shifts.append(int((-off) % ppad))
            valid = ((p < P) & (h + dh >= 0) & (h + dh < H)
                     & (w + dw >= 0) & (w + dw < W))
            masks.append(np.repeat(valid[:, None], cpad, axis=1))
    mask = np.concatenate(masks, axis=1).astype(np.float32)    # (ppad, 9*cpad)
    return tuple(shifts), mask


# ----------------------------------------------------------------------------
# Kernel 1: fused conv stack (3 x [3x3 conv + folded BN + LeakyReLU(0.2)])
#   x_ref     : (ppad, CPAD) f32   rows = b*H*W + h*W + w, lanes = channels
#   mask_ref  : (ppad, 9*CPAD) f32 per-tap validity mask (tap-major blocks)
#   w_ref     : (L, 9*CPAD, CPAD) bf16  rows = tap*CPAD + cin, cols = cout
#   scale_ref : (L, 1, CPAD) f32   folded BN scale
#   shift_ref : (L, 1, CPAD) f32   folded BN shift (conv bias folded in)
# ----------------------------------------------------------------------------
def _conv_stack_kernel(x_ref, mask_ref, w_ref, scale_ref, shift_ref, o_ref,
                       *, n_layers, shifts):
    act = x_ref[...]                                    # f32, stays f32 between layers
    mask = mask_ref[...]
    for l in range(n_layers):
        # Neighbour gather: static sublane rotations (XLU), then border mask (VPU).
        rolled = [act if s == 0 else pltpu.roll(act, s, axis=0) for s in shifts]
        taps = jnp.concatenate(rolled, axis=-1) * mask  # (ppad, 9*CPAD)
        # One K=288 MXU pass per layer (bf16 operands, f32 accumulate).
        z = jnp.dot(taps.astype(jnp.bfloat16), w_ref[l],
                    preferred_element_type=jnp.float32)
        z = z * scale_ref[l] + shift_ref[l]             # eval-mode BN (folded) in f32
        act = jnp.where(z >= 0.0, z, 0.2 * z)           # LeakyReLU(0.2)
    o_ref[...] = act


def conv_stack(x0, tap_mask, conv_w, conv_scale, conv_shift, *, shifts):
    ppad, cpad = x0.shape
    n_layers = conv_scale.shape[0]
    kernel = functools.partial(_conv_stack_kernel, n_layers=n_layers, shifts=shifts)
    return pl.pallas_call(
        kernel,
        out_shape=jax.ShapeDtypeStruct((ppad, cpad), jnp.float32),
        grid=(1,),
        in_specs=[
            pl.BlockSpec((ppad, cpad), lambda i: (0, 0)),
            pl.BlockSpec(tuple(tap_mask.shape), lambda i: (0, 0)),
            pl.BlockSpec(conv_w.shape, lambda i: (0, 0, 0)),
            pl.BlockSpec(conv_scale.shape, lambda i: (0, 0, 0)),
            pl.BlockSpec(conv_shift.shape, lambda i: (0, 0, 0)),
        ],
        out_specs=pl.BlockSpec((ppad, cpad), lambda i: (0, 0)),
        compiler_params=pltpu.CompilerParams(dimension_semantics=("arbitrary",)),
    )(x0, tap_mask, conv_w, conv_scale, conv_shift)


# ----------------------------------------------------------------------------
# Kernel 2: fused dense stack
#   x -> [W1 + b1, ReLU] -> [W2 + b2, ReLU] -> [Wbr + bbr, ReLU]
#     -> [Wh + bh] -> MixedActivation (sigmoid mask) | Tanh (tanh mask)
#   Wbr columns: [0:32) smoe[0], [32:64) comb[0]  (same input h).
#   Wh is block-diagonal: smoe head -> cols [0, head), comb head -> [head, 2*head).
#   sig/tanh column masks are precomputed (1, DP) 0/1 constants.
# ----------------------------------------------------------------------------
def _dense_stack_kernel(x_ref, w1_ref, b1_ref, w2_ref, b2_ref,
                        wbr_ref, bbr_ref, wh_ref, bh_ref,
                        sigm_ref, tanm_ref, o_ref):
    bf = jnp.bfloat16
    h = jnp.dot(x_ref[...].astype(bf), w1_ref[...],
                preferred_element_type=jnp.float32) + b1_ref[...]
    h = jnp.maximum(h, 0.0)                              # lin[0] ReLU (Dropout = id, eval)
    h = jnp.dot(h.astype(bf), w2_ref[...],
                preferred_element_type=jnp.float32) + b2_ref[...]
    h = jnp.maximum(h, 0.0)                              # lin[1] ReLU
    h = jnp.dot(h.astype(bf), wbr_ref[...],
                preferred_element_type=jnp.float32) + bbr_ref[...]
    h = jnp.maximum(h, 0.0)                              # smoe[0] | comb[0] ReLU
    z = jnp.dot(h.astype(bf), wh_ref[...],
                preferred_element_type=jnp.float32) + bh_ref[...]
    sm = sigm_ref[...]
    tm = tanm_ref[...]
    z = sm * jax.nn.sigmoid(z) + tm * jnp.tanh(z) + (1.0 - sm - tm) * z
    o_ref[...] = z


def dense_stack(x, w1, b1, w2, b2, wbr, bbr, wh, bh, sig_mask, tanh_mask):
    m, _ = x.shape
    n = wh.shape[1]
    args = (x, w1, b1, w2, b2, wbr, bbr, wh, bh, sig_mask, tanh_mask)
    return pl.pallas_call(
        _dense_stack_kernel,
        out_shape=jax.ShapeDtypeStruct((m, n), jnp.float32),
        grid=(1,),
        in_specs=[pl.BlockSpec(a.shape, lambda i, nd=a.ndim: (0,) * nd) for a in args],
        out_specs=pl.BlockSpec((m, n), lambda i: (0, 0)),
        compiler_params=pltpu.CompilerParams(dimension_semantics=("arbitrary",)),
    )(*args)


# ----------------------------------------------------------------------------
# Deterministic raw (torch-layout) parameter init.
# ----------------------------------------------------------------------------
def init_raw_params(key, n_kernels=4, block_size=8, n_channels=1,
                    conv_channels=(8, 16, 32), lin_feats=(64, 32),
                    smoe_feat=32, comb_feat=32):
    head = 3 * n_kernels + n_kernels ** 2

    def uniform(k, shape, bound):
        return jax.random.uniform(k, shape, jnp.float32, -bound, bound)

    def linear_wb(k, fin, fout):
        kw_, kb_ = jax.random.split(k)
        bound = 1.0 / fin ** 0.5
        return uniform(kw_, (fout, fin), bound), uniform(kb_, (fout,), bound)

    raw = {"conv_channels": (n_channels,) + tuple(conv_channels), "conv": []}
    chans = raw["conv_channels"]
    for cin, cout in zip(chans[:-1], chans[1:]):
        key, kw_, kb_ = jax.random.split(key, 3)
        bound = 1.0 / (cin * 9) ** 0.5
        w = uniform(kw_, (cout, cin, 3, 3), bound)       # torch Conv2d layout
        b = uniform(kb_, (cout,), bound)
        raw["conv"].append((w, b,
                            jnp.ones((cout,), jnp.float32),    # BN gamma
                            jnp.zeros((cout,), jnp.float32),   # BN beta
                            jnp.zeros((cout,), jnp.float32),   # BN running_mean
                            jnp.ones((cout,), jnp.float32)))   # BN running_var
    c_last = conv_channels[-1]
    f0 = c_last * block_size ** 2                        # 2048
    f1, f2 = lin_feats
    key, k1, k2 = jax.random.split(key, 3)
    raw["lin"] = [linear_wb(k1, f0, f1), linear_wb(k2, f1, f2)]
    key, ks1, kc1, ksh, kch = jax.random.split(key, 5)
    raw["smoe_hidden"] = linear_wb(ks1, f2, smoe_feat)
    raw["comb_hidden"] = linear_wb(kc1, f2, comb_feat)
    raw["smoe_head"] = linear_wb(ksh, smoe_feat, head)
    raw["comb_head"] = linear_wb(kch, comb_feat, head)
    return raw


# ----------------------------------------------------------------------------
# Pack raw params into the fused / padded / bf16 kernel layout (init-time only).
# ----------------------------------------------------------------------------
def pack_params(raw, n_kernels=4, block_size=8):
    H = W = block_size
    chans = raw["conv_channels"]
    CPAD = max(chans)                                    # 32
    DP = 128                                             # dense lane padding
    head = 3 * n_kernels + n_kernels ** 2                # 28
    n_layers = len(chans) - 1

    conv_w = jnp.zeros((n_layers, 9 * CPAD, CPAD), jnp.float32)
    conv_scale = jnp.zeros((n_layers, 1, CPAD), jnp.float32)
    conv_shift = jnp.zeros((n_layers, 1, CPAD), jnp.float32)
    for l, (w, b, gamma, beta, rmean, rvar) in enumerate(raw["conv"]):
        cout, cin = w.shape[0], w.shape[1]
        scale = gamma / jnp.sqrt(rvar + 1e-5)            # eval-mode BN fold
        shift = beta + (b - rmean) * scale
        wt = jnp.transpose(w, (2, 3, 1, 0)).reshape(9, cin, cout)   # (tap, Cin, Cout)
        blk = jnp.zeros((9, CPAD, CPAD), jnp.float32).at[:, :cin, :cout].set(wt)
        conv_w = conv_w.at[l].set(blk.reshape(9 * CPAD, CPAD))
        conv_scale = conv_scale.at[l, 0, :cout].set(scale)
        conv_shift = conv_shift.at[l, 0, :cout].set(shift)
    params = {"conv_w": conv_w.astype(jnp.bfloat16),
              "conv_scale": conv_scale, "conv_shift": conv_shift}

    c_last = chans[-1]
    (w1, b1), (w2, b2) = raw["lin"]
    f1, f2 = w1.shape[0], w2.shape[0]
    K1 = H * W * CPAD
    # lin[0]: rows permuted from torch CHW flatten order to HWC (with CPAD stride)
    w1t = jnp.transpose(w1.T.reshape(c_last, H * W, f1), (1, 0, 2))   # (HW, C, f1)
    w1_hwc = jnp.zeros((H * W, CPAD, f1), jnp.float32).at[:, :c_last, :].set(w1t)
    params["W1"] = (jnp.zeros((K1, DP), jnp.float32)
                    .at[:, :f1].set(w1_hwc.reshape(K1, f1)).astype(jnp.bfloat16))
    params["b1"] = jnp.zeros((1, DP), jnp.float32).at[0, :f1].set(b1)
    params["W2"] = (jnp.zeros((DP, DP), jnp.float32)
                    .at[:f1, :f2].set(w2.T).astype(jnp.bfloat16))
    params["b2"] = jnp.zeros((1, DP), jnp.float32).at[0, :f2].set(b2)

    ws1, bs1 = raw["smoe_hidden"]
    wc1, bc1 = raw["comb_hidden"]
    sfe, cfe = ws1.shape[0], wc1.shape[0]
    wbr = jnp.zeros((DP, DP), jnp.float32)
    wbr = wbr.at[:f2, :sfe].set(ws1.T).at[:f2, sfe:sfe + cfe].set(wc1.T)
    params["Wbr"] = wbr.astype(jnp.bfloat16)
    params["bbr"] = (jnp.zeros((1, DP), jnp.float32)
                     .at[0, :sfe].set(bs1).at[0, sfe:sfe + cfe].set(bc1))

    wsh, bsh = raw["smoe_head"]
    wch, bch = raw["comb_head"]
    wh = jnp.zeros((DP, DP), jnp.float32)
    wh = wh.at[:sfe, :head].set(wsh.T).at[sfe:sfe + cfe, head:2 * head].set(wch.T)
    params["Wh"] = wh.astype(jnp.bfloat16)
    params["bh"] = (jnp.zeros((1, DP), jnp.float32)
                    .at[0, :head].set(bsh).at[0, head:2 * head].set(bch))

    params["sig_mask"] = jnp.zeros((1, DP), jnp.float32).at[0, :3 * n_kernels].set(1.0)
    params["tanh_mask"] = jnp.zeros((1, DP), jnp.float32).at[0, head:2 * head].set(1.0)
    return params


# ----------------------------------------------------------------------------
# Forward pass == TorchSMoE_AE.forward (eval mode)
# ----------------------------------------------------------------------------
def smoe_ae_forward(x, params, n_kernels=4):
    if x.ndim == 3:                                      # x.unsqueeze(1)
        x = x[:, None]
    x = x.astype(jnp.float32)
    B, C, H, W = x.shape
    CPAD = params["conv_w"].shape[-1]
    P = B * H * W
    ppad = _round_up(P, 8)

    # NCHW -> (rows = b*H*W + h*W + w, lanes = channels), channel-padded
    x_rows = jnp.transpose(x, (0, 2, 3, 1)).reshape(P, C)
    x0 = jnp.zeros((ppad, CPAD), jnp.float32).at[:P, :C].set(x_rows)

    shifts, tap_mask = _tap_geometry(B, H, W, CPAD, ppad)   # cached numpy constants
    conv_out = conv_stack(x0, tap_mask, params["conv_w"],
                          params["conv_scale"], params["conv_shift"], shifts=shifts)

    # torch Flatten (NCHW order) is handled by the pre-permuted W1 rows, so the
    # conv output only needs a free contiguous reshape here (no transpose).
    feat = conv_out[:P].reshape(B, H * W * CPAD)
    bp = _round_up(B, 8)
    featp = jnp.zeros((bp, H * W * CPAD), jnp.float32).at[:B].set(feat)

    head = 3 * n_kernels + n_kernels ** 2
    out = dense_stack(featp, params["W1"], params["b1"], params["W2"], params["b2"],
                      params["Wbr"], params["bbr"], params["Wh"], params["bh"],
                      params["sig_mask"], params["tanh_mask"])
    x_smoe = out[:B, :head]
    x_comb = out[:B, head:2 * head]
    return x_smoe, x_comb


# ----------------------------------------------------------------------------
# Pure-JAX reference (torch-op-for-op, eval mode) for numerical validation.
# Uses the same bf16-at-the-MXU policy as the kernels so tolerances are tight.
# ----------------------------------------------------------------------------
def reference_forward(x, raw, n_kernels=4):
    bf = jnp.bfloat16
    if x.ndim == 3:
        x = x[:, None]
    act = x.astype(jnp.float32)
    for (w, b, gamma, beta, rmean, rvar) in raw["conv"]:
        y = lax.conv_general_dilated(
            act.astype(bf), w.astype(bf), window_strides=(1, 1),
            padding=((1, 1), (1, 1)),
            dimension_numbers=("NCHW", "OIHW", "NCHW"),
            preferred_element_type=jnp.float32)
        y = y + b[None, :, None, None]
        y = ((y - rmean[None, :, None, None])
             / jnp.sqrt(rvar[None, :, None, None] + 1e-5)
             * gamma[None, :, None, None] + beta[None, :, None, None])
        act = jnp.where(y >= 0, y, 0.2 * y)              # LeakyReLU(0.2)
    feat = act.reshape(act.shape[0], -1)                 # torch Flatten (NCHW)

    def lin(h, wb):
        w, b = wb
        return jnp.dot(h.astype(bf), w.T.astype(bf),
                       preferred_element_type=jnp.float32) + b

    h = jnp.maximum(lin(feat, raw["lin"][0]), 0.0)
    h = jnp.maximum(lin(h, raw["lin"][1]), 0.0)
    hs = jnp.maximum(lin(h, raw["smoe_hidden"]), 0.0)
    hc = jnp.maximum(lin(h, raw["comb_hidden"]), 0.0)
    zs = lin(hs, raw["smoe_head"])
    zc = lin(hc, raw["comb_head"])
    ns = 3 * n_kernels
    x_smoe = jnp.concatenate([jax.nn.sigmoid(zs[:, :ns]), zs[:, ns:]], axis=1)
    x_comb = jnp.tanh(zc)
    return x_smoe, x_comb


if __name__ == "__main__":
    n_kernels, block_size, n_channels, batch = 4, 8, 1, 2
    key = jax.random.PRNGKey(0)
    kx, kp = jax.random.split(key)

    # Input block(s), NCHW like the PyTorch module expects.
    x = jax.random.normal(kx, (batch, n_channels, block_size, block_size), jnp.float32)
    raw = init_raw_params(kp, n_kernels=n_kernels, block_size=block_size,
                          n_channels=n_channels)
    params = pack_params(raw, n_kernels=n_kernels, block_size=block_size)

    fwd = jax.jit(functools.partial(smoe_ae_forward, n_kernels=n_kernels))
    x_smoe, x_comb = fwd(x, params)
    jax.block_until_ready((x_smoe, x_comb))

    head_dim = 3 * n_kernels + n_kernels ** 2
    assert x_smoe.shape == (batch, head_dim) and x_smoe.dtype == jnp.float32
    assert x_comb.shape == (batch, head_dim) and x_comb.dtype == jnp.float32

    # Numerical check against the pure-JAX reference.
    ref_smoe, ref_comb = reference_forward(x, raw, n_kernels=n_kernels)
    err_s = float(jnp.max(jnp.abs(x_smoe - ref_smoe)))
    err_c = float(jnp.max(jnp.abs(x_comb - ref_comb)))
    assert jnp.allclose(x_smoe, ref_smoe, atol=2e-2, rtol=2e-2), err_s
    assert jnp.allclose(x_comb, ref_comb, atol=2e-2, rtol=2e-2), err_c

    # sigmoid'd columns of x_smoe must be in (0, 1); x_comb in [-1, 1]
    assert bool(jnp.all((x_smoe[:, :3 * n_kernels] > 0) & (x_smoe[:, :3 * n_kernels] < 1)))
    assert bool(jnp.all(jnp.abs(x_comb) <= 1.0))
    print("KERNEL_OK")
</pallas_src>

<mosaic_0001>
module attributes {stable_mosaic.version = 11 : i64} {
  func.func @_conv_stack_kernel(%arg0: i32, %arg1: memref<128x32xf32, #tpu.memory_space<vmem>>, %arg2: memref<128x288xf32, #tpu.memory_space<vmem>>, %arg3: memref<3x288x32xbf16, #tpu.memory_space<vmem>>, %arg4: memref<3x1x32xf32, #tpu.memory_space<vmem>>, %arg5: memref<3x1x32xf32, #tpu.memory_space<vmem>>, %arg6: memref<128x32xf32, #tpu.memory_space<vmem>>) attributes {dimension_semantics = [#tpu.dimension_semantics<arbitrary>], iteration_bounds = array<i64: 1>, scalar_prefetch = 0 : i64, scratch_operands = 0 : i64, tpu.core_type = #tpu.core_type<tc>, window_params = [{pipeline_mode = #tpu.pipeline_mode<synchronous>, transform_indices = @transform_0, window_bounds = array<i64: 128, 32>}, {pipeline_mode = #tpu.pipeline_mode<synchronous>, transform_indices = @transform_1, window_bounds = array<i64: 128, 288>}, {pipeline_mode = #tpu.pipeline_mode<synchronous>, transform_indices = @transform_2, window_bounds = array<i64: 3, 288, 32>}, {pipeline_mode = #tpu.pipeline_mode<synchronous>, transform_indices = @transform_3, window_bounds = array<i64: 3, 1, 32>}, {pipeline_mode = #tpu.pipeline_mode<synchronous>, transform_indices = @transform_4, window_bounds = array<i64: 3, 1, 32>}, {pipeline_mode = #tpu.pipeline_mode<synchronous>, transform_indices = @transform_5, window_bounds = array<i64: 128, 32>}]} {
    %c0 = arith.constant 0 : index
    %c0_0 = arith.constant 0 : index
    %0 = vector.load %arg1[%c0, %c0_0] : memref<128x32xf32, #tpu.memory_space<vmem>>, vector<128x32xf32>
    %c0_1 = arith.constant 0 : index
    %c0_2 = arith.constant 0 : index
    %1 = vector.load %arg2[%c0_1, %c0_2] : memref<128x288xf32, #tpu.memory_space<vmem>>, vector<128x288xf32>
    %c9_i32 = arith.constant 9 : i32
    %2 = tpu.dynamic_rotate %0 by %c9_i32 dim 0 : vector<128x32xf32>, i32 -> vector<128x32xf32>
    %c8_i32 = arith.constant 8 : i32
    %3 = tpu.dynamic_rotate %0 by %c8_i32 dim 0 : vector<128x32xf32>, i32 -> vector<128x32xf32>
    %c7_i32 = arith.constant 7 : i32
    %4 = tpu.dynamic_rotate %0 by %c7_i32 dim 0 : vector<128x32xf32>, i32 -> vector<128x32xf32>
    %c1_i32 = arith.constant 1 : i32
    %5 = tpu.dynamic_rotate %0 by %c1_i32 dim 0 : vector<128x32xf32>, i32 -> vector<128x32xf32>
    %c127_i32 = arith.constant 127 : i32
    %6 = tpu.dynamic_rotate %0 by %c127_i32 dim 0 : vector<128x32xf32>, i32 -> vector<128x32xf32>
    %c121_i32 = arith.constant 121 : i32
    %7 = tpu.dynamic_rotate %0 by %c121_i32 dim 0 : vector<128x32xf32>, i32 -> vector<128x32xf32>
    %c120_i32 = arith.constant 120 : i32
    %8 = tpu.dynamic_rotate %0 by %c120_i32 dim 0 : vector<128x32xf32>, i32 -> vector<128x32xf32>
    %c119_i32 = arith.constant 119 : i32
    %9 = tpu.dynamic_rotate %0 by %c119_i32 dim 0 : vector<128x32xf32>, i32 -> vector<128x32xf32>
    %10 = tpu.concatenate %2, %3, %4, %5, %0, %6, %7, %8, %9 in 1 : vector<128x32xf32>, vector<128x32xf32>, vector<128x32xf32>, vector<128x32xf32>, vector<128x32xf32>, vector<128x32xf32>, vector<128x32xf32>, vector<128x32xf32>, vector<128x32xf32> -> vector<128x288xf32>
    %11 = arith.mulf %10, %1 : vector<128x288xf32>
    %12 = arith.truncf %11 : vector<128x288xf32> to vector<128x288xbf16>
    %c0_3 = arith.constant 0 : index
    %c0_4 = arith.constant 0 : index
    %c0_5 = arith.constant 0 : index
    %13 = vector.load %arg3[%c0_3, %c0_4, %c0_5] : memref<3x288x32xbf16, #tpu.memory_space<vmem>>, vector<1x288x32xbf16>
    %14 = vector.shape_cast %13 : vector<1x288x32xbf16> to vector<288x32xbf16>
    %cst = arith.constant dense<0.000000e+00> : vector<128x32xf32>
    %15 = tpu.matmul %12, %14, %cst {dimension_numbers = #tpu.dot_dimension_numbers<[1], [0], [0], [1], [0, 0, 1, 1], [], []>} : vector<128x288xbf16>, vector<288x32xbf16>, vector<128x32xf32> -> vector<128x32xf32>
    %c0_6 = arith.constant 0 : index
    %c0_7 = arith.constant 0 : index
    %c0_8 = arith.constant 0 : index
    %16 = vector.load %arg4[%c0_6, %c0_7, %c0_8] : memref<3x1x32xf32, #tpu.memory_space<vmem>>, vector<1x1x32xf32>
    %17 = vector.shape_cast %16 : vector<1x1x32xf32> to vector<1x32xf32>
    %18 = vector.broadcast %17 : vector<1x32xf32> to vector<128x32xf32>
    %19 = arith.mulf %15, %18 : vector<128x32xf32>
    %c0_9 = arith.constant 0 : index
    %c0_10 = arith.constant 0 : index
    %c0_11 = arith.constant 0 : index
    %20 = vector.load %arg5[%c0_9, %c0_10, %c0_11] : memref<3x1x32xf32, #tpu.memory_space<vmem>>, vector<1x1x32xf32>
    %21 = vector.shape_cast %20 : vector<1x1x32xf32> to vector<1x32xf32>
    %22 = vector.broadcast %21 : vector<1x32xf32> to vector<128x32xf32>
    %23 = arith.addf %19, %22 : vector<128x32xf32>
    %cst_12 = arith.constant 0.000000e+00 : f32
    %24 = vector.broadcast %cst_12 : f32 to vector<128x32xf32>
    %25 = arith.cmpf oge, %23, %24 : vector<128x32xf32>
    %cst_13 = arith.constant 2.000000e-01 : f32
    %26 = vector.broadcast %cst_13 : f32 to vector<128x32xf32>
    %27 = arith.mulf %26, %23 : vector<128x32xf32>
    %28 = arith.select %25, %23, %27 : vector<128x32xi1>, vector<128x32xf32>
    %c9_i32_14 = arith.constant 9 : i32
    %29 = tpu.dynamic_rotate %28 by %c9_i32_14 dim 0 : vector<128x32xf32>, i32 -> vector<128x32xf32>
    %c8_i32_15 = arith.constant 8 : i32
    %30 = tpu.dynamic_rotate %28 by %c8_i32_15 dim 0 : vector<128x32xf32>, i32 -> vector<128x32xf32>
    %c7_i32_16 = arith.constant 7 : i32
    %31 = tpu.dynamic_rotate %28 by %c7_i32_16 dim 0 : vector<128x32xf32>, i32 -> vector<128x32xf32>
    %c1_i32_17 = arith.constant 1 : i32
    %32 = tpu.dynamic_rotate %28 by %c1_i32_17 dim 0 : vector<128x32xf32>, i32 -> vector<128x32xf32>
    %c127_i32_18 = arith.constant 127 : i32
    %33 = tpu.dynamic_rotate %28 by %c127_i32_18 dim 0 : vector<128x32xf32>, i32 -> vector<128x32xf32>
    %c121_i32_19 = arith.constant 121 : i32
    %34 = tpu.dynamic_rotate %28 by %c121_i32_19 dim 0 : vector<128x32xf32>, i32 -> vector<128x32xf32>
    %c120_i32_20 = arith.constant 120 : i32
    %35 = tpu.dynamic_rotate %28 by %c120_i32_20 dim 0 : vector<128x32xf32>, i32 -> vector<128x32xf32>
    %c119_i32_21 = arith.constant 119 : i32
    %36 = tpu.dynamic_rotate %28 by %c119_i32_21 dim 0 : vector<128x32xf32>, i32 -> vector<128x32xf32>
    %37 = tpu.concatenate %29, %30, %31, %32, %28, %33, %34, %35, %36 in 1 : vector<128x32xf32>, vector<128x32xf32>, vector<128x32xf32>, vector<128x32xf32>, vector<128x32xf32>, vector<128x32xf32>, vector<128x32xf32>, vector<128x32xf32>, vector<128x32xf32> -> vector<128x288xf32>
    %38 = arith.mulf %37, %1 : vector<128x288xf32>
    %39 = arith.truncf %38 : vector<128x288xf32> to vector<128x288xbf16>
    %c1 = arith.constant 1 : index
    %c0_22 = arith.constant 0 : index
    %c0_23 = arith.constant 0 : index
    %40 = vector.load %arg3[%c1, %c0_22, %c0_23] : memref<3x288x32xbf16, #tpu.memory_space<vmem>>, vector<1x288x32xbf16>
    %41 = vector.shape_cast %40 : vector<1x288x32xbf16> to vector<288x32xbf16>
    %cst_24 = arith.constant dense<0.000000e+00> : vector<128x32xf32>
    %42 = tpu.matmul %39, %41, %cst_24 {dimension_numbers = #tpu.dot_dimension_numbers<[1], [0], [0], [1], [0, 0, 1, 1], [], []>} : vector<128x288xbf16>, vector<288x32xbf16>, vector<128x32xf32> -> vector<128x32xf32>
    %c1_25 = arith.constant 1 : index
    %c0_26 = arith.constant 0 : index
    %c0_27 = arith.constant 0 : index
    %43 = vector.load %arg4[%c1_25, %c0_26, %c0_27] : memref<3x1x32xf32, #tpu.memory_space<vmem>>, vector<1x1x32xf32>
    %44 = vector.shape_cast %43 : vector<1x1x32xf32> to vector<1x32xf32>
    %45 = vector.broadcast %44 : vector<1x32xf32> to vector<128x32xf32>
    %46 = arith.mulf %42, %45 : vector<128x32xf32>
    %c1_28 = arith.constant 1 : index
    %c0_29 = arith.constant 0 : index
    %c0_30 = arith.constant 0 : index
    %47 = vector.load %arg5[%c1_28, %c0_29, %c0_30] : memref<3x1x32xf32, #tpu.memory_space<vmem>>, vector<1x1x32xf32>
    %48 = vector.shape_cast %47 : vector<1x1x32xf32> to vector<1x32xf32>
    %49 = vector.broadcast %48 : vector<1x32xf32> to vector<128x32xf32>
    %50 = arith.addf %46, %49 : vector<128x32xf32>
    %cst_31 = arith.constant 0.000000e+00 : f32
    %51 = vector.broadcast %cst_31 : f32 to vector<128x32xf32>
    %52 = arith.cmpf oge, %50, %51 : vector<128x32xf32>
    %cst_32 = arith.constant 2.000000e-01 : f32
    %53 = vector.broadcast %cst_32 : f32 to vector<128x32xf32>
    %54 = arith.mulf %53, %50 : vector<128x32xf32>
    %55 = arith.select %52, %50, %54 : vector<128x32xi1>, vector<128x32xf32>
    %c9_i32_33 = arith.constant 9 : i32
    %56 = tpu.dynamic_rotate %55 by %c9_i32_33 dim 0 : vector<128x32xf32>, i32 -> vector<128x32xf32>
    %c8_i32_34 = arith.constant 8 : i32
    %57 = tpu.dynamic_rotate %55 by %c8_i32_34 dim 0 : vector<128x32xf32>, i32 -> vector<128x32xf32>
    %c7_i32_35 = arith.constant 7 : i32
    %58 = tpu.dynamic_rotate %55 by %c7_i32_35 dim 0 : vector<128x32xf32>, i32 -> vector<128x32xf32>
    %c1_i32_36 = arith.constant 1 : i32
    %59 = tpu.dynamic_rotate %55 by %c1_i32_36 dim 0 : vector<128x32xf32>, i32 -> vector<128x32xf32>
    %c127_i32_37 = arith.constant 127 : i32
    %60 = tpu.dynamic_rotate %55 by %c127_i32_37 dim 0 : vector<128x32xf32>, i32 -> vector<128x32xf32>
    %c121_i32_38 = arith.constant 121 : i32
    %61 = tpu.dynamic_rotate %55 by %c121_i32_38 dim 0 : vector<128x32xf32>, i32 -> vector<128x32xf32>
    %c120_i32_39 = arith.constant 120 : i32
    %62 = tpu.dynamic_rotate %55 by %c120_i32_39 dim 0 : vector<128x32xf32>, i32 -> vector<128x32xf32>
    %c119_i32_40 = arith.constant 119 : i32
    %63 = tpu.dynamic_rotate %55 by %c119_i32_40 dim 0 : vector<128x32xf32>, i32 -> vector<128x32xf32>
    %64 = tpu.concatenate %56, %57, %58, %59, %55, %60, %61, %62, %63 in 1 : vector<128x32xf32>, vector<128x32xf32>, vector<128x32xf32>, vector<128x32xf32>, vector<128x32xf32>, vector<128x32xf32>, vector<128x32xf32>, vector<128x32xf32>, vector<128x32xf32> -> vector<128x288xf32>
    %65 = arith.mulf %64, %1 : vector<128x288xf32>
    %66 = arith.truncf %65 : vector<128x288xf32> to vector<128x288xbf16>
    %c2 = arith.constant 2 : index
    %c0_41 = arith.constant 0 : index
    %c0_42 = arith.constant 0 : index
    %67 = vector.load %arg3[%c2, %c0_41, %c0_42] : memref<3x288x32xbf16, #tpu.memory_space<vmem>>, vector<1x288x32xbf16>
    %68 = vector.shape_cast %67 : vector<1x288x32xbf16> to vector<288x32xbf16>
    %cst_43 = arith.constant dense<0.000000e+00> : vector<128x32xf32>
    %69 = tpu.matmul %66, %68, %cst_43 {dimension_numbers = #tpu.dot_dimension_numbers<[1], [0], [0], [1], [0, 0, 1, 1], [], []>} : vector<128x288xbf16>, vector<288x32xbf16>, vector<128x32xf32> -> vector<128x32xf32>
    %c2_44 = arith.constant 2 : index
    %c0_45 = arith.constant 0 : index
    %c0_46 = arith.constant 0 : index
    %70 = vector.load %arg4[%c2_44, %c0_45, %c0_46] : memref<3x1x32xf32, #tpu.memory_space<vmem>>, vector<1x1x32xf32>
    %71 = vector.shape_cast %70 : vector<1x1x32xf32> to vector<1x32xf32>
    %72 = vector.broadcast %71 : vector<1x32xf32> to vector<128x32xf32>
    %73 = arith.mulf %69, %72 : vector<128x32xf32>
    %c2_47 = arith.constant 2 : index
    %c0_48 = arith.constant 0 : index
    %c0_49 = arith.constant 0 : index
    %74 = vector.load %arg5[%c2_47, %c0_48, %c0_49] : memref<3x1x32xf32, #tpu.memory_space<vmem>>, vector<1x1x32xf32>
    %75 = vector.shape_cast %74 : vector<1x1x32xf32> to vector<1x32xf32>
    %76 = vector.broadcast %75 : vector<1x32xf32> to vector<128x32xf32>
    %77 = arith.addf %73, %76 : vector<128x32xf32>
    %cst_50 = arith.constant 0.000000e+00 : f32
    %78 = vector.broadcast %cst_50 : f32 to vector<128x32xf32>
    %79 = arith.cmpf oge, %77, %78 : vector<128x32xf32>
    %cst_51 = arith.constant 2.000000e-01 : f32
    %80 = vector.broadcast %cst_51 : f32 to vector<128x32xf32>
    %81 = arith.mulf %80, %77 : vector<128x32xf32>
    %82 = arith.select %79, %77, %81 : vector<128x32xi1>, vector<128x32xf32>
    %c0_52 = arith.constant 0 : index
    %c0_53 = arith.constant 0 : index
    %83 = vector.load %arg6[%c0_52, %c0_53] : memref<128x32xf32, #tpu.memory_space<vmem>>, vector<128x32xf32>
    tpu.vector_store %arg6[%c0_52, %c0_53], %82 {strides = array<i32>} : memref<128x32xf32, #tpu.memory_space<vmem>>, vector<128x32xf32>,
    return
  }
  func.func @transform_0(%arg0: i32) -> (i32, i32) {
    %c0_i32 = arith.constant 0 : i32
    %c0_i32_0 = arith.constant 0 : i32
    %c0_i32_1 = arith.constant 0 : i32
    return %c0_i32, %c0_i32_0 : i32, i32
  }
  func.func @transform_1(%arg0: i32) -> (i32, i32) {
    %c0_i32 = arith.constant 0 : i32
    %c0_i32_0 = arith.constant 0 : i32
    %c0_i32_1 = arith.constant 0 : i32
    return %c0_i32, %c0_i32_0 : i32, i32
  }
  func.func @transform_2(%arg0: i32) -> (i32, i32, i32) {
    %c0_i32 = arith.constant 0 : i32
    %c0_i32_0 = arith.constant 0 : i32
    %c0_i32_1 = arith.constant 0 : i32
    %c0_i32_2 = arith.constant 0 : i32
    return %c0_i32, %c0_i32_0, %c0_i32_1 : i32, i32, i32
  }
  func.func @transform_3(%arg0: i32) -> (i32, i32, i32) {
    %c0_i32 = arith.constant 0 : i32
    %c0_i32_0 = arith.constant 0 : i32
    %c0_i32_1 = arith.constant 0 : i32
    %c0_i32_2 = arith.constant 0 : i32
    return %c0_i32, %c0_i32_0, %c0_i32_1 : i32, i32, i32
  }
  func.func @transform_4(%arg0: i32) -> (i32, i32, i32) {
    %c0_i32 = arith.constant 0 : i32
    %c0_i32_0 = arith.constant 0 : i32
    %c0_i32_1 = arith.constant 0 : i32
    %c0_i32_2 = arith.constant 0 : i32
    return %c0_i32, %c0_i32_0, %c0_i32_1 : i32, i32, i32
  }
  func.func @transform_5(%arg0: i32) -> (i32, i32) {
    %c0_i32 = arith.constant 0 : i32
    %c0_i32_0 = arith.constant 0 : i32
    %c0_i32_1 = arith.constant 0 : i32
    return %c0_i32, %c0_i32_0 : i32, i32
  }
}

module attributes {stable_mosaic.version = 11 : i64} {
  func.func @_dense_stack_kernel(%arg0: i32, %arg1: memref<8x2048xf32, #tpu.memory_space<vmem>>, %arg2: memref<2048x128xbf16, #tpu.memory_space<vmem>>, %arg3: memref<1x128xf32, #tpu.memory_space<vmem>>, %arg4: memref<128x128xbf16, #tpu.memory_space<vmem>>, %arg5: memref<1x128xf32, #tpu.memory_space<vmem>>, %arg6: memref<128x128xbf16, #tpu.memory_space<vmem>>, %arg7: memref<1x128xf32, #tpu.memory_space<vmem>>, %arg8: memref<128x128xbf16, #tpu.memory_space<vmem>>, %arg9: memref<1x128xf32, #tpu.memory_space<vmem>>, %arg10: memref<1x128xf32, #tpu.memory_space<vmem>>, %arg11: memref<1x128xf32, #tpu.memory_space<vmem>>, %arg12: memref<8x128xf32, #tpu.memory_space<vmem>>) attributes {dimension_semantics = [#tpu.dimension_semantics<arbitrary>], iteration_bounds = array<i64: 1>, scalar_prefetch = 0 : i64, scratch_operands = 0 : i64, tpu.core_type = #tpu.core_type<tc>, window_params = [{pipeline_mode = #tpu.pipeline_mode<synchronous>, transform_indices = @transform_0, window_bounds = array<i64: 8, 2048>}, {pipeline_mode = #tpu.pipeline_mode<synchronous>, transform_indices = @transform_1, window_bounds = array<i64: 2048, 128>}, {pipeline_mode = #tpu.pipeline_mode<synchronous>, transform_indices = @transform_2, window_bounds = array<i64: 1, 128>}, {pipeline_mode = #tpu.pipeline_mode<synchronous>, transform_indices = @transform_3, window_bounds = array<i64: 128, 128>}, {pipeline_mode = #tpu.pipeline_mode<synchronous>, transform_indices = @transform_4, window_bounds = array<i64: 1, 128>}, {pipeline_mode = #tpu.pipeline_mode<synchronous>, transform_indices = @transform_5, window_bounds = array<i64: 128, 128>}, {pipeline_mode = #tpu.pipeline_mode<synchronous>, transform_indices = @transform_6, window_bounds = array<i64: 1, 128>}, {pipeline_mode = #tpu.pipeline_mode<synchronous>, transform_indices = @transform_7, window_bounds = array<i64: 128, 128>}, {pipeline_mode = #tpu.pipeline_mode<synchronous>, transform_indices = @transform_8, window_bounds = array<i64: 1, 128>}, {pipeline_mode = #tpu.pipeline_mode<synchronous>, transform_indices = @transform_9, window_bounds = array<i64: 1, 128>}, {pipeline_mode = #tpu.pipeline_mode<synchronous>, transform_indices = @transform_10, window_bounds = array<i64: 1, 128>}, {pipeline_mode = #tpu.pipeline_mode<synchronous>, transform_indices = @transform_11, window_bounds = array<i64: 8, 128>}]} {
    %c0 = arith.constant 0 : index
    %c0_0 = arith.constant 0 : index
    %0 = vector.load %arg1[%c0, %c0_0] : memref<8x2048xf32, #tpu.memory_space<vmem>>, vector<8x2048xf32>
    %1 = arith.truncf %0 : vector<8x2048xf32> to vector<8x2048xbf16>
    %c0_1 = arith.constant 0 : index
    %c0_2 = arith.constant 0 : index
    %2 = vector.load %arg2[%c0_1, %c0_2] : memref<2048x128xbf16, #tpu.memory_space<vmem>>, vector<2048x128xbf16>
    %cst = arith.constant dense<0.000000e+00> : vector<8x128xf32>
    %3 = tpu.matmul %1, %2, %cst {dimension_numbers = #tpu.dot_dimension_numbers<[1], [0], [0], [1], [0, 0, 1, 1], [], []>} : vector<8x2048xbf16>, vector<2048x128xbf16>, vector<8x128xf32> -> vector<8x128xf32>
    %c0_3 = arith.constant 0 : index
    %c0_4 = arith.constant 0 : index
    %4 = vector.load %arg3[%c0_3, %c0_4] : memref<1x128xf32, #tpu.memory_space<vmem>>, vector<1x128xf32>
    %5 = vector.broadcast %4 : vector<1x128xf32> to vector<8x128xf32>
    %6 = arith.addf %3, %5 : vector<8x128xf32>
    %cst_5 = arith.constant 0.000000e+00 : f32
    %7 = vector.broadcast %cst_5 : f32 to vector<8x128xf32>
    %8 = arith.maximumf %6, %7 : vector<8x128xf32>
    %9 = arith.truncf %8 : vector<8x128xf32> to vector<8x128xbf16>
    %c0_6 = arith.constant 0 : index
    %c0_7 = arith.constant 0 : index
    %10 = vector.load %arg4[%c0_6, %c0_7] : memref<128x128xbf16, #tpu.memory_space<vmem>>, vector<128x128xbf16>
    %cst_8 = arith.constant dense<0.000000e+00> : vector<8x128xf32>
    %11 = tpu.matmul %9, %10, %cst_8 {dimension_numbers = #tpu.dot_dimension_numbers<[1], [0], [0], [1], [0, 0, 1, 1], [], []>} : vector<8x128xbf16>, vector<128x128xbf16>, vector<8x128xf32> -> vector<8x128xf32>
    %c0_9 = arith.constant 0 : index
    %c0_10 = arith.constant 0 : index
    %12 = vector.load %arg5[%c0_9, %c0_10] : memref<1x128xf32, #tpu.memory_space<vmem>>, vector<1x128xf32>
    %13 = vector.broadcast %12 : vector<1x128xf32> to vector<8x128xf32>
    %14 = arith.addf %11, %13 : vector<8x128xf32>
    %cst_11 = arith.constant 0.000000e+00 : f32
    %15 = vector.broadcast %cst_11 : f32 to vector<8x128xf32>
    %16 = arith.maximumf %14, %15 : vector<8x128xf32>
    %17 = arith.truncf %16 : vector<8x128xf32> to vector<8x128xbf16>
    %c0_12 = arith.constant 0 : index
    %c0_13 = arith.constant 0 : index
    %18 = vector.load %arg6[%c0_12, %c0_13] : memref<128x128xbf16, #tpu.memory_space<vmem>>, vector<128x128xbf16>
    %cst_14 = arith.constant dense<0.000000e+00> : vector<8x128xf32>
    %19 = tpu.matmul %17, %18, %cst_14 {dimension_numbers = #tpu.dot_dimension_numbers<[1], [0], [0], [1], [0, 0, 1, 1], [], []>} : vector<8x128xbf16>, vector<128x128xbf16>, vector<8x128xf32> -> vector<8x128xf32>
    %c0_15 = arith.constant 0 : index
    %c0_16 = arith.constant 0 : index
    %20 = vector.load %arg7[%c0_15, %c0_16] : memref<1x128xf32, #tpu.memory_space<vmem>>, vector<1x128xf32>
    %21 = vector.broadcast %20 : vector<1x128xf32> to vector<8x128xf32>
    %22 = arith.addf %19, %21 : vector<8x128xf32>
    %cst_17 = arith.constant 0.000000e+00 : f32
    %23 = vector.broadcast %cst_17 : f32 to vector<8x128xf32>
    %24 = arith.maximumf %22, %23 : vector<8x128xf32>
    %25 = arith.truncf %24 : vector<8x128xf32> to vector<8x128xbf16>
    %c0_18 = arith.constant 0 : index
    %c0_19 = arith.constant 0 : index
    %26 = vector.load %arg8[%c0_18, %c0_19] : memref<128x128xbf16, #tpu.memory_space<vmem>>, vector<128x128xbf16>
    %cst_20 = arith.constant dense<0.000000e+00> : vector<8x128xf32>
    %27 = tpu.matmul %25, %26, %cst_20 {dimension_numbers = #tpu.dot_dimension_numbers<[1], [0], [0], [1], [0, 0, 1, 1], [], []>} : vector<8x128xbf16>, vector<128x128xbf16>, vector<8x128xf32> -> vector<8x128xf32>
    %c0_21 = arith.constant 0 : index
    %c0_22 = arith.constant 0 : index
    %28 = vector.load %arg9[%c0_21, %c0_22] : memref<1x128xf32, #tpu.memory_space<vmem>>, vector<1x128xf32>
    %29 = vector.broadcast %28 : vector<1x128xf32> to vector<8x128xf32>
    %30 = arith.addf %27, %29 : vector<8x128xf32>
    %c0_23 = arith.constant 0 : index
    %c0_24 = arith.constant 0 : index
    %31 = vector.load %arg10[%c0_23, %c0_24] : memref<1x128xf32, #tpu.memory_space<vmem>>, vector<1x128xf32>
    %c0_25 = arith.constant 0 : index
    %c0_26 = arith.constant 0 : index
    %32 = vector.load %arg11[%c0_25, %c0_26] : memref<1x128xf32, #tpu.memory_space<vmem>>, vector<1x128xf32>
    %33 = arith.negf %30 : vector<8x128xf32>
    %34 = math.exp %33 : vector<8x128xf32>
    %cst_27 = arith.constant 1.000000e+00 : f32
    %35 = vector.broadcast %cst_27 : f32 to vector<8x128xf32>
    %36 = arith.addf %35, %34 : vector<8x128xf32>
    %37 = arith.divf %35, %36 : vector<8x128xf32>
    %38 = vector.broadcast %31 : vector<1x128xf32> to vector<8x128xf32>
    %39 = arith.mulf %38, %37 : vector<8x128xf32>
    %40 = math.tanh %30 : vector<8x128xf32>
    %41 = vector.broadcast %32 : vector<1x128xf32> to vector<8x128xf32>
    %42 = arith.mulf %41, %40 : vector<8x128xf32>
    %43 = arith.addf %39, %42 : vector<8x128xf32>
    %cst_28 = arith.constant 1.000000e+00 : f32
    %44 = vector.broadcast %cst_28 : f32 to vector<1x128xf32>
    %45 = arith.subf %44, %31 : vector<1x128xf32>
    %46 = arith.subf %45, %32 : vector<1x128xf32>
    %47 = vector.broadcast %46 : vector<1x128xf32> to vector<8x128xf32>
    %48 = arith.mulf %47, %30 : vector<8x128xf32>
    %49 = arith.addf %43, %48 : vector<8x128xf32>
    %c0_29 = arith.constant 0 : index
    %c0_30 = arith.constant 0 : index
    %50 = vector.load %arg12[%c0_29, %c0_30] : memref<8x128xf32, #tpu.memory_space<vmem>>, vector<8x128xf32>
    tpu.vector_store %arg12[%c0_29, %c0_30], %49 {strides = array<i32>} : memref<8x128xf32, #tpu.memory_space<vmem>>, vector<8x128xf32>,
    return
  }
  func.func @transform_0(%arg0: i32) -> (i32, i32) {
    %c0_i32 = arith.constant 0 : i32
    %c0_i32_0 = arith.constant 0 : i32
    %c0_i32_1 = arith.constant 0 : i32
    return %c0_i32, %c0_i32_0 : i32, i32
  }
  func.func @transform_1(%arg0: i32) -> (i32, i32) {
    %c0_i32 = arith.constant 0 : i32
    %c0_i32_0 = arith.constant 0 : i32
    %c0_i32_1 = arith.constant 0 : i32
    return %c0_i32, %c0_i32_0 : i32, i32
  }
  func.func @transform_2(%arg0: i32) -> (i32, i32) {
    %c0_i32 = arith.constant 0 : i32
    %c0_i32_0 = arith.constant 0 : i32
    %c0_i32_1 = arith.constant 0 : i32
    return %c0_i32, %c0_i32_0 : i32, i32
  }
  func.func @transform_3(%arg0: i32) -> (i32, i32) {
    %c0_i32 = arith.constant 0 : i32
    %c0_i32_0 = arith.constant 0 : i32
    %c0_i32_1 = arith.constant 0 : i32
    return %c0_i32, %c0_i32_0 : i32, i32
  }
  func.func @transform_4(%arg0: i32) -> (i32, i32) {
    %c0_i32 = arith.constant 0 : i32
    %c0_i32_0 = arith.constant 0 : i32
    %c0_i32_1 = arith.constant 0 : i32
    return %c0_i32, %c0_i32_0 : i32, i32
  }
  func.func @transform_5(%arg0: i32) -> (i32, i32) {
    %c0_i32 = arith.constant 0 : i32
    %c0_i32_0 = arith.constant 0 : i32
    %c0_i32_1 = arith.constant 0 : i32
    return %c0_i32, %c0_i32_0 : i32, i32
  }
  func.func @transform_6(%arg0: i32) -> (i32, i32) {
    %c0_i32 = arith.constant 0 : i32
    %c0_i32_0 = arith.constant 0 : i32
    %c0_i32_1 = arith.constant 0 : i32
    return %c0_i32, %c0_i32_0 : i32, i32
  }
  func.func @transform_7(%arg0: i32) -> (i32, i32) {
    %c0_i32 = arith.constant 0 : i32
    %c0_i32_0 = arith.constant 0 : i32
    %c0_i32_1 = arith.constant 0 : i32
    return %c0_i32, %c0_i32_0 : i32, i32
  }
  func.func @transform_8(%arg0: i32) -> (i32, i32) {
    %c0_i32 = arith.constant 0 : i32
    %c0_i32_0 = arith.constant 0 : i32
    %c0_i32_1 = arith.constant 0 : i32
    return %c0_i32, %c0_i32_0 : i32, i32
  }
  func.func @transform_9(%arg0: i32) -> (i32, i32) {
    %c0_i32 = arith.constant 0 : i32
    %c0_i32_0 = arith.constant 0 : i32
    %c0_i32_1 = arith.constant 0 : i32
    return %c0_i32, %c0_i32_0 : i32, i32
  }
  func.func @transform_10(%arg0: i32) -> (i32, i32) {
    %c0_i32 = arith.constant 0 : i32
    %c0_i32_0 = arith.constant 0 : i32
    %c0_i32_1 = arith.constant 0 : i32
    return %c0_i32, %c0_i32_0 : i32, i32
  }
  func.func @transform_11(%arg0: i32) -> (i32, i32) {
    %c0_i32 = arith.constant 0 : i32
    %c0_i32_0 = arith.constant 0 : i32
    %c0_i32_1 = arith.constant 0 : i32
    return %c0_i32, %c0_i32_0 : i32, i32
  }
}

</mosaic_0001>

<llo_original>
// kernel: smoe_ae_forward.3
$region0: #{smoe_ae_forward.3}
  #allocation0 [shape = 'u32[]', space=smem, size = 0x4, offset = 0x4, fixed_abs, tag = 'smem constant byte address 0x4 - core index']
  #allocation1 [shape = 'u32[144,128]{1,0:T(1,128)}', space=vmem, size = 0x12000, scoped, tag = 'internal scratch']
  %s0 = inlined_call_operand.vmem [shape: f32[8,2048], index: 0, kind: input, shape index: {}]
  %s1 = inlined_call_operand.vmem [shape: bf16[2048,128], index: 1, kind: input, shape index: {}]
  %s2 = inlined_call_operand.vmem [shape: f32[1,128], index: 2, kind: input, shape index: {}]
  %s3 = inlined_call_operand.vmem [shape: bf16[128,128], index: 3, kind: input, shape index: {}]
  %s4 = inlined_call_operand.vmem [shape: f32[1,128], index: 4, kind: input, shape index: {}]
  %s5 = inlined_call_operand.vmem [shape: bf16[128,128], index: 5, kind: input, shape index: {}]
  %s6 = inlined_call_operand.vmem [shape: f32[1,128], index: 6, kind: input, shape index: {}]
  %s7 = inlined_call_operand.vmem [shape: bf16[128,128], index: 7, kind: input, shape index: {}]
  %s8 = inlined_call_operand.vmem [shape: f32[1,128], index: 8, kind: input, shape index: {}]
  %s9 = inlined_call_operand.vmem [shape: f32[1,128], index: 9, kind: input, shape index: {}]
  %s10 = inlined_call_operand.vmem [shape: f32[1,128], index: 10, kind: input, shape index: {}]
  %s11 = inlined_call_operand.vmem [shape: f32[8,128], index: 11, kind: output, shape index: {}]
  %s12 = sld [smem:[#allocation0]]
  $region54: #{smoe_ae_forward.3} parent=0
    _
  %s14 = ssub.s32 1, %s12
  %s15 = scalar_select 0, %s14, %s12
  // Predicated region
  $region2: #{smoe_ae_forward.3} parent=0 // pred_check
    _
  $region3: #{smoe_ae_forward.3} parent=0 // pred_check_branch
    %17 = sbr.rel (0) target = $region5
  $region4: #{smoe_ae_forward.3} parent=0 // pred_region
    _
  $region5: #{smoe_ae_forward.3} parent=0 // pred_fallthru
    _
  // Predicated region
  $region6: #{smoe_ae_forward.3} parent=0 // pred_check
    _
  $region7: #{smoe_ae_forward.3} parent=0 // pred_check_branch
    %19 = sbr.rel (0) target = $region9
  $region8: #{smoe_ae_forward.3} parent=0 // pred_region
    _
  $region9: #{smoe_ae_forward.3} parent=0 // pred_fallthru
    _
  // Predicated region
  $region10: #{smoe_ae_forward.3} parent=0 // pred_check
    _
  $region11: #{smoe_ae_forward.3} parent=0 // pred_check_branch
    %21 = sbr.rel (0) target = $region13
  $region12: #{smoe_ae_forward.3} parent=0 // pred_region
    _
  $region13: #{smoe_ae_forward.3} parent=0 // pred_fallthru
    _
  // Predicated region
  $region14: #{smoe_ae_forward.3} parent=0 // pred_check
    _
  $region15: #{smoe_ae_forward.3} parent=0 // pred_check_branch
    %23 = sbr.rel (0) target = $region17
  $region16: #{smoe_ae_forward.3} parent=0 // pred_region
    _
  $region17: #{smoe_ae_forward.3} parent=0 // pred_fallthru
    _
  // Predicated region
  $region18: #{smoe_ae_forward.3} parent=0 // pred_check
    _
  $region19: #{smoe_ae_forward.3} parent=0 // pred_check_branch
    %25 = sbr.rel (0) target = $region21
  $region20: #{smoe_ae_forward.3} parent=0 // pred_region
    _
  $region21: #{smoe_ae_forward.3} parent=0 // pred_fallthru
    _
  // Predicated region
  $region22: #{smoe_ae_forward.3} parent=0 // pred_check
    _
  $region23: #{smoe_ae_forward.3} parent=0 // pred_check_branch
    %27 = sbr.rel (0) target = $region25
  $region24: #{smoe_ae_forward.3} parent=0 // pred_region
    _
  $region25: #{smoe_ae_forward.3} parent=0 // pred_fallthru
    _
  // Predicated region
  $region26: #{smoe_ae_forward.3} parent=0 // pred_check
    _
  $region27: #{smoe_ae_forward.3} parent=0 // pred_check_branch
    %29 = sbr.rel (0) target = $region29
  $region28: #{smoe_ae_forward.3} parent=0 // pred_region
    _
  $region29: #{smoe_ae_forward.3} parent=0 // pred_fallthru
    _
  // Predicated region
  $region30: #{smoe_ae_forward.3} parent=0 // pred_check
    _
  $region31: #{smoe_ae_forward.3} parent=0 // pred_check_branch
    %31 = sbr.rel (0) target = $region33
  $region32: #{smoe_ae_forward.3} parent=0 // pred_region
    _
  $region33: #{smoe_ae_forward.3} parent=0 // pred_fallthru
    _
  // Predicated region
  $region34: #{smoe_ae_forward.3} parent=0 // pred_check
    _
  $region35: #{smoe_ae_forward.3} parent=0 // pred_check_branch
    %33 = sbr.rel (0) target = $region37
  $region36: #{smoe_ae_forward.3} parent=0 // pred_region
    _
  $region37: #{smoe_ae_forward.3} parent=0 // pred_fallthru
    _
  // Predicated region
  $region38: #{smoe_ae_forward.3} parent=0 // pred_check
    _
  $region39: #{smoe_ae_forward.3} parent=0 // pred_check_branch
    %35 = sbr.rel (0) target = $region41
  $region40: #{smoe_ae_forward.3} parent=0 // pred_region
    _
  $region41: #{smoe_ae_forward.3} parent=0 // pred_fallthru
    _
  // Predicated region
  $region42: #{smoe_ae_forward.3} parent=0 // pred_check
    _
  $region43: #{smoe_ae_forward.3} parent=0 // pred_check_branch
    %37 = sbr.rel (0) target = $region45
  $region44: #{smoe_ae_forward.3} parent=0 // pred_region
    _
  $region45: #{smoe_ae_forward.3} parent=0 // pred_fallthru
    _
  %v39 = vld [vmem:[%s0] sm:$0xff]
  %v40 = vld [vmem:[%s0 + $0x8] sm:$0xff]
  %v41 = vld [vmem:[%s0 + $0x10] sm:$0xff]
  %v42 = vld [vmem:[%s0 + $0x18] sm:$0xff]
  %v43 = vld [vmem:[%s0 + $0x20] sm:$0xff]
  %v44 = vld [vmem:[%s0 + $0x28] sm:$0xff]
  %v45 = vld [vmem:[%s0 + $0x30] sm:$0xff]
  %v46 = vld [vmem:[%s0 + $0x38] sm:$0xff]
  %v47 = vld [vmem:[%s0 + $0x40] sm:$0xff]
  %v48 = vld [vmem:[%s0 + $0x48] sm:$0xff]
  %v49 = vld [vmem:[%s0 + $0x50] sm:$0xff]
  %v50 = vld [vmem:[%s0 + $0x58] sm:$0xff]
  %v51 = vld [vmem:[%s0 + $0x60] sm:$0xff]
  %v52 = vld [vmem:[%s0 + $0x68] sm:$0xff]
  %v53 = vld [vmem:[%s0 + $0x70] sm:$0xff]
  %v54 = vld [vmem:[%s0 + $0x78] sm:$0xff]
  %v55 = vpack.c.bf16 %v39, %v39
  %v56 = vpack.c.bf16 %v40, %v40
  %v57 = vpack.c.bf16 %v41, %v41
  %v58 = vpack.c.bf16 %v42, %v42
  %v59 = vpack.c.bf16 %v43, %v43
  %v60 = vpack.c.bf16 %v44, %v44
  %v61 = vpack.c.bf16 %v45, %v45
  %v62 = vpack.c.bf16 %v46, %v46
  %v63 = vpack.c.bf16 %v47, %v47
  %v64 = vpack.c.bf16 %v48, %v48
  %v65 = vpack.c.bf16 %v49, %v49
  %v66 = vpack.c.bf16 %v50, %v50
  %v67 = vpack.c.bf16 %v51, %v51
  %v68 = vpack.c.bf16 %v52, %v52
  %v69 = vpack.c.bf16 %v53, %v53
  %v70 = vpack.c.bf16 %v54, %v54
  %v71 = vld [vmem:[%s1] sm:$0xf]
  %v72 = vld [vmem:[%s1 + $0x4] sm:$0xf]
  %v73 = vld [vmem:[%s1 + $0x8] sm:$0xf]
  %v74 = vld [vmem:[%s1 + $0xc] sm:$0xf]
  %v75 = vld [vmem:[%s1 + $0x10] sm:$0xf]
  %v76 = vld [vmem:[%s1 + $0x14] sm:$0xf]
  %v77 = vld [vmem:[%s1 + $0x18] sm:$0xf]
  %v78 = vld [vmem:[%s1 + $0x1c] sm:$0xf]
  %v79 = vld [vmem:[%s1 + $0x20] sm:$0xf]
  %v80 = vld [vmem:[%s1 + $0x24] sm:$0xf]
  %v81 = vld [vmem:[%s1 + $0x28] sm:$0xf]
  %v82 = vld [vmem:[%s1 + $0x2c] sm:$0xf]
  %v83 = vld [vmem:[%s1 + $0x30] sm:$0xf]
  %v84 = vld [vmem:[%s1 + $0x34] sm:$0xf]
  %v85 = vld [vmem:[%s1 + $0x38] sm:$0xf]
  %v86 = vld [vmem:[%s1 + $0x3c] sm:$0xf]
  %v87 = vld [vmem:[%s1 + $0x40] sm:$0xf]
  %v88 = vld [vmem:[%s1 + $0x44] sm:$0xf]
  %v89 = vld [vmem:[%s1 + $0x48] sm:$0xf]
  %v90 = vld [vmem:[%s1 + $0x4c] sm:$0xf]
  %v91 = vld [vmem:[%s1 + $0x50] sm:$0xf]
  %v92 = vld [vmem:[%s1 + $0x54] sm:$0xf]
  %v93 = vld [vmem:[%s1 + $0x58] sm:$0xf]
  %v94 = vld [vmem:[%s1 + $0x5c] sm:$0xf]
  %v95 = vld [vmem:[%s1 + $0x60] sm:$0xf]
  %v96 = vld [vmem:[%s1 + $0x64] sm:$0xf]
  %v97 = vld [vmem:[%s1 + $0x68] sm:$0xf]
  %v98 = vld [vmem:[%s1 + $0x6c] sm:$0xf]
  %v99 = vld [vmem:[%s1 + $0x70] sm:$0xf]
  %v100 = vld [vmem:[%s1 + $0x74] sm:$0xf]
  %v101 = vld [vmem:[%s1 + $0x78] sm:$0xf]
  %v102 = vld [vmem:[%s1 + $0x7c] sm:$0xf]
  %v103 = vld [vmem:[%s1 + $0x80] sm:$0xf]
  %v104 = vld [vmem:[%s1 + $0x84] sm:$0xf]
  %v105 = vld [vmem:[%s1 + $0x88] sm:$0xf]
  %v106 = vld [vmem:[%s1 + $0x8c] sm:$0xf]
  %v107 = vld [vmem:[%s1 + $0x90] sm:$0xf]
  %v108 = vld [vmem:[%s1 + $0x94] sm:$0xf]
  %v109 = vld [vmem:[%s1 + $0x98] sm:$0xf]
  %v110 = vld [vmem:[%s1 + $0x9c] sm:$0xf]
  %v111 = vld [vmem:[%s1 + $0xa0] sm:$0xf]
  %v112 = vld [vmem:[%s1 + $0xa4] sm:$0xf]
  %v113 = vld [vmem:[%s1 + $0xa8] sm:$0xf]
  %v114 = vld [vmem:[%s1 + $0xac] sm:$0xf]
  %v115 = vld [vmem:[%s1 + $0xb0] sm:$0xf]
  %v116 = vld [vmem:[%s1 + $0xb4] sm:$0xf]
  %v117 = vld [vmem:[%s1 + $0xb8] sm:$0xf]
  %v118 = vld [vmem:[%s1 + $0xbc] sm:$0xf]
  %v119 = vld [vmem:[%s1 + $0xc0] sm:$0xf]
  %v120 = vld [vmem:[%s1 + $0xc4] sm:$0xf]
  %v121 = vld [vmem:[%s1 + $0xc8] sm:$0xf]
  %v122 = vld [vmem:[%s1 + $0xcc] sm:$0xf]
  %v123 = vld [vmem:[%s1 + $0xd0] sm:$0xf]
  %v124 = vld [vmem:[%s1 + $0xd4] sm:$0xf]
  %v125 = vld [vmem:[%s1 + $0xd8] sm:$0xf]
  %v126 = vld [vmem:[%s1 + $0xdc] sm:$0xf]
  %v127 = vld [vmem:[%s1 + $0xe0] sm:$0xf]
  %v128 = vld [vmem:[%s1 + $0xe4] sm:$0xf]
  %v129 = vld [vmem:[%s1 + $0xe8] sm:$0xf]
  %v130 = vld [vmem:[%s1 + $0xec] sm:$0xf]
  %v131 = vld [vmem:[%s1 + $0xf0] sm:$0xf]
  %v132 = vld [vmem:[%s1 + $0xf4] sm:$0xf]
  %v133 = vld [vmem:[%s1 + $0xf8] sm:$0xf]
  %v134 = vld [vmem:[%s1 + $0xfc] sm:$0xf]
  %v135 = vld [vmem:[%s1 + $0x100] sm:$0xf]
  %v136 = vld [vmem:[%s1 + $0x104] sm:$0xf]
  %v137 = vld [vmem:[%s1 + $0x108] sm:$0xf]
  %v138 = vld [vmem:[%s1 + $0x10c] sm:$0xf]
  %v139 = vld [vmem:[%s1 + $0x110] sm:$0xf]
  %v140 = vld [vmem:[%s1 + $0x114] sm:$0xf]
  %v141 = vld [vmem:[%s1 + $0x118] sm:$0xf]
  %v142 = vld [vmem:[%s1 + $0x11c] sm:$0xf]
  %v143 = vld [vmem:[%s1 + $0x120] sm:$0xf]
  %v144 = vld [vmem:[%s1 + $0x124] sm:$0xf]
  %v145 = vld [vmem:[%s1 + $0x128] sm:$0xf]
  %v146 = vld [vmem:[%s1 + $0x12c] sm:$0xf]
  %v147 = vld [vmem:[%s1 + $0x130] sm:$0xf]
  %v148 = vld [vmem:[%s1 + $0x134] sm:$0xf]
  %v149 = vld [vmem:[%s1 + $0x138] sm:$0xf]
  %v150 = vld [vmem:[%s1 + $0x13c] sm:$0xf]
  %v151 = vld [vmem:[%s1 + $0x140] sm:$0xf]
  %v152 = vld [vmem:[%s1 + $0x144] sm:$0xf]
  %v153 = vld [vmem:[%s1 + $0x148] sm:$0xf]
  %v154 = vld [vmem:[%s1 + $0x14c] sm:$0xf]
  %v155 = vld [vmem:[%s1 + $0x150] sm:$0xf]
  %v156 = vld [vmem:[%s1 + $0x154] sm:$0xf]
  %v157 = vld [vmem:[%s1 + $0x158] sm:$0xf]
  %v158 = vld [vmem:[%s1 + $0x15c] sm:$0xf]
  %v159 = vld [vmem:[%s1 + $0x160] sm:$0xf]
  %v160 = vld [vmem:[%s1 + $0x164] sm:$0xf]
  %v161 = vld [vmem:[%s1 + $0x168] sm:$0xf]
  %v162 = vld [vmem:[%s1 + $0x16c] sm:$0xf]
  %v163 = vld [vmem:[%s1 + $0x170] sm:$0xf]
  %v164 = vld [vmem:[%s1 + $0x174] sm:$0xf]
  %v165 = vld [vmem:[%s1 + $0x178] sm:$0xf]
  %v166 = vld [vmem:[%s1 + $0x17c] sm:$0xf]
  %v167 = vld [vmem:[%s1 + $0x180] sm:$0xf]
  %v168 = vld [vmem:[%s1 + $0x184] sm:$0xf]
  %v169 = vld [vmem:[%s1 + $0x188] sm:$0xf]
  %v170 = vld [vmem:[%s1 + $0x18c] sm:$0xf]
  %v171 = vld [vmem:[%s1 + $0x190] sm:$0xf]
  %v172 = vld [vmem:[%s1 + $0x194] sm:$0xf]
  %v173 = vld [vmem:[%s1 + $0x198] sm:$0xf]
  %v174 = vld [vmem:[%s1 + $0x19c] sm:$0xf]
  %v175 = vld [vmem:[%s1 + $0x1a0] sm:$0xf]
  %v176 = vld [vmem:[%s1 + $0x1a4] sm:$0xf]
  %v177 = vld [vmem:[%s1 + $0x1a8] sm:$0xf]
  %v178 = vld [vmem:[%s1 + $0x1ac] sm:$0xf]
  %v179 = vld [vmem:[%s1 + $0x1b0] sm:$0xf]
  %v180 = vld [vmem:[%s1 + $0x1b4] sm:$0xf]
  %v181 = vld [vmem:[%s1 + $0x1b8] sm:$0xf]
  %v182 = vld [vmem:[%s1 + $0x1bc] sm:$0xf]
  %v183 = vld [vmem:[%s1 + $0x1c0] sm:$0xf]
  %v184 = vld [vmem:[%s1 + $0x1c4] sm:$0xf]
  %v185 = vld [vmem:[%s1 + $0x1c8] sm:$0xf]
  %v186 = vld [vmem:[%s1 + $0x1cc] sm:$0xf]
  %v187 = vld [vmem:[%s1 + $0x1d0] sm:$0xf]
  %v188 = vld [vmem:[%s1 + $0x1d4] sm:$0xf]
  %v189 = vld [vmem:[%s1 + $0x1d8] sm:$0xf]
  %v190 = vld [vmem:[%s1 + $0x1dc] sm:$0xf]
  %v191 = vld [vmem:[%s1 + $0x1e0] sm:$0xf]
  %v192 = vld [vmem:[%s1 + $0x1e4] sm:$0xf]
  %v193 = vld [vmem:[%s1 + $0x1e8] sm:$0xf]
  %v194 = vld [vmem:[%s1 + $0x1ec] sm:$0xf]
  %v195 = vld [vmem:[%s1 + $0x1f0] sm:$0xf]
  %v196 = vld [vmem:[%s1 + $0x1f4] sm:$0xf]
  %v197 = vld [vmem:[%s1 + $0x1f8] sm:$0xf]
  %v198 = vld [vmem:[%s1 + $0x1fc] sm:$0xf]
  %v199 = vld [vmem:[%s1 + $0x200] sm:$0xf]
  %v200 = vld [vmem:[%s1 + $0x204] sm:$0xf]
  %v201 = vld [vmem:[%s1 + $0x208] sm:$0xf]
  %v202 = vld [vmem:[%s1 + $0x20c] sm:$0xf]
  %v203 = vld [vmem:[%s1 + $0x210] sm:$0xf]
  %v204 = vld [vmem:[%s1 + $0x214] sm:$0xf]
  %v205 = vld [vmem:[%s1 + $0x218] sm:$0xf]
  %v206 = vld [vmem:[%s1 + $0x21c] sm:$0xf]
  %v207 = vld [vmem:[%s1 + $0x220] sm:$0xf]
  %v208 = vld [vmem:[%s1 + $0x224] sm:$0xf]
  %v209 = vld [vmem:[%s1 + $0x228] sm:$0xf]
  %v210 = vld [vmem:[%s1 + $0x22c] sm:$0xf]
  %v211 = vld [vmem:[%s1 + $0x230] sm:$0xf]
  %v212 = vld [vmem:[%s1 + $0x234] sm:$0xf]
  %v213 = vld [vmem:[%s1 + $0x238] sm:$0xf]
  %v214 = vld [vmem:[%s1 + $0x23c] sm:$0xf]
  %v215 = vld [vmem:[%s1 + $0x240] sm:$0xf]
  %v216 = vld [vmem:[%s1 + $0x244] sm:$0xf]
  %v217 = vld [vmem:[%s1 + $0x248] sm:$0xf]
  %v218 = vld [vmem:[%s1 + $0x24c] sm:$0xf]
  %v219 = vld [vmem:[%s1 + $0x250] sm:$0xf]
  %v220 = vld [vmem:[%s1 + $0x254] sm:$0xf]
  %v221 = vld [vmem:[%s1 + $0x258] sm:$0xf]
  %v222 = vld [vmem:[%s1 + $0x25c] sm:$0xf]
  %v223 = vld [vmem:[%s1 + $0x260] sm:$0xf]
  %v224 = vld [vmem:[%s1 + $0x264] sm:$0xf]
  %v225 = vld [vmem:[%s1 + $0x268] sm:$0xf]
  %v226 = vld [vmem:[%s1 + $0x26c] sm:$0xf]
  %v227 = vld [vmem:[%s1 + $0x270] sm:$0xf]
  %v228 = vld [vmem:[%s1 + $0x274] sm:$0xf]
  %v229 = vld [vmem:[%s1 + $0x278] sm:$0xf]
  %v230 = vld [vmem:[%s1 + $0x27c] sm:$0xf]
  %v231 = vld [vmem:[%s1 + $0x280] sm:$0xf]
  %v232 = vld [vmem:[%s1 + $0x284] sm:$0xf]
  %v233 = vld [vmem:[%s1 + $0x288] sm:$0xf]
  %v234 = vld [vmem:[%s1 + $0x28c] sm:$0xf]
  %v235 = vld [vmem:[%s1 + $0x290] sm:$0xf]
  %v236 = vld [vmem:[%s1 + $0x294] sm:$0xf]
  %v237 = vld [vmem:[%s1 + $0x298] sm:$0xf]
  %v238 = vld [vmem:[%s1 + $0x29c] sm:$0xf]
  %v239 = vld [vmem:[%s1 + $0x2a0] sm:$0xf]
  %v240 = vld [vmem:[%s1 + $0x2a4] sm:$0xf]
  %v241 = vld [vmem:[%s1 + $0x2a8] sm:$0xf]
  %v242 = vld [vmem:[%s1 + $0x2ac] sm:$0xf]
  %v243 = vld [vmem:[%s1 + $0x2b0] sm:$0xf]
  %v244 = vld [vmem:[%s1 + $0x2b4] sm:$0xf]
  %v245 = vld [vmem:[%s1 + $0x2b8] sm:$0xf]
  %v246 = vld [vmem:[%s1 + $0x2bc] sm:$0xf]
  %v247 = vld [vmem:[%s1 + $0x2c0] sm:$0xf]
  %v248 = vld [vmem:[%s1 + $0x2c4] sm:$0xf]
  %v249 = vld [vmem:[%s1 + $0x2c8] sm:$0xf]
  %v250 = vld [vmem:[%s1 + $0x2cc] sm:$0xf]
  %v251 = vld [vmem:[%s1 + $0x2d0] sm:$0xf]
  %v252 = vld [vmem:[%s1 + $0x2d4] sm:$0xf]
  %v253 = vld [vmem:[%s1 + $0x2d8] sm:$0xf]
  %v254 = vld [vmem:[%s1 + $0x2dc] sm:$0xf]
  %v255 = vld [vmem:[%s1 + $0x2e0] sm:$0xf]
  %v256 = vld [vmem:[%s1 + $0x2e4] sm:$0xf]
  %v257 = vld [vmem:[%s1 + $0x2e8] sm:$0xf]
  %v258 = vld [vmem:[%s1 + $0x2ec] sm:$0xf]
  %v259 = vld [vmem:[%s1 + $0x2f0] sm:$0xf]
  %v260 = vld [vmem:[%s1 + $0x2f4] sm:$0xf]
  %v261 = vld [vmem:[%s1 + $0x2f8] sm:$0xf]
  %v262 = vld [vmem:[%s1 + $0x2fc] sm:$0xf]
  %v263 = vld [vmem:[%s1 + $0x300] sm:$0xf]
  %v264 = vld [vmem:[%s1 + $0x304] sm:$0xf]
  %v265 = vld [vmem:[%s1 + $0x308] sm:$0xf]
  %v266 = vld [vmem:[%s1 + $0x30c] sm:$0xf]
  %v267 = vld [vmem:[%s1 + $0x310] sm:$0xf]
  %v268 = vld [vmem:[%s1 + $0x314] sm:$0xf]
  %v269 = vld [vmem:[%s1 + $0x318] sm:$0xf]
  %v270 = vld [vmem:[%s1 + $0x31c] sm:$0xf]
  %v271 = vld [vmem:[%s1 + $0x320] sm:$0xf]
  %v272 = vld [vmem:[%s1 + $0x324] sm:$0xf]
  %v273 = vld [vmem:[%s1 + $0x328] sm:$0xf]
  %v274 = vld [vmem:[%s1 + $0x32c] sm:$0xf]
  %v275 = vld [vmem:[%s1 + $0x330] sm:$0xf]
  %v276 = vld [vmem:[%s1 + $0x334] sm:$0xf]
  %v277 = vld [vmem:[%s1 + $0x338] sm:$0xf]
  %v278 = vld [vmem:[%s1 + $0x33c] sm:$0xf]
  %v279 = vld [vmem:[%s1 + $0x340] sm:$0xf]
  %v280 = vld [vmem:[%s1 + $0x344] sm:$0xf]
  %v281 = vld [vmem:[%s1 + $0x348] sm:$0xf]
  %v282 = vld [vmem:[%s1 + $0x34c] sm:$0xf]
  %v283 = vld [vmem:[%s1 + $0x350] sm:$0xf]
  %v284 = vld [vmem:[%s1 + $0x354] sm:$0xf]
  %v285 = vld [vmem:[%s1 + $0x358] sm:$0xf]
  %v286 = vld [vmem:[%s1 + $0x35c] sm:$0xf]
  %v287 = vld [vmem:[%s1 + $0x360] sm:$0xf]
  %v288 = vld [vmem:[%s1 + $0x364] sm:$0xf]
  %v289 = vld [vmem:[%s1 + $0x368] sm:$0xf]
  %v290 = vld [vmem:[%s1 + $0x36c] sm:$0xf]
  %v291 = vld [vmem:[%s1 + $0x370] sm:$0xf]
  %v292 = vld [vmem:[%s1 + $0x374] sm:$0xf]
  %v293 = vld [vmem:[%s1 + $0x378] sm:$0xf]
  %v294 = vld [vmem:[%s1 + $0x37c] sm:$0xf]
  %v295 = vld [vmem:[%s1 + $0x380] sm:$0xf]
  %v296 = vld [vmem:[%s1 + $0x384] sm:$0xf]
  %v297 = vld [vmem:[%s1 + $0x388] sm:$0xf]
  %v298 = vld [vmem:[%s1 + $0x38c] sm:$0xf]
  %v299 = vld [vmem:[%s1 + $0x390] sm:$0xf]
  %v300 = vld [vmem:[%s1 + $0x394] sm:$0xf]
  %v301 = vld [vmem:[%s1 + $0x398] sm:$0xf]
  %v302 = vld [vmem:[%s1 + $0x39c] sm:$0xf]
  %v303 = vld [vmem:[%s1 + $0x3a0] sm:$0xf]
  %v304 = vld [vmem:[%s1 + $0x3a4] sm:$0xf]
  %v305 = vld [vmem:[%s1 + $0x3a8] sm:$0xf]
  %v306 = vld [vmem:[%s1 + $0x3ac] sm:$0xf]
  %v307 = vld [vmem:[%s1 + $0x3b0] sm:$0xf]
  %v308 = vld [vmem:[%s1 + $0x3b4] sm:$0xf]
  %v309 = vld [vmem:[%s1 + $0x3b8] sm:$0xf]
  %v310 = vld [vmem:[%s1 + $0x3bc] sm:$0xf]
  %v311 = vld [vmem:[%s1 + $0x3c0] sm:$0xf]
  %v312 = vld [vmem:[%s1 + $0x3c4] sm:$0xf]
  %v313 = vld [vmem:[%s1 + $0x3c8] sm:$0xf]
  %v314 = vld [vmem:[%s1 + $0x3cc] sm:$0xf]
  %v315 = vld [vmem:[%s1 + $0x3d0] sm:$0xf]
  %v316 = vld [vmem:[%s1 + $0x3d4] sm:$0xf]
  %v317 = vld [vmem:[%s1 + $0x3d8] sm:$0xf]
  %v318 = vld [vmem:[%s1 + $0x3dc] sm:$0xf]
  %v319 = vld [vmem:[%s1 + $0x3e0] sm:$0xf]
  %v320 = vld [vmem:[%s1 + $0x3e4] sm:$0xf]
  %v321 = vld [vmem:[%s1 + $0x3e8] sm:$0xf]
  %v322 = vld [vmem:[%s1 + $0x3ec] sm:$0xf]
  %v323 = vld [vmem:[%s1 + $0x3f0] sm:$0xf]
  %v324 = vld [vmem:[%s1 + $0x3f4] sm:$0xf]
  %v325 = vld [vmem:[%s1 + $0x3f8] sm:$0xf]
  %v326 = vld [vmem:[%s1 + $0x3fc] sm:$0xf]
  %v327 = vld [vmem:[%s2] sm:$0x1]
  %v329 = vlaneseq
  %v330 = vshrl.u32 %v329, 7
  %v331 = vsub.s32 0, %v330
  %v332 = vrot.slane %v327, %v331
  %v590 = vunpack.c.l.b16 %v71
  %v591 = vunpack.c.l.b16 %v72
  %v592 = vunpack.c.l.b16 %v73
  %v593 = vunpack.c.l.b16 %v74
  %v594 = vunpack.c.l.b16 %v75
  %v595 = vunpack.c.l.b16 %v76
  %v596 = vunpack.c.l.b16 %v77
  %v597 = vunpack.c.l.b16 %v78
  %v598 = vunpack.c.l.b16 %v79
  %v599 = vunpack.c.l.b16 %v80
  %v600 = vunpack.c.l.b16 %v81
  %v601 = vunpack.c.l.b16 %v82
  %v602 = vunpack.c.l.b16 %v83
  %v603 = vunpack.c.l.b16 %v84
  %v604 = vunpack.c.l.b16 %v85
  %v605 = vunpack.c.l.b16 %v86
  %v606 = vunpack.c.l.b16 %v87
  %v607 = vunpack.c.l.b16 %v88
  %v608 = vunpack.c.l.b16 %v89
  %v609 = vunpack.c.l.b16 %v90
  %v610 = vunpack.c.l.b16 %v91
  %v611 = vunpack.c.l.b16 %v92
  %v612 = vunpack.c.l.b16 %v93
  %v613 = vunpack.c.l.b16 %v94
  %v614 = vunpack.c.l.b16 %v95
  %v615 = vunpack.c.l.b16 %v96
  %v616 = vunpack.c.l.b16 %v97
  %v617 = vunpack.c.l.b16 %v98
  %v618 = vunpack.c.l.b16 %v99
  %v619 = vunpack.c.l.b16 %v100
  %v620 = vunpack.c.l.b16 %v101
  %v621 = vunpack.c.l.b16 %v102
  %v622 = vunpack.c.l.b16 %v103
  %v623 = vunpack.c.l.b16 %v104
  %v624 = vunpack.c.l.b16 %v105
  %v625 = vunpack.c.l.b16 %v106
  %v626 = vunpack.c.l.b16 %v107
  %v627 = vunpack.c.l.b16 %v108
  %v628 = vunpack.c.l.b16 %v109
  %v629 = vunpack.c.l.b16 %v110
  %v630 = vunpack.c.l.b16 %v111
  %v631 = vunpack.c.l.b16 %v112
  %v632 = vunpack.c.l.b16 %v113
  %v633 = vunpack.c.l.b16 %v114
  %v634 = vunpack.c.l.b16 %v115
  %v635 = vunpack.c.l.b16 %v116
  %v636 = vunpack.c.l.b16 %v117
  %v637 = vunpack.c.l.b16 %v118
  %v638 = vunpack.c.l.b16 %v119
  %v639 = vunpack.c.l.b16 %v120
  %v640 = vunpack.c.l.b16 %v121
  %v641 = vunpack.c.l.b16 %v122
  %v642 = vunpack.c.l.b16 %v123
  %v643 = vunpack.c.l.b16 %v124
  %v644 = vunpack.c.l.b16 %v125
  %v645 = vunpack.c.l.b16 %v126
  %v646 = vunpack.c.l.b16 %v127
  %v647 = vunpack.c.l.b16 %v128
  %v648 = vunpack.c.l.b16 %v129
  %v649 = vunpack.c.l.b16 %v130
  %v650 = vunpack.c.l.b16 %v131
  %v651 = vunpack.c.l.b16 %v132
  %v652 = vunpack.c.l.b16 %v133
  %v653 = vunpack.c.l.b16 %v134
  %v654 = vunpack.c.l.b16 %v135
  %v655 = vunpack.c.l.b16 %v136
  %v656 = vunpack.c.l.b16 %v137
  %v657 = vunpack.c.l.b16 %v138
  %v658 = vunpack.c.l.b16 %v139
  %v659 = vunpack.c.l.b16 %v140
  %v660 = vunpack.c.l.b16 %v141
  %v661 = vunpack.c.l.b16 %v142
  %v662 = vunpack.c.l.b16 %v143
  %v663 = vunpack.c.l.b16 %v144
  %v664 = vunpack.c.l.b16 %v145
  %v665 = vunpack.c.l.b16 %v146
  %v666 = vunpack.c.l.b16 %v147
  %v667 = vunpack.c.l.b16 %v148
  %v668 = vunpack.c.l.b16 %v149
  %v669 = vunpack.c.l.b16 %v150
  %v670 = vunpack.c.l.b16 %v151
  %v671 = vunpack.c.l.b16 %v152
  %v672 = vunpack.c.l.b16 %v153
  %v673 = vunpack.c.l.b16 %v154
  %v674 = vunpack.c.l.b16 %v155
  %v675 = vunpack.c.l.b16 %v156
  %v676 = vunpack.c.l.b16 %v157
  %v677 = vunpack.c.l.b16 %v158
  %v678 = vunpack.c.l.b16 %v159
  %v679 = vunpack.c.l.b16 %v160
  %v680 = vunpack.c.l.b16 %v161
  %v681 = vunpack.c.l.b16 %v162
  %v682 = vunpack.c.l.b16 %v163
  %v683 = vunpack.c.l.b16 %v164
  %v684 = vunpack.c.l.b16 %v165
  %v685 = vunpack.c.l.b16 %v166
  %v686 = vunpack.c.l.b16 %v167
  %v687 = vunpack.c.l.b16 %v168
  %v688 = vunpack.c.l.b16 %v169
  %v689 = vunpack.c.l.b16 %v170
  %v690 = vunpack.c.l.b16 %v171
  %v691 = vunpack.c.l.b16 %v172
  %v692 = vunpack.c.l.b16 %v173
  %v693 = vunpack.c.l.b16 %v174
  %v694 = vunpack.c.l.b16 %v175
  %v695 = vunpack.c.l.b16 %v176
  %v696 = vunpack.c.l.b16 %v177
  %v697 = vunpack.c.l.b16 %v178
  %v698 = vunpack.c.l.b16 %v179
  %v699 = vunpack.c.l.b16 %v180
  %v700 = vunpack.c.l.b16 %v181
  %v701 = vunpack.c.l.b16 %v182
  %v702 = vunpack.c.l.b16 %v183
  %v703 = vunpack.c.l.b16 %v184
  %v704 = vunpack.c.l.b16 %v185
  %v705 = vunpack.c.l.b16 %v186
  %v706 = vunpack.c.l.b16 %v187
  %v707 = vunpack.c.l.b16 %v188
  %v708 = vunpack.c.l.b16 %v189
  %v709 = vunpack.c.l.b16 %v190
  %v710 = vunpack.c.l.b16 %v191
  %v711 = vunpack.c.l.b16 %v192
  %v712 = vunpack.c.l.b16 %v193
  %v713 = vunpack.c.l.b16 %v194
  %v714 = vunpack.c.l.b16 %v195
  %v715 = vunpack.c.l.b16 %v196
  %v716 = vunpack.c.l.b16 %v197
  %v717 = vunpack.c.l.b16 %v198
  %v718 = vunpack.c.l.b16 %v199
  %v719 = vunpack.c.l.b16 %v200
  %v720 = vunpack.c.l.b16 %v201
  %v721 = vunpack.c.l.b16 %v202
  %v722 = vunpack.c.l.b16 %v203
  %v723 = vunpack.c.l.b16 %v204
  %v724 = vunpack.c.l.b16 %v205
  %v725 = vunpack.c.l.b16 %v206
  %v726 = vunpack.c.l.b16 %v207
  %v727 = vunpack.c.l.b16 %v208
  %v728 = vunpack.c.l.b16 %v209
  %v729 = vunpack.c.l.b16 %v210
  %v730 = vunpack.c.l.b16 %v211
  %v731 = vunpack.c.l.b16 %v212
  %v732 = vunpack.c.l.b16 %v213
  %v733 = vunpack.c.l.b16 %v214
  %v734 = vunpack.c.l.b16 %v215
  %v735 = vunpack.c.l.b16 %v216
  %v736 = vunpack.c.l.b16 %v217
  %v737 = vunpack.c.l.b16 %v218
  %v738 = vunpack.c.l.b16 %v219
  %v739 = vunpack.c.l.b16 %v220
  %v740 = vunpack.c.l.b16 %v221
  %v741 = vunpack.c.l.b16 %v222
  %v742 = vunpack.c.l.b16 %v223
  %v743 = vunpack.c.l.b16 %v224
  %v744 = vunpack.c.l.b16 %v225
  %v745 = vunpack.c.l.b16 %v226
  %v746 = vunpack.c.l.b16 %v227
  %v747 = vunpack.c.l.b16 %v228
  %v748 = vunpack.c.l.b16 %v229
  %v749 = vunpack.c.l.b16 %v230
  %v750 = vunpack.c.l.b16 %v231
  %v751 = vunpack.c.l.b16 %v232
  %v752 = vunpack.c.l.b16 %v233
  %v753 = vunpack.c.l.b16 %v234
  %v754 = vunpack.c.l.b16 %v235
  %v755 = vunpack.c.l.b16 %v236
  %v756 = vunpack.c.l.b16 %v237
  %v757 = vunpack.c.l.b16 %v238
  %v758 = vunpack.c.l.b16 %v239
  %v759 = vunpack.c.l.b16 %v240
  %v760 = vunpack.c.l.b16 %v241
  %v761 = vunpack.c.l.b16 %v242
  %v762 = vunpack.c.l.b16 %v243
  %v763 = vunpack.c.l.b16 %v244
  %v764 = vunpack.c.l.b16 %v245
  %v765 = vunpack.c.l.b16 %v246
  %v766 = vunpack.c.l.b16 %v247
  %v767 = vunpack.c.l.b16 %v248
  %v768 = vunpack.c.l.b16 %v249
  %v769 = vunpack.c.l.b16 %v250
  %v770 = vunpack.c.l.b16 %v251
  %v771 = vunpack.c.l.b16 %v252
  %v772 = vunpack.c.l.b16 %v253
  %v773 = vunpack.c.l.b16 %v254
  %v774 = vunpack.c.l.b16 %v255
  %v775 = vunpack.c.l.b16 %v256
  %v776 = vunpack.c.l.b16 %v257
  %v777 = vunpack.c.l.b16 %v258
  %v778 = vunpack.c.l.b16 %v259
  %v779 = vunpack.c.l.b16 %v260
  %v780 = vunpack.c.l.b16 %v261
  %v781 = vunpack.c.l.b16 %v262
  %v782 = vunpack.c.l.b16 %v263
  %v783 = vunpack.c.l.b16 %v264
  %v784 = vunpack.c.l.b16 %v265
  %v785 = vunpack.c.l.b16 %v266
  %v786 = vunpack.c.l.b16 %v267
  %v787 = vunpack.c.l.b16 %v268
  %v788 = vunpack.c.l.b16 %v269
  %v789 = vunpack.c.l.b16 %v270
  %v790 = vunpack.c.l.b16 %v271
  %v791 = vunpack.c.l.b16 %v272
  %v792 = vunpack.c.l.b16 %v273
  %v793 = vunpack.c.l.b16 %v274
  %v794 = vunpack.c.l.b16 %v275
  %v795 = vunpack.c.l.b16 %v276
  %v796 = vunpack.c.l.b16 %v277
  %v797 = vunpack.c.l.b16 %v278
  %v798 = vunpack.c.l.b16 %v279
  %v799 = vunpack.c.l.b16 %v280
  %v800 = vunpack.c.l.b16 %v281
  %v801 = vunpack.c.l.b16 %v282
  %v802 = vunpack.c.l.b16 %v283
  %v803 = vunpack.c.l.b16 %v284
  %v804 = vunpack.c.l.b16 %v285
  %v805 = vunpack.c.l.b16 %v286
  %v806 = vunpack.c.l.b16 %v287
  %v807 = vunpack.c.l.b16 %v288
  %v808 = vunpack.c.l.b16 %v289
  %v809 = vunpack.c.l.b16 %v290
  %v810 = vunpack.c.l.b16 %v291
  %v811 = vunpack.c.l.b16 %v292
  %v812 = vunpack.c.l.b16 %v293
  %v813 = vunpack.c.l.b16 %v294
  %v814 = vunpack.c.l.b16 %v295
  %v815 = vunpack.c.l.b16 %v296
  %v816 = vunpack.c.l.b16 %v297
  %v817 = vunpack.c.l.b16 %v298
  %v818 = vunpack.c.l.b16 %v299
  %v819 = vunpack.c.l.b16 %v300
  %v820 = vunpack.c.l.b16 %v301
  %v821 = vunpack.c.l.b16 %v302
  %v822 = vunpack.c.l.b16 %v303
  %v823 = vunpack.c.l.b16 %v304
  %v824 = vunpack.c.l.b16 %v305
  %v825 = vunpack.c.l.b16 %v306
  %v826 = vunpack.c.l.b16 %v307
  %v827 = vunpack.c.l.b16 %v308
  %v828 = vunpack.c.l.b16 %v309
  %v829 = vunpack.c.l.b16 %v310
  %v830 = vunpack.c.l.b16 %v311
  %v831 = vunpack.c.l.b16 %v312
  %v832 = vunpack.c.l.b16 %v313
  %v833 = vunpack.c.l.b16 %v314
  %v834 = vunpack.c.l.b16 %v315
  %v835 = vunpack.c.l.b16 %v316
  %v836 = vunpack.c.l.b16 %v317
  %v837 = vunpack.c.l.b16 %v318
  %v838 = vunpack.c.l.b16 %v319
  %v839 = vunpack.c.l.b16 %v320
  %v840 = vunpack.c.l.b16 %v321
  %v841 = vunpack.c.l.b16 %v322
  %v842 = vunpack.c.l.b16 %v323
  %v843 = vunpack.c.l.b16 %v324
  %v844 = vunpack.c.l.b16 %v325
  %v845 = vunpack.c.l.b16 %v326
  %v846 = vpack.c.b16 %v591, %v590
  %v847 = vpack.c.b16 %v593, %v592
  %v848 = vpack.c.b16 %v595, %v594
  %v849 = vpack.c.b16 %v597, %v596
  %v850 = vpack.c.b16 %v599, %v598
  %v851 = vpack.c.b16 %v601, %v600
  %v852 = vpack.c.b16 %v603, %v602
  %v853 = vpack.c.b16 %v605, %v604
  %v854 = vpack.c.b16 %v607, %v606
  %v855 = vpack.c.b16 %v609, %v608
  %v856 = vpack.c.b16 %v611, %v610
  %v857 = vpack.c.b16 %v613, %v612
  %v858 = vpack.c.b16 %v615, %v614
  %v859 = vpack.c.b16 %v617, %v616
  %v860 = vpack.c.b16 %v619, %v618
  %v861 = vpack.c.b16 %v621, %v620
  %v862 = vpack.c.b16 %v623, %v622
  %v863 = vpack.c.b16 %v625, %v624
  %v864 = vpack.c.b16 %v627, %v626
  %v865 = vpack.c.b16 %v629, %v628
  %v866 = vpack.c.b16 %v631, %v630
  %v867 = vpack.c.b16 %v633, %v632
  %v868 = vpack.c.b16 %v635, %v634
  %v869 = vpack.c.b16 %v637, %v636
  %v870 = vpack.c.b16 %v639, %v638
  %v871 = vpack.c.b16 %v641, %v640
  %v872 = vpack.c.b16 %v643, %v642
  %v873 = vpack.c.b16 %v645, %v644
  %v874 = vpack.c.b16 %v647, %v646
  %v875 = vpack.c.b16 %v649, %v648
  %v876 = vpack.c.b16 %v651, %v650
  %v877 = vpack.c.b16 %v653, %v652
  %v878 = vpack.c.b16 %v655, %v654
  %v879 = vpack.c.b16 %v657, %v656
  %v880 = vpack.c.b16 %v659, %v658
  %v881 = vpack.c.b16 %v661, %v660
  %v882 = vpack.c.b16 %v663, %v662
  %v883 = vpack.c.b16 %v665, %v664
  %v884 = vpack.c.b16 %v667, %v666
  %v885 = vpack.c.b16 %v669, %v668
  %v886 = vpack.c.b16 %v671, %v670
  %v887 = vpack.c.b16 %v673, %v672
  %v888 = vpack.c.b16 %v675, %v674
  %v889 = vpack.c.b16 %v677, %v676
  %v890 = vpack.c.b16 %v679, %v678
  %v891 = vpack.c.b16 %v681, %v680
  %v892 = vpack.c.b16 %v683, %v682
  %v893 = vpack.c.b16 %v685, %v684
  %v894 = vpack.c.b16 %v687, %v686
  %v895 = vpack.c.b16 %v689, %v688
  %v896 = vpack.c.b16 %v691, %v690
  %v897 = vpack.c.b16 %v693, %v692
  %v898 = vpack.c.b16 %v695, %v694
  %v899 = vpack.c.b16 %v697, %v696
  %v900 = vpack.c.b16 %v699, %v698
  %v901 = vpack.c.b16 %v701, %v700
  %v902 = vpack.c.b16 %v703, %v702
  %v903 = vpack.c.b16 %v705, %v704
  %v904 = vpack.c.b16 %v707, %v706
  %v905 = vpack.c.b16 %v709, %v708
  %v906 = vpack.c.b16 %v711, %v710
  %v907 = vpack.c.b16 %v713, %v712
  %v908 = vpack.c.b16 %v715, %v714
  %v909 = vpack.c.b16 %v717, %v716
  %v910 = vpack.c.b16 %v719, %v718
  %v911 = vpack.c.b16 %v721, %v720
  %v912 = vpack.c.b16 %v723, %v722
  %v913 = vpack.c.b16 %v725, %v724
  %v914 = vpack.c.b16 %v727, %v726
  %v915 = vpack.c.b16 %v729, %v728
  %v916 = vpack.c.b16 %v731, %v730
  %v917 = vpack.c.b16 %v733, %v732
  %v918 = vpack.c.b16 %v735, %v734
  %v919 = vpack.c.b16 %v737, %v736
  %v920 = vpack.c.b16 %v739, %v738
  %v921 = vpack.c.b16 %v741, %v740
  %v922 = vpack.c.b16 %v743, %v742
  %v923 = vpack.c.b16 %v745, %v744
  %v924 = vpack.c.b16 %v747, %v746
  %v925 = vpack.c.b16 %v749, %v748
  %v926 = vpack.c.b16 %v751, %v750
  %v927 = vpack.c.b16 %v753, %v752
  %v928 = vpack.c.b16 %v755, %v754
  %v929 = vpack.c.b16 %v757, %v756
  %v930 = vpack.c.b16 %v759, %v758
  %v931 = vpack.c.b16 %v761, %v760
  %v932 = vpack.c.b16 %v763, %v762
  %v933 = vpack.c.b16 %v765, %v764
  %v934 = vpack.c.b16 %v767, %v766
  %v935 = vpack.c.b16 %v769, %v768
  %v936 = vpack.c.b16 %v771, %v770
  %v937 = vpack.c.b16 %v773, %v772
  %v938 = vpack.c.b16 %v775, %v774
  %v939 = vpack.c.b16 %v777, %v776
  %v940 = vpack.c.b16 %v779, %v778
  %v941 = vpack.c.b16 %v781, %v780
  %v942 = vpack.c.b16 %v783, %v782
  %v943 = vpack.c.b16 %v785, %v784
  %v944 = vpack.c.b16 %v787, %v786
  %v945 = vpack.c.b16 %v789, %v788
  %v946 = vpack.c.b16 %v791, %v790
  %v947 = vpack.c.b16 %v793, %v792
  %v948 = vpack.c.b16 %v795, %v794
  %v949 = vpack.c.b16 %v797, %v796
  %v950 = vpack.c.b16 %v799, %v798
  %v951 = vpack.c.b16 %v801, %v800
  %v952 = vpack.c.b16 %v803, %v802
  %v953 = vpack.c.b16 %v805, %v804
  %v954 = vpack.c.b16 %v807, %v806
  %v955 = vpack.c.b16 %v809, %v808
  %v956 = vpack.c.b16 %v811, %v810
  %v957 = vpack.c.b16 %v813, %v812
  %v958 = vpack.c.b16 %v815, %v814
  %v959 = vpack.c.b16 %v817, %v816
  %v960 = vpack.c.b16 %v819, %v818
  %v961 = vpack.c.b16 %v821, %v820
  %v962 = vpack.c.b16 %v823, %v822
  %v963 = vpack.c.b16 %v825, %v824
  %v964 = vpack.c.b16 %v827, %v826
  %v965 = vpack.c.b16 %v829, %v828
  %v966 = vpack.c.b16 %v831, %v830
  %v967 = vpack.c.b16 %v833, %v832
  %v968 = vpack.c.b16 %v835, %v834
  %v969 = vpack.c.b16 %v837, %v836
  %v970 = vpack.c.b16 %v839, %v838
  %v971 = vpack.c.b16 %v841, %v840
  %v972 = vpack.c.b16 %v843, %v842
  %v973 = vpack.c.b16 %v845, %v844
  %1102 = vmatprep.subr.bf16.mxu0 0
  %1103 = vmatpush1.bf16.msra.mxu0 %v846
  %1104 = vmatprep.subr.bf16.mxu0 0
  %1105 = vmatpush1.bf16.msra.mxu0 %v847
  %1106 = vmatprep.subr.bf16.mxu0 0
  %1107 = vmatpush1.bf16.msra.mxu0 %v848
  %1108 = vmatprep.subr.bf16.mxu0 0
  %1109 = vmatpush1.bf16.msra.mxu0 %v849
  %1110 = vmatprep.subr.bf16.mxu0 0
  %1111 = vmatpush1.bf16.msra.mxu0 %v850
  %1112 = vmatprep.subr.bf16.mxu0 0
  %1113 = vmatpush1.bf16.msra.mxu0 %v851
  %1114 = vmatprep.subr.bf16.mxu0 0
  %1115 = vmatpush1.bf16.msra.mxu0 %v852
  %1116 = vmatprep.subr.bf16.mxu0 0
  %1117 = vmatpush1.bf16.msra.mxu0 %v853
  %1118 = vmatprep.subr.bf16.mxu0 0
  %1119 = vmatpush1.bf16.msra.mxu0 %v854
  %1120 = vmatprep.subr.bf16.mxu0 0
  %1121 = vmatpush1.bf16.msra.mxu0 %v855
  %1122 = vmatprep.subr.bf16.mxu0 0
  %1123 = vmatpush1.bf16.msra.mxu0 %v856
  %1124 = vmatprep.subr.bf16.mxu0 0
  %1125 = vmatpush1.bf16.msra.mxu0 %v857
  %1126 = vmatprep.subr.bf16.mxu0 0
  %1127 = vmatpush1.bf16.msra.mxu0 %v858
  %1128 = vmatprep.subr.bf16.mxu0 0
  %1129 = vmatpush1.bf16.msra.mxu0 %v859
  %1130 = vmatprep.subr.bf16.mxu0 0
  %1131 = vmatpush1.bf16.msra.mxu0 %v860
  %1132 = vmatprep.subr.bf16.mxu0 0
  %1133 = vmatpush1.bf16.msra.mxu0 %v861
  %1134 = vmatprep.mubr.bf16.mxu0 %v56
  %1135 = vmatmul.mubr.bf16.gmra.mrb[0].mxu0 %v55
  %v1136 = vpop.f32.mrb[0].mxu0
  %v1137 = vadd.f32 %v332, %v1136
  %v1138 = vpop.f32.mrb[0].mxu0
  %v1139 = vpop.f32.mrb[0].mxu0
  %v1140 = vpop.f32.mrb[0].mxu0
  %1141 = vdwg.mxu0
  %1142 = vmatprep.subr.bf16.mxu0 0
  %1143 = vmatpush1.bf16.msra.mxu0 %v862
  %1144 = vmatprep.subr.bf16.mxu0 0
  %1145 = vmatpush1.bf16.msra.mxu0 %v863
  %1146 = vmatprep.subr.bf16.mxu0 0
  %1147 = vmatpush1.bf16.msra.mxu0 %v864
  %1148 = vmatprep.subr.bf16.mxu0 0
  %1149 = vmatpush1.bf16.msra.mxu0 %v865
  %1150 = vmatprep.subr.bf16.mxu0 0
  %1151 = vmatpush1.bf16.msra.mxu0 %v866
  %1152 = vmatprep.subr.bf16.mxu0 0
  %1153 = vmatpush1.bf16.msra.mxu0 %v867
  %1154 = vmatprep.subr.bf16.mxu0 0
  %1155 = vmatpush1.bf16.msra.mxu0 %v868
  %1156 = vmatprep.subr.bf16.mxu0 0
  %1157 = vmatpush1.bf16.msra.mxu0 %v869
  %1158 = vmatprep.subr.bf16.mxu0 0
  %1159 = vmatpush1.bf16.msra.mxu0 %v870
  %1160 = vmatprep.subr.bf16.mxu0 0
  %1161 = vmatpush1.bf16.msra.mxu0 %v871
  %1162 = vmatprep.subr.bf16.mxu0 0
  %1163 = vmatpush1.bf16.msra.mxu0 %v872
  %1164 = vmatprep.subr.bf16.mxu0 0
  %1165 = vmatpush1.bf16.msra.mxu0 %v873
  %1166 = vmatprep.subr.bf16.mxu0 0
  %1167 = vmatpush1.bf16.msra.mxu0 %v874
  %1168 = vmatprep.subr.bf16.mxu0 0
  %1169 = vmatpush1.bf16.msra.mxu0 %v875
  %1170 = vmatprep.subr.bf16.mxu0 0
  %1171 = vmatpush1.bf16.msra.mxu0 %v876
  %1172 = vmatprep.subr.bf16.mxu0 0
  %1173 = vmatpush1.bf16.msra.mxu0 %v877
  %1174 = vmatprep.mubr.bf16.mxu0 %v58
  %1175 = vmatmul.mubr.bf16.gmra.mrb[0].mxu0 %v57
  %v1176 = vpop.f32.mrb[0].mxu0
  %v1177 = vadd.f32 %v1137, %v1176
  %v1178 = vpop.f32.mrb[0].mxu0
  %v1179 = vpop.f32.mrb[0].mxu0
  %v1180 = vpop.f32.mrb[0].mxu0
  %1181 = vdwg.mxu0
  %1182 = vmatprep.subr.bf16.mxu0 0
  %1183 = vmatpush1.bf16.msra.mxu0 %v878
  %1184 = vmatprep.subr.bf16.mxu0 0
  %1185 = vmatpush1.bf16.msra.mxu0 %v879
  %1186 = vmatprep.subr.bf16.mxu0 0
  %1187 = vmatpush1.bf16.msra.mxu0 %v880
  %1188 = vmatprep.subr.bf16.mxu0 0
  %1189 = vmatpush1.bf16.msra.mxu0 %v881
  %1190 = vmatprep.subr.bf16.mxu0 0
  %1191 = vmatpush1.bf16.msra.mxu0 %v882
  %1192 = vmatprep.subr.bf16.mxu0 0
  %1193 = vmatpush1.bf16.msra.mxu0 %v883
  %1194 = vmatprep.subr.bf16.mxu0 0
  %1195 = vmatpush1.bf16.msra.mxu0 %v884
  %1196 = vmatprep.subr.bf16.mxu0 0
  %1197 = vmatpush1.bf16.msra.mxu0 %v885
  %1198 = vmatprep.subr.bf16.mxu0 0
  %1199 = vmatpush1.bf16.msra.mxu0 %v886
  %1200 = vmatprep.subr.bf16.mxu0 0
  %1201 = vmatpush1.bf16.msra.mxu0 %v887
  %1202 = vmatprep.subr.bf16.mxu0 0
  %1203 = vmatpush1.bf16.msra.mxu0 %v888
  %1204 = vmatprep.subr.bf16.mxu0 0
  %1205 = vmatpush1.bf16.msra.mxu0 %v889
  %1206 = vmatprep.subr.bf16.mxu0 0
  %1207 = vmatpush1.bf16.msra.mxu0 %v890
  %1208 = vmatprep.subr.bf16.mxu0 0
  %1209 = vmatpush1.bf16.msra.mxu0 %v891
  %1210 = vmatprep.subr.bf16.mxu0 0
  %1211 = vmatpush1.bf16.msra.mxu0 %v892
  %1212 = vmatprep.subr.bf16.mxu0 0
  %1213 = vmatpush1.bf16.msra.mxu0 %v893
  %1214 = vmatprep.mubr.bf16.mxu0 %v60
  %1215 = vmatmul.mubr.bf16.gmra.mrb[0].mxu0 %v59
  %v1216 = vpop.f32.mrb[0].mxu0
  %v1217 = vadd.f32 %v1177, %v1216
  %v1218 = vpop.f32.mrb[0].mxu0
  %v1219 = vpop.f32.mrb[0].mxu0
  %v1220 = vpop.f32.mrb[0].mxu0
  %1221 = vdwg.mxu0
  %1222 = vmatprep.subr.bf16.mxu0 0
  %1223 = vmatpush1.bf16.msra.mxu0 %v894
  %1224 = vmatprep.subr.bf16.mxu0 0
  %1225 = vmatpush1.bf16.msra.mxu0 %v895
  %1226 = vmatprep.subr.bf16.mxu0 0
  %1227 = vmatpush1.bf16.msra.mxu0 %v896
  %1228 = vmatprep.subr.bf16.mxu0 0
  %1229 = vmatpush1.bf16.msra.mxu0 %v897
  %1230 = vmatprep.subr.bf16.mxu0 0
  %1231 = vmatpush1.bf16.msra.mxu0 %v898
  %1232 = vmatprep.subr.bf16.mxu0 0
  %1233 = vmatpush1.bf16.msra.mxu0 %v899
  %1234 = vmatprep.subr.bf16.mxu0 0
  %1235 = vmatpush1.bf16.msra.mxu0 %v900
  %1236 = vmatprep.subr.bf16.mxu0 0
  %1237 = vmatpush1.bf16.msra.mxu0 %v901
  %1238 = vmatprep.subr.bf16.mxu0 0
  %1239 = vmatpush1.bf16.msra.mxu0 %v902
  %1240 = vmatprep.subr.bf16.mxu0 0
  %1241 = vmatpush1.bf16.msra.mxu0 %v903
  %1242 = vmatprep.subr.bf16.mxu0 0
  %1243 = vmatpush1.bf16.msra.mxu0 %v904
  %1244 = vmatprep.subr.bf16.mxu0 0
  %1245 = vmatpush1.bf16.msra.mxu0 %v905
  %1246 = vmatprep.subr.bf16.mxu0 0
  %1247 = vmatpush1.bf16.msra.mxu0 %v906
  %1248 = vmatprep.subr.bf16.mxu0 0
  %1249 = vmatpush1.bf16.msra.mxu0 %v907
  %1250 = vmatprep.subr.bf16.mxu0 0
  %1251 = vmatpush1.bf16.msra.mxu0 %v908
  %1252 = vmatprep.subr.bf16.mxu0 0
  %1253 = vmatpush1.bf16.msra.mxu0 %v909
  %1254 = vmatprep.mubr.bf16.mxu0 %v62
  %1255 = vmatmul.mubr.bf16.gmra.mrb[0].mxu0 %v61
  %v1256 = vpop.f32.mrb[0].mxu0
  %v1257 = vadd.f32 %v1217, %v1256
  %v1258 = vpop.f32.mrb[0].mxu0
  %v1259 = vpop.f32.mrb[0].mxu0
  %v1260 = vpop.f32.mrb[0].mxu0
  %1261 = vdwg.mxu0
  %1262 = vmatprep.subr.bf16.mxu0 0
  %1263 = vmatpush1.bf16.msra.mxu0 %v910
  %1264 = vmatprep.subr.bf16.mxu0 0
  %1265 = vmatpush1.bf16.msra.mxu0 %v911
  %1266 = vmatprep.subr.bf16.mxu0 0
  %1267 = vmatpush1.bf16.msra.mxu0 %v912
  %1268 = vmatprep.subr.bf16.mxu0 0
  %1269 = vmatpush1.bf16.msra.mxu0 %v913
  %1270 = vmatprep.subr.bf16.mxu0 0
  %1271 = vmatpush1.bf16.msra.mxu0 %v914
  %1272 = vmatprep.subr.bf16.mxu0 0
  %1273 = vmatpush1.bf16.msra.mxu0 %v915
  %1274 = vmatprep.subr.bf16.mxu0 0
  %1275 = vmatpush1.bf16.msra.mxu0 %v916
  %1276 = vmatprep.subr.bf16.mxu0 0
  %1277 = vmatpush1.bf16.msra.mxu0 %v917
  %1278 = vmatprep.subr.bf16.mxu0 0
  %1279 = vmatpush1.bf16.msra.mxu0 %v918
  %1280 = vmatprep.subr.bf16.mxu0 0
  %1281 = vmatpush1.bf16.msra.mxu0 %v919
  %1282 = vmatprep.subr.bf16.mxu0 0
  %1283 = vmatpush1.bf16.msra.mxu0 %v920
  %1284 = vmatprep.subr.bf16.mxu0 0
  %1285 = vmatpush1.bf16.msra.mxu0 %v921
  %1286 = vmatprep.subr.bf16.mxu0 0
  %1287 = vmatpush1.bf16.msra.mxu0 %v922
  %1288 = vmatprep.subr.bf16.mxu0 0
  %1289 = vmatpush1.bf16.msra.mxu0 %v923
  %1290 = vmatprep.subr.bf16.mxu0 0
  %1291 = vmatpush1.bf16.msra.mxu0 %v924
  %1292 = vmatprep.subr.bf16.mxu0 0
  %1293 = vmatpush1.bf16.msra.mxu0 %v925
  %1294 = vmatprep.mubr.bf16.mxu0 %v64
  %1295 = vmatmul.mubr.bf16.gmra.mrb[0].mxu0 %v63
  %v1296 = vpop.f32.mrb[0].mxu0
  %v1297 = vadd.f32 %v1257, %v1296
  %v1298 = vpop.f32.mrb[0].mxu0
  %v1299 = vpop.f32.mrb[0].mxu0
  %v1300 = vpop.f32.mrb[0].mxu0
  %1301 = vdwg.mxu0
  %1302 = vmatprep.subr.bf16.mxu0 0
  %1303 = vmatpush1.bf16.msra.mxu0 %v926
  %1304 = vmatprep.subr.bf16.mxu0 0
  %1305 = vmatpush1.bf16.msra.mxu0 %v927
  %1306 = vmatprep.subr.bf16.mxu0 0
  %1307 = vmatpush1.bf16.msra.mxu0 %v928
  %1308 = vmatprep.subr.bf16.mxu0 0
  %1309 = vmatpush1.bf16.msra.mxu0 %v929
  %1310 = vmatprep.subr.bf16.mxu0 0
  %1311 = vmatpush1.bf16.msra.mxu0 %v930
  %1312 = vmatprep.subr.bf16.mxu0 0
  %1313 = vmatpush1.bf16.msra.mxu0 %v931
  %1314 = vmatprep.subr.bf16.mxu0 0
  %1315 = vmatpush1.bf16.msra.mxu0 %v932
  %1316 = vmatprep.subr.bf16.mxu0 0
  %1317 = vmatpush1.bf16.msra.mxu0 %v933
  %1318 = vmatprep.subr.bf16.mxu0 0
  %1319 = vmatpush1.bf16.msra.mxu0 %v934
  %1320 = vmatprep.subr.bf16.mxu0 0
  %1321 = vmatpush1.bf16.msra.mxu0 %v935
  %1322 = vmatprep.subr.bf16.mxu0 0
  %1323 = vmatpush1.bf16.msra.mxu0 %v936
  %1324 = vmatprep.subr.bf16.mxu0 0
  %1325 = vmatpush1.bf16.msra.mxu0 %v937
  %1326 = vmatprep.subr.bf16.mxu0 0
  %1327 = vmatpush1.bf16.msra.mxu0 %v938
  %1328 = vmatprep.subr.bf16.mxu0 0
  %1329 = vmatpush1.bf16.msra.mxu0 %v939
  %1330 = vmatprep.subr.bf16.mxu0 0
  %1331 = vmatpush1.bf16.msra.mxu0 %v940
  %1332 = vmatprep.subr.bf16.mxu0 0
  %1333 = vmatpush1.bf16.msra.mxu0 %v941
  %1334 = vmatprep.mubr.bf16.mxu0 %v66
  %1335 = vmatmul.mubr.bf16.gmra.mrb[0].mxu0 %v65
  %v1336 = vpop.f32.mrb[0].mxu0
  %v1337 = vadd.f32 %v1297, %v1336
  %v1338 = vpop.f32.mrb[0].mxu0
  %v1339 = vpop.f32.mrb[0].mxu0
  %v1340 = vpop.f32.mrb[0].mxu0
  %1341 = vdwg.mxu0
  %1342 = vmatprep.subr.bf16.mxu0 0
  %1343 = vmatpush1.bf16.msra.mxu0 %v942
  %1344 = vmatprep.subr.bf16.mxu0 0
  %1345 = vmatpush1.bf16.msra.mxu0 %v943
  %1346 = vmatprep.subr.bf16.mxu0 0
  %1347 = vmatpush1.bf16.msra.mxu0 %v944
  %1348 = vmatprep.subr.bf16.mxu0 0
  %1349 = vmatpush1.bf16.msra.mxu0 %v945
  %1350 = vmatprep.subr.bf16.mxu0 0
  %1351 = vmatpush1.bf16.msra.mxu0 %v946
  %1352 = vmatprep.subr.bf16.mxu0 0
  %1353 = vmatpush1.bf16.msra.mxu0 %v947
  %1354 = vmatprep.subr.bf16.mxu0 0
  %1355 = vmatpush1.bf16.msra.mxu0 %v948
  %1356 = vmatprep.subr.bf16.mxu0 0
  %1357 = vmatpush1.bf16.msra.mxu0 %v949
  %1358 = vmatprep.subr.bf16.mxu0 0
  %1359 = vmatpush1.bf16.msra.mxu0 %v950
  %1360 = vmatprep.subr.bf16.mxu0 0
  %1361 = vmatpush1.bf16.msra.mxu0 %v951
  %1362 = vmatprep.subr.bf16.mxu0 0
  %1363 = vmatpush1.bf16.msra.mxu0 %v952
  %1364 = vmatprep.subr.bf16.mxu0 0
  %1365 = vmatpush1.bf16.msra.mxu0 %v953
  %1366 = vmatprep.subr.bf16.mxu0 0
  %1367 = vmatpush1.bf16.msra.mxu0 %v954
  %1368 = vmatprep.subr.bf16.mxu0 0
  %1369 = vmatpush1.bf16.msra.mxu0 %v955
  %1370 = vmatprep.subr.bf16.mxu0 0
  %1371 = vmatpush1.bf16.msra.mxu0 %v956
  %1372 = vmatprep.subr.bf16.mxu0 0
  %1373 = vmatpush1.bf16.msra.mxu0 %v957
  %1374 = vmatprep.mubr.bf16.mxu0 %v68
  %1375 = vmatmul.mubr.bf16.gmra.mrb[0].mxu0 %v67
  %v1376 = vpop.f32.mrb[0].mxu0
  %v1377 = vadd.f32 %v1337, %v1376
  %v1378 = vpop.f32.mrb[0].mxu0
  %v1379 = vpop.f32.mrb[0].mxu0
  %v1380 = vpop.f32.mrb[0].mxu0
  %1381 = vdwg.mxu0
  %1382 = vmatprep.subr.bf16.mxu0 0
  %1383 = vmatpush1.bf16.msra.mxu0 %v958
  %1384 = vmatprep.subr.bf16.mxu0 0
  %1385 = vmatpush1.bf16.msra.mxu0 %v959
  %1386 = vmatprep.subr.bf16.mxu0 0
  %1387 = vmatpush1.bf16.msra.mxu0 %v960
  %1388 = vmatprep.subr.bf16.mxu0 0
  %1389 = vmatpush1.bf16.msra.mxu0 %v961
  %1390 = vmatprep.subr.bf16.mxu0 0
  %1391 = vmatpush1.bf16.msra.mxu0 %v962
  %1392 = vmatprep.subr.bf16.mxu0 0
  %1393 = vmatpush1.bf16.msra.mxu0 %v963
  %1394 = vmatprep.subr.bf16.mxu0 0
  %1395 = vmatpush1.bf16.msra.mxu0 %v964
  %1396 = vmatprep.subr.bf16.mxu0 0
  %1397 = vmatpush1.bf16.msra.mxu0 %v965
  %1398 = vmatprep.subr.bf16.mxu0 0
  %1399 = vmatpush1.bf16.msra.mxu0 %v966
  %1400 = vmatprep.subr.bf16.mxu0 0
  %1401 = vmatpush1.bf16.msra.mxu0 %v967
  %1402 = vmatprep.subr.bf16.mxu0 0
  %1403 = vmatpush1.bf16.msra.mxu0 %v968
  %1404 = vmatprep.subr.bf16.mxu0 0
  %1405 = vmatpush1.bf16.msra.mxu0 %v969
  %1406 = vmatprep.subr.bf16.mxu0 0
  %1407 = vmatpush1.bf16.msra.mxu0 %v970
  %1408 = vmatprep.subr.bf16.mxu0 0
  %1409 = vmatpush1.bf16.msra.mxu0 %v971
  %1410 = vmatprep.subr.bf16.mxu0 0
  %1411 = vmatpush1.bf16.msra.mxu0 %v972
  %1412 = vmatprep.subr.bf16.mxu0 0
  %1413 = vmatpush1.bf16.msra.mxu0 %v973
  %1414 = vmatprep.mubr.bf16.mxu0 %v70
  %1415 = vmatmul.mubr.bf16.gmra.mrb[0].mxu0 %v69
  %v1416 = vpop.f32.mrb[0].mxu0
  %v1417 = vadd.f32 %v1377, %v1416
  %v1418 = vpop.f32.mrb[0].mxu0
  %v1419 = vpop.f32.mrb[0].mxu0
  %v1420 = vpop.f32.mrb[0].mxu0
  %1421 = vdwg.mxu0
  %v1422 = vmax.f32 %v1417, 0.0
  %v1423 = vpack.c.bf16 %v1422, %v1422
  %v1424 = vld [vmem:[%s3] sm:$0xf]
  %v1425 = vld [vmem:[%s3 + $0x4] sm:$0xf]
  %v1426 = vld [vmem:[%s3 + $0x8] sm:$0xf]
  %v1427 = vld [vmem:[%s3 + $0xc] sm:$0xf]
  %v1428 = vld [vmem:[%s3 + $0x10] sm:$0xf]
  %v1429 = vld [vmem:[%s3 + $0x14] sm:$0xf]
  %v1430 = vld [vmem:[%s3 + $0x18] sm:$0xf]
  %v1431 = vld [vmem:[%s3 + $0x1c] sm:$0xf]
  %v1432 = vld [vmem:[%s3 + $0x20] sm:$0xf]
  %v1433 = vld [vmem:[%s3 + $0x24] sm:$0xf]
  %v1434 = vld [vmem:[%s3 + $0x28] sm:$0xf]
  %v1435 = vld [vmem:[%s3 + $0x2c] sm:$0xf]
  %v1436 = vld [vmem:[%s3 + $0x30] sm:$0xf]
  %v1437 = vld [vmem:[%s3 + $0x34] sm:$0xf]
  %v1438 = vld [vmem:[%s3 + $0x38] sm:$0xf]
  %v1439 = vld [vmem:[%s3 + $0x3c] sm:$0xf]
  %v1440 = vld [vmem:[%s4] sm:$0x1]
  %v1442 = vlaneseq
  %v1443 = vshrl.u32 %v1442, 7
  %v1444 = vsub.s32 0, %v1443
  %v1445 = vrot.slane %v1440, %v1444
  %v1463 = vunpack.c.l.b16 %v1424
  %v1464 = vunpack.c.l.b16 %v1425
  %v1465 = vunpack.c.l.b16 %v1426
  %v1466 = vunpack.c.l.b16 %v1427
  %v1467 = vunpack.c.l.b16 %v1428
  %v1468 = vunpack.c.l.b16 %v1429
  %v1469 = vunpack.c.l.b16 %v1430
  %v1470 = vunpack.c.l.b16 %v1431
  %v1471 = vunpack.c.l.b16 %v1432
  %v1472 = vunpack.c.l.b16 %v1433
  %v1473 = vunpack.c.l.b16 %v1434
  %v1474 = vunpack.c.l.b16 %v1435
  %v1475 = vunpack.c.l.b16 %v1436
  %v1476 = vunpack.c.l.b16 %v1437
  %v1477 = vunpack.c.l.b16 %v1438
  %v1478 = vunpack.c.l.b16 %v1439
  %v1479 = vpack.c.b16 %v1464, %v1463
  %v1480 = vpack.c.b16 %v1466, %v1465
  %v1481 = vpack.c.b16 %v1468, %v1467
  %v1482 = vpack.c.b16 %v1470, %v1469
  %v1483 = vpack.c.b16 %v1472, %v1471
  %v1484 = vpack.c.b16 %v1474, %v1473
  %v1485 = vpack.c.b16 %v1476, %v1475
  %v1486 = vpack.c.b16 %v1478, %v1477
  %1495 = vmatprep.subr.bf16.mxu0 0
  %1496 = vmatpush1.bf16.msra.mxu0 %v1479
  %1497 = vmatprep.subr.bf16.mxu0 0
  %1498 = vmatpush1.bf16.msra.mxu0 %v1480
  %1499 = vmatprep.subr.bf16.mxu0 0
  %1500 = vmatpush1.bf16.msra.mxu0 %v1481
  %1501 = vmatprep.subr.bf16.mxu0 0
  %1502 = vmatpush1.bf16.msra.mxu0 %v1482
  %1503 = vmatprep.subr.bf16.mxu0 0
  %1504 = vmatpush1.bf16.msra.mxu0 %v1483
  %1505 = vmatprep.subr.bf16.mxu0 0
  %1506 = vmatpush1.bf16.msra.mxu0 %v1484
  %1507 = vmatprep.subr.bf16.mxu0 0
  %1508 = vmatpush1.bf16.msra.mxu0 %v1485
  %1509 = vmatprep.subr.bf16.mxu0 0
  %1510 = vmatpush1.bf16.msra.mxu0 %v1486
  %1511 = vmatprep.subr.bf16.mxu0 0
  %1512 = vmatpush1.bf16.msra.mxu0 0
  %1513 = vmatprep.subr.bf16.mxu0 0
  %1514 = vmatpush1.bf16.msra.mxu0 0
  %1515 = vmatprep.subr.bf16.mxu0 0
  %1516 = vmatpush1.bf16.msra.mxu0 0
  %1517 = vmatprep.subr.bf16.mxu0 0
  %1518 = vmatpush1.bf16.msra.mxu0 0
  %1519 = vmatprep.subr.bf16.mxu0 0
  %1520 = vmatpush1.bf16.msra.mxu0 0
  %1521 = vmatprep.subr.bf16.mxu0 0
  %1522 = vmatpush1.bf16.msra.mxu0 0
  %1523 = vmatprep.subr.bf16.mxu0 0
  %1524 = vmatpush1.bf16.msra.mxu0 0
  %1525 = vmatprep.subr.bf16.mxu0 0
  %1526 = vmatpush1.bf16.msra.mxu0 0
  %1527 = vmatprep.mubr.bf16.mxu0 0
  %1528 = vmatmul.mubr.bf16.gmra.mrb[0].mxu0 %v1423
  %v1529 = vpop.f32.mrb[0].mxu0
  %v1530 = vadd.f32 %v1445, %v1529
  %v1531 = vpop.f32.mrb[0].mxu0
  %v1532 = vpop.f32.mrb[0].mxu0
  %v1533 = vpop.f32.mrb[0].mxu0
  %1534 = vdwg.mxu0
  %v1535 = vmax.f32 %v1530, 0.0
  %v1536 = vpack.c.bf16 %v1535, %v1535
  %v1537 = vld [vmem:[%s5] sm:$0xf]
  %v1538 = vld [vmem:[%s5 + $0x4] sm:$0xf]
  %v1539 = vld [vmem:[%s5 + $0x8] sm:$0xf]
  %v1540 = vld [vmem:[%s5 + $0xc] sm:$0xf]
  %v1541 = vld [vmem:[%s5 + $0x10] sm:$0xf]
  %v1542 = vld [vmem:[%s5 + $0x14] sm:$0xf]
  %v1543 = vld [vmem:[%s5 + $0x18] sm:$0xf]
  %v1544 = vld [vmem:[%s5 + $0x1c] sm:$0xf]
  %v1545 = vld [vmem:[%s5 + $0x20] sm:$0xf]
  %v1546 = vld [vmem:[%s5 + $0x24] sm:$0xf]
  %v1547 = vld [vmem:[%s5 + $0x28] sm:$0xf]
  %v1548 = vld [vmem:[%s5 + $0x2c] sm:$0xf]
  %v1549 = vld [vmem:[%s5 + $0x30] sm:$0xf]
  %v1550 = vld [vmem:[%s5 + $0x34] sm:$0xf]
  %v1551 = vld [vmem:[%s5 + $0x38] sm:$0xf]
  %v1552 = vld [vmem:[%s5 + $0x3c] sm:$0xf]
  %v1553 = vld [vmem:[%s6] sm:$0x1]
  %v1555 = vlaneseq
  %v1556 = vshrl.u32 %v1555, 7
  %v1557 = vsub.s32 0, %v1556
  %v1558 = vrot.slane %v1553, %v1557
  %v1576 = vunpack.c.l.b16 %v1537
  %v1577 = vunpack.c.l.b16 %v1538
  %v1578 = vunpack.c.l.b16 %v1539
  %v1579 = vunpack.c.l.b16 %v1540
  %v1580 = vunpack.c.l.b16 %v1541
  %v1581 = vunpack.c.l.b16 %v1542
  %v1582 = vunpack.c.l.b16 %v1543
  %v1583 = vunpack.c.l.b16 %v1544
  %v1584 = vunpack.c.l.b16 %v1545
  %v1585 = vunpack.c.l.b16 %v1546
  %v1586 = vunpack.c.l.b16 %v1547
  %v1587 = vunpack.c.l.b16 %v1548
  %v1588 = vunpack.c.l.b16 %v1549
  %v1589 = vunpack.c.l.b16 %v1550
  %v1590 = vunpack.c.l.b16 %v1551
  %v1591 = vunpack.c.l.b16 %v1552
  %v1592 = vpack.c.b16 %v1577, %v1576
  %v1593 = vpack.c.b16 %v1579, %v1578
  %v1594 = vpack.c.b16 %v1581, %v1580
  %v1595 = vpack.c.b16 %v1583, %v1582
  %v1596 = vpack.c.b16 %v1585, %v1584
  %v1597 = vpack.c.b16 %v1587, %v1586
  %v1598 = vpack.c.b16 %v1589, %v1588
  %v1599 = vpack.c.b16 %v1591, %v1590
  %1608 = vmatprep.subr.bf16.mxu0 0
  %1609 = vmatpush1.bf16.msra.mxu0 %v1592
  %1610 = vmatprep.subr.bf16.mxu0 0
  %1611 = vmatpush1.bf16.msra.mxu0 %v1593
  %1612 = vmatprep.subr.bf16.mxu0 0
  %1613 = vmatpush1.bf16.msra.mxu0 %v1594
  %1614 = vmatprep.subr.bf16.mxu0 0
  %1615 = vmatpush1.bf16.msra.mxu0 %v1595
  %1616 = vmatprep.subr.bf16.mxu0 0
  %1617 = vmatpush1.bf16.msra.mxu0 %v1596
  %1618 = vmatprep.subr.bf16.mxu0 0
  %1619 = vmatpush1.bf16.msra.mxu0 %v1597
  %1620 = vmatprep.subr.bf16.mxu0 0
  %1621 = vmatpush1.bf16.msra.mxu0 %v1598
  %1622 = vmatprep.subr.bf16.mxu0 0
  %1623 = vmatpush1.bf16.msra.mxu0 %v1599
  %1624 = vmatprep.subr.bf16.mxu0 0
  %1625 = vmatpush1.bf16.msra.mxu0 0
  %1626 = vmatprep.subr.bf16.mxu0 0
  %1627 = vmatpush1.bf16.msra.mxu0 0
  %1628 = vmatprep.subr.bf16.mxu0 0
  %1629 = vmatpush1.bf16.msra.mxu0 0
  %1630 = vmatprep.subr.bf16.mxu0 0
  %1631 = vmatpush1.bf16.msra.mxu0 0
  %1632 = vmatprep.subr.bf16.mxu0 0
  %1633 = vmatpush1.bf16.msra.mxu0 0
  %1634 = vmatprep.subr.bf16.mxu0 0
  %1635 = vmatpush1.bf16.msra.mxu0 0
  %1636 = vmatprep.subr.bf16.mxu0 0
  %1637 = vmatpush1.bf16.msra.mxu0 0
  %1638 = vmatprep.subr.bf16.mxu0 0
  %1639 = vmatpush1.bf16.msra.mxu0 0
  %1640 = vmatprep.mubr.bf16.mxu0 0
  %1641 = vmatmul.mubr.bf16.gmra.mrb[0].mxu0 %v1536
  %v1642 = vpop.f32.mrb[0].mxu0
  %v1643 = vadd.f32 %v1558, %v1642
  %v1644 = vpop.f32.mrb[0].mxu0
  %v1645 = vpop.f32.mrb[0].mxu0
  %v1646 = vpop.f32.mrb[0].mxu0
  %1647 = vdwg.mxu0
  %v1648 = vmax.f32 %v1643, 0.0
  %v1649 = vpack.c.bf16 %v1648, %v1648
  %v1650 = vld [vmem:[%s7] sm:$0xf]
  %v1651 = vld [vmem:[%s7 + $0x4] sm:$0xf]
  %v1652 = vld [vmem:[%s7 + $0x8] sm:$0xf]
  %v1653 = vld [vmem:[%s7 + $0xc] sm:$0xf]
  %v1654 = vld [vmem:[%s7 + $0x10] sm:$0xf]
  %v1655 = vld [vmem:[%s7 + $0x14] sm:$0xf]
  %v1656 = vld [vmem:[%s7 + $0x18] sm:$0xf]
  %v1657 = vld [vmem:[%s7 + $0x1c] sm:$0xf]
  %v1658 = vld [vmem:[%s7 + $0x20] sm:$0xf]
  %v1659 = vld [vmem:[%s7 + $0x24] sm:$0xf]
  %v1660 = vld [vmem:[%s7 + $0x28] sm:$0xf]
  %v1661 = vld [vmem:[%s7 + $0x2c] sm:$0xf]
  %v1662 = vld [vmem:[%s7 + $0x30] sm:$0xf]
  %v1663 = vld [vmem:[%s7 + $0x34] sm:$0xf]
  %v1664 = vld [vmem:[%s7 + $0x38] sm:$0xf]
  %v1665 = vld [vmem:[%s7 + $0x3c] sm:$0xf]
  %v1666 = vld [vmem:[%s8] sm:$0x1]
  %v1668 = vlaneseq
  %v1669 = vshrl.u32 %v1668, 7
  %v1670 = vsub.s32 0, %v1669
  %v1671 = vrot.slane %v1666, %v1670
  %v1689 = vunpack.c.l.b16 %v1650
  %v1690 = vunpack.c.l.b16 %v1651
  %v1691 = vunpack.c.l.b16 %v1652
  %v1692 = vunpack.c.l.b16 %v1653
  %v1693 = vunpack.c.l.b16 %v1654
  %v1694 = vunpack.c.l.b16 %v1655
  %v1695 = vunpack.c.l.b16 %v1656
  %v1696 = vunpack.c.l.b16 %v1657
  %v1697 = vunpack.c.l.b16 %v1658
  %v1698 = vunpack.c.l.b16 %v1659
  %v1699 = vunpack.c.l.b16 %v1660
  %v1700 = vunpack.c.l.b16 %v1661
  %v1701 = vunpack.c.l.b16 %v1662
  %v1702 = vunpack.c.l.b16 %v1663
  %v1703 = vunpack.c.l.b16 %v1664
  %v1704 = vunpack.c.l.b16 %v1665
  %v1705 = vpack.c.b16 %v1690, %v1689
  %v1706 = vpack.c.b16 %v1692, %v1691
  %v1707 = vpack.c.b16 %v1694, %v1693
  %v1708 = vpack.c.b16 %v1696, %v1695
  %v1709 = vpack.c.b16 %v1698, %v1697
  %v1710 = vpack.c.b16 %v1700, %v1699
  %v1711 = vpack.c.b16 %v1702, %v1701
  %v1712 = vpack.c.b16 %v1704, %v1703
  %1721 = vmatprep.subr.bf16.mxu0 0
  %1722 = vmatpush1.bf16.msra.mxu0 %v1705
  %1723 = vmatprep.subr.bf16.mxu0 0
  %1724 = vmatpush1.bf16.msra.mxu0 %v1706
  %1725 = vmatprep.subr.bf16.mxu0 0
  %1726 = vmatpush1.bf16.msra.mxu0 %v1707
  %1727 = vmatprep.subr.bf16.mxu0 0
  %1728 = vmatpush1.bf16.msra.mxu0 %v1708
  %1729 = vmatprep.subr.bf16.mxu0 0
  %1730 = vmatpush1.bf16.msra.mxu0 %v1709
  %1731 = vmatprep.subr.bf16.mxu0 0
  %1732 = vmatpush1.bf16.msra.mxu0 %v1710
  %1733 = vmatprep.subr.bf16.mxu0 0
  %1734 = vmatpush1.bf16.msra.mxu0 %v1711
  %1735 = vmatprep.subr.bf16.mxu0 0
  %1736 = vmatpush1.bf16.msra.mxu0 %v1712
  %1737 = vmatprep.subr.bf16.mxu0 0
  %1738 = vmatpush1.bf16.msra.mxu0 0
  %1739 = vmatprep.subr.bf16.mxu0 0
  %1740 = vmatpush1.bf16.msra.mxu0 0
  %1741 = vmatprep.subr.bf16.mxu0 0
  %1742 = vmatpush1.bf16.msra.mxu0 0
  %1743 = vmatprep.subr.bf16.mxu0 0
  %1744 = vmatpush1.bf16.msra.mxu0 0
  %1745 = vmatprep.subr.bf16.mxu0 0
  %1746 = vmatpush1.bf16.msra.mxu0 0
  %1747 = vmatprep.subr.bf16.mxu0 0
  %1748 = vmatpush1.bf16.msra.mxu0 0
  %1749 = vmatprep.subr.bf16.mxu0 0
  %1750 = vmatpush1.bf16.msra.mxu0 0
  %1751 = vmatprep.subr.bf16.mxu0 0
  %1752 = vmatpush1.bf16.msra.mxu0 0
  %1753 = vmatprep.mubr.bf16.mxu0 0
  %1754 = vmatmul.mubr.bf16.gmra.mrb[0].mxu0 %v1649
  %v1755 = vpop.f32.mrb[0].mxu0
  %v1756 = vadd.f32 %v1671, %v1755
  %v1757 = vpop.f32.mrb[0].mxu0
  %v1758 = vpop.f32.mrb[0].mxu0
  %v1759 = vpop.f32.mrb[0].mxu0
  %1760 = vdwg.mxu0
  %v1761 = vld [vmem:[%s9] sm:$0x1]
  %v1762 = vld [vmem:[%s10] sm:$0x1]
  %v1763 = vxor.u32 %v1756, 2147483648
  %v1764 = vmul.f32 %v1763, 1.442695
  %v1765 = vpow.pop %v1764
  %v1766 = vadd.f32 %v1765, 1.0
  %v1767 = vrcp.pop %v1766
  %v1768 = vmul.f32 1.0, %v1767
  %v1770 = vlaneseq
  %v1771 = vshrl.u32 %v1770, 7
  %v1772 = vsub.s32 0, %v1771
  %v1773 = vrot.slane %v1761, %v1772
  %v1775 = vmul.f32 %v1773, %v1768
  %v1776 = vtanh.pop %v1756
  %v1778 = vlaneseq
  %v1779 = vshrl.u32 %v1778, 7
  %v1780 = vsub.s32 0, %v1779
  %v1781 = vrot.slane %v1762, %v1780
  %v1783 = vmul.f32 %v1781, %v1776
  %v1784 = vadd.f32 %v1775, %v1783
  %v1785 = vsub.f32 1.0, %v1761
  %v1786 = vsub.f32 %v1785, %v1762
  %v1788 = vlaneseq
  %v1789 = vshrl.u32 %v1788, 7
  %v1790 = vsub.s32 0, %v1789
  %v1791 = vrot.slane %v1786, %v1790
  %v1793 = vmul.f32 %v1791, %v1756
  %v1794 = vadd.f32 %v1784, %v1793
  %1795 = vst [vmem:[%s11] sm:$0xff] %v1794
  // Predicated region
  $region46: #{smoe_ae_forward.3} parent=0 // pred_check
    _
  $region47: #{smoe_ae_forward.3} parent=0 // pred_check_branch
    %1797 = sbr.rel (0) target = $region49
  $region48: #{smoe_ae_forward.3} parent=0 // pred_region
    _
  $region49: #{smoe_ae_forward.3} parent=0 // pred_fallthru
    _
  // Predicated region
  $region50: #{smoe_ae_forward.3} parent=0 // pred_check
    _
  $region51: #{smoe_ae_forward.3} parent=0 // pred_check_branch
    %1799 = sbr.rel (0) target = $region53
  $region52: #{smoe_ae_forward.3} parent=0 // pred_region
    _
  $region53: #{smoe_ae_forward.3} parent=0 // pred_fallthru
    _

// kernel: smoe_ae_forward.2
$region0: #{smoe_ae_forward.2}
  #allocation0 [shape = 'u32[]', space=smem, size = 0x4, offset = 0x4, fixed_abs, tag = 'smem constant byte address 0x4 - core index']
  #allocation1 [shape = 'u32[144,128]{1,0:T(1,128)}', space=vmem, size = 0x12000, scoped, tag = 'internal scratch']
  %s0 = inlined_call_operand.vmem [shape: f32[128,32], index: 0, kind: input, shape index: {}]
  %s1 = inlined_call_operand.vmem [shape: f32[128,288], index: 1, kind: input, shape index: {}]
  %s2 = inlined_call_operand.vmem [shape: bf16[3,288,32], index: 2, kind: input, shape index: {}]
  %s3 = inlined_call_operand.vmem [shape: f32[3,1,32], index: 3, kind: input, shape index: {}]
  %s4 = inlined_call_operand.vmem [shape: f32[3,1,32], index: 4, kind: input, shape index: {}]
  %s5 = inlined_call_operand.vmem [shape: f32[128,32], index: 5, kind: output, shape index: {}]
  %s6 = sld [smem:[#allocation0]]
  $region30: #{smoe_ae_forward.2} parent=0
    _
  %s8 = ssub.s32 1, %s6
  %s9 = scalar_select 0, %s8, %s6
  // Predicated region
  $region2: #{smoe_ae_forward.2} parent=0 // pred_check
    _
  $region3: #{smoe_ae_forward.2} parent=0 // pred_check_branch
    %11 = sbr.rel (0) target = $region5
  $region4: #{smoe_ae_forward.2} parent=0 // pred_region
    _
  $region5: #{smoe_ae_forward.2} parent=0 // pred_fallthru
    _
  // Predicated region
  $region6: #{smoe_ae_forward.2} parent=0 // pred_check
    _
  $region7: #{smoe_ae_forward.2} parent=0 // pred_check_branch
    %13 = sbr.rel (0) target = $region9
  $region8: #{smoe_ae_forward.2} parent=0 // pred_region
    _
  $region9: #{smoe_ae_forward.2} parent=0 // pred_fallthru
    _
  // Predicated region
  $region10: #{smoe_ae_forward.2} parent=0 // pred_check
    _
  $region11: #{smoe_ae_forward.2} parent=0 // pred_check_branch
    %15 = sbr.rel (0) target = $region13
  $region12: #{smoe_ae_forward.2} parent=0 // pred_region
    _
  $region13: #{smoe_ae_forward.2} parent=0 // pred_fallthru
    _
  // Predicated region
  $region14: #{smoe_ae_forward.2} parent=0 // pred_check
    _
  $region15: #{smoe_ae_forward.2} parent=0 // pred_check_branch
    %17 = sbr.rel (0) target = $region17
  $region16: #{smoe_ae_forward.2} parent=0 // pred_region
    _
  $region17: #{smoe_ae_forward.2} parent=0 // pred_fallthru
    _
  // Predicated region
  $region18: #{smoe_ae_forward.2} parent=0 // pred_check
    _
  $region19: #{smoe_ae_forward.2} parent=0 // pred_check_branch
    %19 = sbr.rel (0) target = $region21
  $region20: #{smoe_ae_forward.2} parent=0 // pred_region
    _
  $region21: #{smoe_ae_forward.2} parent=0 // pred_fallthru
    _
  %v21 = vld [vmem:[%s0] sm:$0xff]
  %v22 = vld [vmem:[%s0 + $0x8] sm:$0xff]
  %v23 = vld [vmem:[%s0 + $0x10] sm:$0xff]
  %v24 = vld [vmem:[%s0 + $0x18] sm:$0xff]
  %v25 = vld [vmem:[%s0 + $0x20] sm:$0xff]
  %v26 = vld [vmem:[%s0 + $0x28] sm:$0xff]
  %v27 = vld [vmem:[%s0 + $0x30] sm:$0xff]
  %v28 = vld [vmem:[%s0 + $0x38] sm:$0xff]
  %v29 = vld [vmem:[%s0 + $0x40] sm:$0xff]
  %v30 = vld [vmem:[%s0 + $0x48] sm:$0xff]
  %v31 = vld [vmem:[%s0 + $0x50] sm:$0xff]
  %v32 = vld [vmem:[%s0 + $0x58] sm:$0xff]
  %v33 = vld [vmem:[%s0 + $0x60] sm:$0xff]
  %v34 = vld [vmem:[%s0 + $0x68] sm:$0xff]
  %v35 = vld [vmem:[%s0 + $0x70] sm:$0xff]
  %v36 = vld [vmem:[%s0 + $0x78] sm:$0xff]
  %v37 = vld [vmem:[%s1] sm:$0xff]
  %v38 = vld [vmem:[%s1 + $0x8] sm:$0xff]
  %v39 = vld [vmem:[%s1 + $0x10] sm:$0xff]
  %v40 = vld [vmem:[%s1 + $0x18] sm:$0xff]
  %v41 = vld [vmem:[%s1 + $0x20] sm:$0xff]
  %v42 = vld [vmem:[%s1 + $0x28] sm:$0xff]
  %v43 = vld [vmem:[%s1 + $0x30] sm:$0xff]
  %v44 = vld [vmem:[%s1 + $0x38] sm:$0xff]
  %v45 = vld [vmem:[%s1 + $0x40] sm:$0xff]
  %v46 = vld [vmem:[%s1 + $0x48] sm:$0xff]
  %v47 = vld [vmem:[%s1 + $0x50] sm:$0xff]
  %v48 = vld [vmem:[%s1 + $0x58] sm:$0xff]
  %v49 = vld [vmem:[%s1 + $0x60] sm:$0xff]
  %v50 = vld [vmem:[%s1 + $0x68] sm:$0xff]
  %v51 = vld [vmem:[%s1 + $0x70] sm:$0xff]
  %v52 = vld [vmem:[%s1 + $0x78] sm:$0xff]
  %v53 = vld [vmem:[%s1 + $0x80] sm:$0xff]
  %v54 = vld [vmem:[%s1 + $0x88] sm:$0xff]
  %v55 = vld [vmem:[%s1 + $0x90] sm:$0xff]
  %v56 = vld [vmem:[%s1 + $0x98] sm:$0xff]
  %v57 = vld [vmem:[%s1 + $0xa0] sm:$0xff]
  %v58 = vld [vmem:[%s1 + $0xa8] sm:$0xff]
  %v59 = vld [vmem:[%s1 + $0xb0] sm:$0xff]
  %v60 = vld [vmem:[%s1 + $0xb8] sm:$0xff]
  %v61 = vld [vmem:[%s1 + $0xc0] sm:$0xff]
  %v62 = vld [vmem:[%s1 + $0xc8] sm:$0xff]
  %v63 = vld [vmem:[%s1 + $0xd0] sm:$0xff]
  %v64 = vld [vmem:[%s1 + $0xd8] sm:$0xff]
  %v65 = vld [vmem:[%s1 + $0xe0] sm:$0xff]
  %v66 = vld [vmem:[%s1 + $0xe8] sm:$0xff]
  %v67 = vld [vmem:[%s1 + $0xf0] sm:$0xff]
  %v68 = vld [vmem:[%s1 + $0xf8] sm:$0xff]
  %v69 = vld [vmem:[%s1 + $0x100] sm:$0xff]
  %v70 = vld [vmem:[%s1 + $0x108] sm:$0xff]
  %v71 = vld [vmem:[%s1 + $0x110] sm:$0xff]
  %v72 = vld [vmem:[%s1 + $0x118] sm:$0xff]
  %v73 = vld [vmem:[%s1 + $0x120] sm:$0xff]
  %v74 = vld [vmem:[%s1 + $0x128] sm:$0xff]
  %v75 = vld [vmem:[%s1 + $0x130] sm:$0xff]
  %v76 = vld [vmem:[%s1 + $0x138] sm:$0xff]
  %v77 = vld [vmem:[%s1 + $0x140] sm:$0xff]
  %v78 = vld [vmem:[%s1 + $0x148] sm:$0xff]
  %v79 = vld [vmem:[%s1 + $0x150] sm:$0xff]
  %v80 = vld [vmem:[%s1 + $0x158] sm:$0xff]
  %v81 = vld [vmem:[%s1 + $0x160] sm:$0xff]
  %v82 = vld [vmem:[%s1 + $0x168] sm:$0xff]
  %v83 = vld [vmem:[%s1 + $0x170] sm:$0xff]
  %v84 = vld [vmem:[%s1 + $0x178] sm:$0xff]
  %v85 = vrot.slane %v21, 7
  %v86 = vrot.slane %v22, 7
  %v87 = vrot.slane %v23, 7
  %v88 = vrot.slane %v24, 7
  %v89 = vrot.slane %v25, 7
  %v90 = vrot.slane %v26, 7
  %v91 = vrot.slane %v27, 7
  %v92 = vrot.slane %v28, 7
  %v93 = vrot.slane %v29, 7
  %v94 = vrot.slane %v30, 7
  %v95 = vrot.slane %v31, 7
  %v96 = vrot.slane %v32, 7
  %v97 = vrot.slane %v33, 7
  %v98 = vrot.slane %v34, 7
  %v99 = vrot.slane %v35, 7
  %v100 = vrot.slane %v36, 7
  %v101 = vlaneseq
  %v102 = vshrl.u32 %v101, 7
  %vm103 = vcmp.lt.s32.totalorder %v102, 1
  %v104 = vsel %vm103, %v99, %v100
  %v105 = vsel %vm103, %v98, %v99
  %v106 = vsel %vm103, %v97, %v98
  %v107 = vsel %vm103, %v96, %v97
  %v108 = vsel %vm103, %v95, %v96
  %v109 = vsel %vm103, %v94, %v95
  %v110 = vsel %vm103, %v93, %v94
  %v111 = vsel %vm103, %v92, %v93
  %v112 = vsel %vm103, %v91, %v92
  %v113 = vsel %vm103, %v90, %v91
  %v114 = vsel %vm103, %v89, %v90
  %v115 = vsel %vm103, %v88, %v89
  %v116 = vsel %vm103, %v87, %v88
  %v117 = vsel %vm103, %v86, %v87
  %v118 = vsel %vm103, %v85, %v86
  %v119 = vsel %vm103, %v100, %v85
  %v120 = vrot.slane %v21, 1
  %v121 = vrot.slane %v22, 1
  %v122 = vrot.slane %v23, 1
  %v123 = vrot.slane %v24, 1
  %v124 = vrot.slane %v25, 1
  %v125 = vrot.slane %v26, 1
  %v126 = vrot.slane %v27, 1
  %v127 = vrot.slane %v28, 1
  %v128 = vrot.slane %v29, 1
  %v129 = vrot.slane %v30, 1
  %v130 = vrot.slane %v31, 1
  %v131 = vrot.slane %v32, 1
  %v132 = vrot.slane %v33, 1
  %v133 = vrot.slane %v34, 1
  %v134 = vrot.slane %v35, 1
  %v135 = vrot.slane %v36, 1
  %vm136 = vcmp.lt.s32.totalorder %v102, 7
  %v137 = vsel %vm136, %v134, %v135
  %v138 = vsel %vm136, %v133, %v134
  %v139 = vsel %vm136, %v132, %v133
  %v140 = vsel %vm136, %v131, %v132
  %v141 = vsel %vm136, %v130, %v131
  %v142 = vsel %vm136, %v129, %v130
  %v143 = vsel %vm136, %v128, %v129
  %v144 = vsel %vm136, %v127, %v128
  %v145 = vsel %vm136, %v126, %v127
  %v146 = vsel %vm136, %v125, %v126
  %v147 = vsel %vm136, %v124, %v125
  %v148 = vsel %vm136, %v123, %v124
  %v149 = vsel %vm136, %v122, %v123
  %v150 = vsel %vm136, %v121, %v122
  %v151 = vsel %vm136, %v120, %v121
  %v152 = vsel %vm136, %v135, %v120
  %169 = vrot.lane.b32.xlu0 %v36, 32
  %v170 = vpop.permute.xlu0 %169
  %171 = vrot.lane.b32.xlu0 %v21, 32
  %v172 = vpop.permute.xlu0 %171
  %173 = vrot.lane.b32.xlu0 %v22, 32
  %v174 = vpop.permute.xlu0 %173
  %175 = vrot.lane.b32.xlu0 %v23, 32
  %v176 = vpop.permute.xlu0 %175
  %177 = vrot.lane.b32.xlu0 %v24, 32
  %v178 = vpop.permute.xlu0 %177
  %179 = vrot.lane.b32.xlu0 %v25, 32
  %v180 = vpop.permute.xlu0 %179
  %181 = vrot.lane.b32.xlu0 %v26, 32
  %v182 = vpop.permute.xlu0 %181
  %183 = vrot.lane.b32.xlu0 %v27, 32
  %v184 = vpop.permute.xlu0 %183
  %185 = vrot.lane.b32.xlu0 %v28, 32
  %v186 = vpop.permute.xlu0 %185
  %187 = vrot.lane.b32.xlu0 %v29, 32
  %v188 = vpop.permute.xlu0 %187
  %189 = vrot.lane.b32.xlu0 %v30, 32
  %v190 = vpop.permute.xlu0 %189
  %191 = vrot.lane.b32.xlu0 %v31, 32
  %v192 = vpop.permute.xlu0 %191
  %193 = vrot.lane.b32.xlu0 %v32, 32
  %v194 = vpop.permute.xlu0 %193
  %195 = vrot.lane.b32.xlu0 %v33, 32
  %v196 = vpop.permute.xlu0 %195
  %197 = vrot.lane.b32.xlu0 %v34, 32
  %v198 = vpop.permute.xlu0 %197
  %199 = vrot.lane.b32.xlu0 %v35, 32
  %v200 = vpop.permute.xlu0 %199
  %233 = vrot.lane.b32.xlu0 %v152, 64
  %v234 = vpop.permute.xlu0 %233
  %235 = vrot.lane.b32.xlu0 %v151, 64
  %v236 = vpop.permute.xlu0 %235
  %237 = vrot.lane.b32.xlu0 %v150, 64
  %v238 = vpop.permute.xlu0 %237
  %239 = vrot.lane.b32.xlu0 %v149, 64
  %v240 = vpop.permute.xlu0 %239
  %241 = vrot.lane.b32.xlu0 %v148, 64
  %v242 = vpop.permute.xlu0 %241
  %243 = vrot.lane.b32.xlu0 %v147, 64
  %v244 = vpop.permute.xlu0 %243
  %245 = vrot.lane.b32.xlu0 %v146, 64
  %v246 = vpop.permute.xlu0 %245
  %247 = vrot.lane.b32.xlu0 %v145, 64
  %v248 = vpop.permute.xlu0 %247
  %249 = vrot.lane.b32.xlu0 %v144, 64
  %v250 = vpop.permute.xlu0 %249
  %251 = vrot.lane.b32.xlu0 %v143, 64
  %v252 = vpop.permute.xlu0 %251
  %253 = vrot.lane.b32.xlu0 %v142, 64
  %v254 = vpop.permute.xlu0 %253
  %255 = vrot.lane.b32.xlu0 %v141, 64
  %v256 = vpop.permute.xlu0 %255
  %257 = vrot.lane.b32.xlu0 %v140, 64
  %v258 = vpop.permute.xlu0 %257
  %259 = vrot.lane.b32.xlu0 %v139, 64
  %v260 = vpop.permute.xlu0 %259
  %261 = vrot.lane.b32.xlu0 %v138, 64
  %v262 = vpop.permute.xlu0 %261
  %263 = vrot.lane.b32.xlu0 %v137, 64
  %v264 = vpop.permute.xlu0 %263
  %297 = vrot.lane.b32.xlu0 %v119, 96
  %v298 = vpop.permute.xlu0 %297
  %299 = vrot.lane.b32.xlu0 %v118, 96
  %v300 = vpop.permute.xlu0 %299
  %301 = vrot.lane.b32.xlu0 %v117, 96
  %v302 = vpop.permute.xlu0 %301
  %303 = vrot.lane.b32.xlu0 %v116, 96
  %v304 = vpop.permute.xlu0 %303
  %305 = vrot.lane.b32.xlu0 %v115, 96
  %v306 = vpop.permute.xlu0 %305
  %307 = vrot.lane.b32.xlu0 %v114, 96
  %v308 = vpop.permute.xlu0 %307
  %309 = vrot.lane.b32.xlu0 %v113, 96
  %v310 = vpop.permute.xlu0 %309
  %311 = vrot.lane.b32.xlu0 %v112, 96
  %v312 = vpop.permute.xlu0 %311
  %313 = vrot.lane.b32.xlu0 %v111, 96
  %v314 = vpop.permute.xlu0 %313
  %315 = vrot.lane.b32.xlu0 %v110, 96
  %v316 = vpop.permute.xlu0 %315
  %317 = vrot.lane.b32.xlu0 %v109, 96
  %v318 = vpop.permute.xlu0 %317
  %319 = vrot.lane.b32.xlu0 %v108, 96
  %v320 = vpop.permute.xlu0 %319
  %321 = vrot.lane.b32.xlu0 %v107, 96
  %v322 = vpop.permute.xlu0 %321
  %323 = vrot.lane.b32.xlu0 %v106, 96
  %v324 = vpop.permute.xlu0 %323
  %325 = vrot.lane.b32.xlu0 %v105, 96
  %v326 = vpop.permute.xlu0 %325
  %327 = vrot.lane.b32.xlu0 %v104, 96
  %v328 = vpop.permute.xlu0 %327
  %345 = vrot.lane.b32.xlu0 %v151, 32
  %v346 = vpop.permute.xlu0 %345
  %347 = vrot.lane.b32.xlu0 %v150, 32
  %v348 = vpop.permute.xlu0 %347
  %349 = vrot.lane.b32.xlu0 %v149, 32
  %v350 = vpop.permute.xlu0 %349
  %351 = vrot.lane.b32.xlu0 %v148, 32
  %v352 = vpop.permute.xlu0 %351
  %353 = vrot.lane.b32.xlu0 %v147, 32
  %v354 = vpop.permute.xlu0 %353
  %355 = vrot.lane.b32.xlu0 %v146, 32
  %v356 = vpop.permute.xlu0 %355
  %357 = vrot.lane.b32.xlu0 %v145, 32
  %v358 = vpop.permute.xlu0 %357
  %359 = vrot.lane.b32.xlu0 %v144, 32
  %v360 = vpop.permute.xlu0 %359
  %361 = vrot.lane.b32.xlu0 %v143, 32
  %v362 = vpop.permute.xlu0 %361
  %363 = vrot.lane.b32.xlu0 %v142, 32
  %v364 = vpop.permute.xlu0 %363
  %365 = vrot.lane.b32.xlu0 %v141, 32
  %v366 = vpop.permute.xlu0 %365
  %367 = vrot.lane.b32.xlu0 %v140, 32
  %v368 = vpop.permute.xlu0 %367
  %369 = vrot.lane.b32.xlu0 %v139, 32
  %v370 = vpop.permute.xlu0 %369
  %371 = vrot.lane.b32.xlu0 %v138, 32
  %v372 = vpop.permute.xlu0 %371
  %373 = vrot.lane.b32.xlu0 %v137, 32
  %v374 = vpop.permute.xlu0 %373
  %375 = vrot.lane.b32.xlu0 %v152, 32
  %v376 = vpop.permute.xlu0 %375
  %393 = vrot.lane.b32.xlu0 %v118, 64
  %v394 = vpop.permute.xlu0 %393
  %395 = vrot.lane.b32.xlu0 %v117, 64
  %v396 = vpop.permute.xlu0 %395
  %397 = vrot.lane.b32.xlu0 %v116, 64
  %v398 = vpop.permute.xlu0 %397
  %399 = vrot.lane.b32.xlu0 %v115, 64
  %v400 = vpop.permute.xlu0 %399
  %401 = vrot.lane.b32.xlu0 %v114, 64
  %v402 = vpop.permute.xlu0 %401
  %403 = vrot.lane.b32.xlu0 %v113, 64
  %v404 = vpop.permute.xlu0 %403
  %405 = vrot.lane.b32.xlu0 %v112, 64
  %v406 = vpop.permute.xlu0 %405
  %407 = vrot.lane.b32.xlu0 %v111, 64
  %v408 = vpop.permute.xlu0 %407
  %409 = vrot.lane.b32.xlu0 %v110, 64
  %v410 = vpop.permute.xlu0 %409
  %411 = vrot.lane.b32.xlu0 %v109, 64
  %v412 = vpop.permute.xlu0 %411
  %413 = vrot.lane.b32.xlu0 %v108, 64
  %v414 = vpop.permute.xlu0 %413
  %415 = vrot.lane.b32.xlu0 %v107, 64
  %v416 = vpop.permute.xlu0 %415
  %417 = vrot.lane.b32.xlu0 %v106, 64
  %v418 = vpop.permute.xlu0 %417
  %419 = vrot.lane.b32.xlu0 %v105, 64
  %v420 = vpop.permute.xlu0 %419
  %421 = vrot.lane.b32.xlu0 %v104, 64
  %v422 = vpop.permute.xlu0 %421
  %423 = vrot.lane.b32.xlu0 %v119, 64
  %v424 = vpop.permute.xlu0 %423
  %441 = vrot.lane.b32.xlu0 %v22, 96
  %v442 = vpop.permute.xlu0 %441
  %443 = vrot.lane.b32.xlu0 %v23, 96
  %v444 = vpop.permute.xlu0 %443
  %445 = vrot.lane.b32.xlu0 %v24, 96
  %v446 = vpop.permute.xlu0 %445
  %447 = vrot.lane.b32.xlu0 %v25, 96
  %v448 = vpop.permute.xlu0 %447
  %449 = vrot.lane.b32.xlu0 %v26, 96
  %v450 = vpop.permute.xlu0 %449
  %451 = vrot.lane.b32.xlu0 %v27, 96
  %v452 = vpop.permute.xlu0 %451
  %453 = vrot.lane.b32.xlu0 %v28, 96
  %v454 = vpop.permute.xlu0 %453
  %455 = vrot.lane.b32.xlu0 %v29, 96
  %v456 = vpop.permute.xlu0 %455
  %457 = vrot.lane.b32.xlu0 %v30, 96
  %v458 = vpop.permute.xlu0 %457
  %459 = vrot.lane.b32.xlu0 %v31, 96
  %v460 = vpop.permute.xlu0 %459
  %461 = vrot.lane.b32.xlu0 %v32, 96
  %v462 = vpop.permute.xlu0 %461
  %463 = vrot.lane.b32.xlu0 %v33, 96
  %v464 = vpop.permute.xlu0 %463
  %465 = vrot.lane.b32.xlu0 %v34, 96
  %v466 = vpop.permute.xlu0 %465
  %467 = vrot.lane.b32.xlu0 %v35, 96
  %v468 = vpop.permute.xlu0 %467
  %469 = vrot.lane.b32.xlu0 %v36, 96
  %v470 = vpop.permute.xlu0 %469
  %471 = vrot.lane.b32.xlu0 %v21, 96
  %v472 = vpop.permute.xlu0 %471
  %vm489 = vcmask 261120
  %v490 = vsel %vm489, %v104, %v170
  %v491 = vsel %vm489, %v119, %v172
  %v492 = vsel %vm489, %v118, %v174
  %v493 = vsel %vm489, %v117, %v176
  %v494 = vsel %vm489, %v116, %v178
  %v495 = vsel %vm489, %v115, %v180
  %v496 = vsel %vm489, %v114, %v182
  %v497 = vsel %vm489, %v113, %v184
  %v498 = vsel %vm489, %v112, %v186
  %v499 = vsel %vm489, %v111, %v188
  %v500 = vsel %vm489, %v110, %v190
  %v501 = vsel %vm489, %v109, %v192
  %v502 = vsel %vm489, %v108, %v194
  %v503 = vsel %vm489, %v107, %v196
  %v504 = vsel %vm489, %v106, %v198
  %v505 = vsel %vm489, %v105, %v200
  %vm506 = vcmask 523264
  %v507 = vsel %vm506, %v490, %v234
  %v508 = vsel %vm506, %v491, %v236
  %v509 = vsel %vm506, %v492, %v238
  %v510 = vsel %vm506, %v493, %v240
  %v511 = vsel %vm506, %v494, %v242
  %v512 = vsel %vm506, %v495, %v244
  %v513 = vsel %vm506, %v496, %v246
  %v514 = vsel %vm506, %v497, %v248
  %v515 = vsel %vm506, %v498, %v250
  %v516 = vsel %vm506, %v499, %v252
  %v517 = vsel %vm506, %v500, %v254
  %v518 = vsel %vm506, %v501, %v256
  %v519 = vsel %vm506, %v502, %v258
  %v520 = vsel %vm506, %v503, %v260
  %v521 = vsel %vm506, %v504, %v262
  %v522 = vsel %vm506, %v505, %v264
  %vm523 = vcmask 785408
  %v524 = vsel %vm523, %v507, %v298
  %v525 = vsel %vm523, %v508, %v300
  %v526 = vsel %vm523, %v509, %v302
  %v527 = vsel %vm523, %v510, %v304
  %v528 = vsel %vm523, %v511, %v306
  %v529 = vsel %vm523, %v512, %v308
  %v530 = vsel %vm523, %v513, %v310
  %v531 = vsel %vm523, %v514, %v312
  %v532 = vsel %vm523, %v515, %v314
  %v533 = vsel %vm523, %v516, %v316
  %v534 = vsel %vm523, %v517, %v318
  %v535 = vsel %vm523, %v518, %v320
  %v536 = vsel %vm523, %v519, %v322
  %v537 = vsel %vm523, %v520, %v324
  %v538 = vsel %vm523, %v521, %v326
  %v539 = vsel %vm523, %v522, %v328
  %v540 = vsel %vm489, %v21, %v346
  %v541 = vsel %vm489, %v22, %v348
  %v542 = vsel %vm489, %v23, %v350
  %v543 = vsel %vm489, %v24, %v352
  %v544 = vsel %vm489, %v25, %v354
  %v545 = vsel %vm489, %v26, %v356
  %v546 = vsel %vm489, %v27, %v358
  %v547 = vsel %vm489, %v28, %v360
  %v548 = vsel %vm489, %v29, %v362
  %v549 = vsel %vm489, %v30, %v364
  %v550 = vsel %vm489, %v31, %v366
  %v551 = vsel %vm489, %v32, %v368
  %v552 = vsel %vm489, %v33, %v370
  %v553 = vsel %vm489, %v34, %v372
  %v554 = vsel %vm489, %v35, %v374
  %v555 = vsel %vm489, %v36, %v376
  %v556 = vsel %vm506, %v540, %v394
  %v557 = vsel %vm506, %v541, %v396
  %v558 = vsel %vm506, %v542, %v398
  %v559 = vsel %vm506, %v543, %v400
  %v560 = vsel %vm506, %v544, %v402
  %v561 = vsel %vm506, %v545, %v404
  %v562 = vsel %vm506, %v546, %v406
  %v563 = vsel %vm506, %v547, %v408
  %v564 = vsel %vm506, %v548, %v410
  %v565 = vsel %vm506, %v549, %v412
  %v566 = vsel %vm506, %v550, %v414
  %v567 = vsel %vm506, %v551, %v416
  %v568 = vsel %vm506, %v552, %v418
  %v569 = vsel %vm506, %v553, %v420
  %v570 = vsel %vm506, %v554, %v422
  %v571 = vsel %vm506, %v555, %v424
  %v572 = vsel %vm523, %v556, %v442
  %v573 = vsel %vm523, %v557, %v444
  %v574 = vsel %vm523, %v558, %v446
  %v575 = vsel %vm523, %v559, %v448
  %v576 = vsel %vm523, %v560, %v450
  %v577 = vsel %vm523, %v561, %v452
  %v578 = vsel %vm523, %v562, %v454
  %v579 = vsel %vm523, %v563, %v456
  %v580 = vsel %vm523, %v564, %v458
  %v581 = vsel %vm523, %v565, %v460
  %v582 = vsel %vm523, %v566, %v462
  %v583 = vsel %vm523, %v567, %v464
  %v584 = vsel %vm523, %v568, %v466
  %v585 = vsel %vm523, %v569, %v468
  %v586 = vsel %vm523, %v570, %v470
  %v587 = vsel %vm523, %v571, %v472
  %v588 = vmul.f32 %v524, %v37
  %v589 = vmul.f32 %v572, %v38
  %v590 = vmul.f32 %v150, %v39
  %v591 = vmul.f32 %v525, %v40
  %v592 = vmul.f32 %v573, %v41
  %v593 = vmul.f32 %v149, %v42
  %v594 = vmul.f32 %v526, %v43
  %v595 = vmul.f32 %v574, %v44
  %v596 = vmul.f32 %v148, %v45
  %v597 = vmul.f32 %v527, %v46
  %v598 = vmul.f32 %v575, %v47
  %v599 = vmul.f32 %v147, %v48
  %v600 = vmul.f32 %v528, %v49
  %v601 = vmul.f32 %v576, %v50
  %v602 = vmul.f32 %v146, %v51
  %v603 = vmul.f32 %v529, %v52
  %v604 = vmul.f32 %v577, %v53
  %v605 = vmul.f32 %v145, %v54
  %v606 = vmul.f32 %v530, %v55
  %v607 = vmul.f32 %v578, %v56
  %v608 = vmul.f32 %v144, %v57
  %v609 = vmul.f32 %v531, %v58
  %v610 = vmul.f32 %v579, %v59
  %v611 = vmul.f32 %v143, %v60
  %v612 = vmul.f32 %v532, %v61
  %v613 = vmul.f32 %v580, %v62
  %v614 = vmul.f32 %v142, %v63
  %v615 = vmul.f32 %v533, %v64
  %v616 = vmul.f32 %v581, %v65
  %v617 = vmul.f32 %v141, %v66
  %v618 = vmul.f32 %v534, %v67
  %v619 = vmul.f32 %v582, %v68
  %v620 = vmul.f32 %v140, %v69
  %v621 = vmul.f32 %v535, %v70
  %v622 = vmul.f32 %v583, %v71
  %v623 = vmul.f32 %v139, %v72
  %v624 = vmul.f32 %v536, %v73
  %v625 = vmul.f32 %v584, %v74
  %v626 = vmul.f32 %v138, %v75
  %v627 = vmul.f32 %v537, %v76
  %v628 = vmul.f32 %v585, %v77
  %v629 = vmul.f32 %v137, %v78
  %v630 = vmul.f32 %v538, %v79
  %v631 = vmul.f32 %v586, %v80
  %v632 = vmul.f32 %v152, %v81
  %v633 = vmul.f32 %v539, %v82
  %v634 = vmul.f32 %v587, %v83
  %v635 = vmul.f32 %v151, %v84
  %v636 = vpack.c.bf16 %v591, %v588
  %v637 = vpack.c.bf16 %v592, %v589
  %v638 = vpack.c.bf16 %v593, %v590
  %v639 = vpack.c.bf16 %v597, %v594
  %v640 = vpack.c.bf16 %v598, %v595
  %v641 = vpack.c.bf16 %v599, %v596
  %v642 = vpack.c.bf16 %v603, %v600
  %v643 = vpack.c.bf16 %v604, %v601
  %v644 = vpack.c.bf16 %v605, %v602
  %v645 = vpack.c.bf16 %v609, %v606
  %v646 = vpack.c.bf16 %v610, %v607
  %v647 = vpack.c.bf16 %v611, %v608
  %v648 = vpack.c.bf16 %v615, %v612
  %v649 = vpack.c.bf16 %v616, %v613
  %v650 = vpack.c.bf16 %v617, %v614
  %v651 = vpack.c.bf16 %v621, %v618
  %v652 = vpack.c.bf16 %v622, %v619
  %v653 = vpack.c.bf16 %v623, %v620
  %v654 = vpack.c.bf16 %v627, %v624
  %v655 = vpack.c.bf16 %v628, %v625
  %v656 = vpack.c.bf16 %v629, %v626
  %v657 = vpack.c.bf16 %v633, %v630
  %v658 = vpack.c.bf16 %v634, %v631
  %v659 = vpack.c.bf16 %v635, %v632
  %v660 = vld [vmem:[%s2] sm:$0xf]
  %v661 = vld [vmem:[%s2 + $0x4] sm:$0xf]
  %v662 = vld [vmem:[%s2 + $0x8] sm:$0xf]
  %v663 = vld [vmem:[%s2 + $0xc] sm:$0xf]
  %v664 = vld [vmem:[%s2 + $0x10] sm:$0xf]
  %v665 = vld [vmem:[%s2 + $0x14] sm:$0xf]
  %v666 = vld [vmem:[%s2 + $0x18] sm:$0xf]
  %v667 = vld [vmem:[%s2 + $0x1c] sm:$0xf]
  %v668 = vld [vmem:[%s2 + $0x20] sm:$0xf]
  %v669 = vld [vmem:[%s2 + $0x24] sm:$0xf]
  %v670 = vld [vmem:[%s2 + $0x28] sm:$0xf]
  %v671 = vld [vmem:[%s2 + $0x2c] sm:$0xf]
  %v672 = vld [vmem:[%s2 + $0x30] sm:$0xf]
  %v673 = vld [vmem:[%s2 + $0x34] sm:$0xf]
  %v674 = vld [vmem:[%s2 + $0x38] sm:$0xf]
  %v675 = vld [vmem:[%s2 + $0x3c] sm:$0xf]
  %v676 = vld [vmem:[%s2 + $0x40] sm:$0xf]
  %v677 = vld [vmem:[%s2 + $0x44] sm:$0xf]
  %v678 = vld [vmem:[%s2 + $0x48] sm:$0xf]
  %v679 = vld [vmem:[%s2 + $0x4c] sm:$0xf]
  %v680 = vld [vmem:[%s2 + $0x50] sm:$0xf]
  %v681 = vld [vmem:[%s2 + $0x54] sm:$0xf]
  %v682 = vld [vmem:[%s2 + $0x58] sm:$0xf]
  %v683 = vld [vmem:[%s2 + $0x5c] sm:$0xf]
  %v684 = vld [vmem:[%s2 + $0x60] sm:$0xf]
  %v685 = vld [vmem:[%s2 + $0x64] sm:$0xf]
  %v686 = vld [vmem:[%s2 + $0x68] sm:$0xf]
  %v687 = vld [vmem:[%s2 + $0x6c] sm:$0xf]
  %v688 = vld [vmem:[%s2 + $0x70] sm:$0xf]
  %v689 = vld [vmem:[%s2 + $0x74] sm:$0xf]
  %v690 = vld [vmem:[%s2 + $0x78] sm:$0xf]
  %v691 = vld [vmem:[%s2 + $0x7c] sm:$0xf]
  %v692 = vld [vmem:[%s2 + $0x80] sm:$0xf]
  %v693 = vld [vmem:[%s2 + $0x84] sm:$0xf]
  %v694 = vld [vmem:[%s2 + $0x88] sm:$0xf]
  %v695 = vld [vmem:[%s2 + $0x8c] sm:$0xf]
  %v732 = vunpack.c.l.b16 %v660
  %v733 = vunpack.c.l.b16 %v661
  %v734 = vunpack.c.l.b16 %v662
  %v735 = vunpack.c.l.b16 %v663
  %v736 = vunpack.c.l.b16 %v664
  %v737 = vunpack.c.l.b16 %v665
  %v738 = vunpack.c.l.b16 %v666
  %v739 = vunpack.c.l.b16 %v667
  %v740 = vunpack.c.l.b16 %v668
  %v741 = vunpack.c.l.b16 %v669
  %v742 = vunpack.c.l.b16 %v670
  %v743 = vunpack.c.l.b16 %v671
  %v744 = vunpack.c.l.b16 %v672
  %v745 = vunpack.c.l.b16 %v673
  %v746 = vunpack.c.l.b16 %v674
  %v747 = vunpack.c.l.b16 %v675
  %v748 = vunpack.c.l.b16 %v676
  %v749 = vunpack.c.l.b16 %v677
  %v750 = vunpack.c.l.b16 %v678
  %v751 = vunpack.c.l.b16 %v679
  %v752 = vunpack.c.l.b16 %v680
  %v753 = vunpack.c.l.b16 %v681
  %v754 = vunpack.c.l.b16 %v682
  %v755 = vunpack.c.l.b16 %v683
  %v756 = vunpack.c.l.b16 %v684
  %v757 = vunpack.c.l.b16 %v685
  %v758 = vunpack.c.l.b16 %v686
  %v759 = vunpack.c.l.b16 %v687
  %v760 = vunpack.c.l.b16 %v688
  %v761 = vunpack.c.l.b16 %v689
  %v762 = vunpack.c.l.b16 %v690
  %v763 = vunpack.c.l.b16 %v691
  %v764 = vunpack.c.l.b16 %v692
  %v765 = vunpack.c.l.b16 %v693
  %v766 = vunpack.c.l.b16 %v694
  %v767 = vunpack.c.l.b16 %v695
  %v768 = vpack.c.b16 %v733, %v732
  %v769 = vpack.c.b16 %v735, %v734
  %v770 = vpack.c.b16 %v737, %v736
  %v771 = vpack.c.b16 %v739, %v738
  %v772 = vpack.c.b16 %v741, %v740
  %v773 = vpack.c.b16 %v743, %v742
  %v774 = vpack.c.b16 %v745, %v744
  %v775 = vpack.c.b16 %v747, %v746
  %v776 = vpack.c.b16 %v749, %v748
  %v777 = vpack.c.b16 %v751, %v750
  %v778 = vpack.c.b16 %v753, %v752
  %v779 = vpack.c.b16 %v755, %v754
  %v780 = vpack.c.b16 %v757, %v756
  %v781 = vpack.c.b16 %v759, %v758
  %v782 = vpack.c.b16 %v761, %v760
  %v783 = vpack.c.b16 %v763, %v762
  %v784 = vpack.c.b16 %v765, %v764
  %v785 = vpack.c.b16 %v767, %v766
  %v805 = vsel %vm489, %v638, 0
  %v808 = vsel %vm489, %v641, 0
  %v811 = vsel %vm489, %v644, 0
  %v814 = vsel %vm489, %v647, 0
  %v817 = vsel %vm489, %v650, 0
  %v820 = vsel %vm489, %v653, 0
  %v823 = vsel %vm489, %v656, 0
  %v826 = vsel %vm489, %v659, 0
  %828 = vmatprep.subr.bf16.mxu0 0
  %829 = vmatpush1.bf16.msra.mxu0 %v768
  %830 = vmatprep.subr.bf16.mxu0 0
  %831 = vmatpush1.bf16.msra.mxu0 %v769
  %832 = vmatprep.subr.bf16.mxu0 0
  %833 = vmatpush1.bf16.msra.mxu0 %v770
  %834 = vmatprep.subr.bf16.mxu0 0
  %835 = vmatpush1.bf16.msra.mxu0 %v771
  %836 = vmatprep.subr.bf16.mxu0 0
  %837 = vmatpush1.bf16.msra.mxu0 %v772
  %838 = vmatprep.subr.bf16.mxu0 0
  %839 = vmatpush1.bf16.msra.mxu0 %v773
  %840 = vmatprep.subr.bf16.mxu0 0
  %841 = vmatpush1.bf16.msra.mxu0 %v774
  %842 = vmatprep.subr.bf16.mxu0 0
  %843 = vmatpush1.bf16.msra.mxu0 %v775
  %844 = vmatprep.subr.bf16.mxu0 0
  %845 = vmatpush1.bf16.msra.mxu0 %v776
  %846 = vmatprep.subr.bf16.mxu0 0
  %847 = vmatpush1.bf16.msra.mxu0 %v777
  %848 = vmatprep.subr.bf16.mxu0 0
  %849 = vmatpush1.bf16.msra.mxu0 %v778
  %850 = vmatprep.subr.bf16.mxu0 0
  %851 = vmatpush1.bf16.msra.mxu0 %v779
  %852 = vmatprep.subr.bf16.mxu0 0
  %853 = vmatpush1.bf16.msra.mxu0 %v780
  %854 = vmatprep.subr.bf16.mxu0 0
  %855 = vmatpush1.bf16.msra.mxu0 %v781
  %856 = vmatprep.subr.bf16.mxu0 0
  %857 = vmatpush1.bf16.msra.mxu0 %v782
  %858 = vmatprep.subr.bf16.mxu0 0
  %859 = vmatpush1.bf16.msra.mxu0 %v783
  %860 = vmatprep.mubr.bf16.mxu0 %v637
  %861 = vmatmul.mubr.bf16.gmra.mrb[0].mxu0 %v636
  %v862 = vpop.f32.mrb[0].mxu0
  %v863 = vadd.f32 0.0, %v862
  %v864 = vpop.f32.mrb[0].mxu0
  %v865 = vpop.f32.mrb[0].mxu0
  %v866 = vadd.f32 0.0, %v865
  %v867 = vpop.f32.mrb[0].mxu0
  %868 = vmatprep.mubr.bf16.mxu0 %v640
  %869 = vmatmul.mubr.bf16.gmra.mrb[0].mxu0 %v639
  %v870 = vpop.f32.mrb[0].mxu0
  %v871 = vadd.f32 0.0, %v870
  %v872 = vpop.f32.mrb[0].mxu0
  %v873 = vpop.f32.mrb[0].mxu0
  %v874 = vadd.f32 0.0, %v873
  %v875 = vpop.f32.mrb[0].mxu0
  %876 = vmatprep.mubr.bf16.mxu0 %v643
  %877 = vmatmul.mubr.bf16.gmra.mrb[0].mxu0 %v642
  %v878 = vpop.f32.mrb[0].mxu0
  %v879 = vadd.f32 0.0, %v878
  %v880 = vpop.f32.mrb[0].mxu0
  %v881 = vpop.f32.mrb[0].mxu0
  %v882 = vadd.f32 0.0, %v881
  %v883 = vpop.f32.mrb[0].mxu0
  %884 = vmatprep.mubr.bf16.mxu0 %v646
  %885 = vmatmul.mubr.bf16.gmra.mrb[0].mxu0 %v645
  %v886 = vpop.f32.mrb[0].mxu0
  %v887 = vadd.f32 0.0, %v886
  %v888 = vpop.f32.mrb[0].mxu0
  %v889 = vpop.f32.mrb[0].mxu0
  %v890 = vadd.f32 0.0, %v889
  %v891 = vpop.f32.mrb[0].mxu0
  %892 = vmatprep.mubr.bf16.mxu0 %v649
  %893 = vmatmul.mubr.bf16.gmra.mrb[0].mxu0 %v648
  %v894 = vpop.f32.mrb[0].mxu0
  %v895 = vadd.f32 0.0, %v894
  %v896 = vpop.f32.mrb[0].mxu0
  %v897 = vpop.f32.mrb[0].mxu0
  %v898 = vadd.f32 0.0, %v897
  %v899 = vpop.f32.mrb[0].mxu0
  %900 = vmatprep.mubr.bf16.mxu0 %v652
  %901 = vmatmul.mubr.bf16.gmra.mrb[0].mxu0 %v651
  %v902 = vpop.f32.mrb[0].mxu0
  %v903 = vadd.f32 0.0, %v902
  %v904 = vpop.f32.mrb[0].mxu0
  %v905 = vpop.f32.mrb[0].mxu0
  %v906 = vadd.f32 0.0, %v905
  %v907 = vpop.f32.mrb[0].mxu0
  %908 = vmatprep.mubr.bf16.mxu0 %v655
  %909 = vmatmul.mubr.bf16.gmra.mrb[0].mxu0 %v654
  %v910 = vpop.f32.mrb[0].mxu0
  %v911 = vadd.f32 0.0, %v910
  %v912 = vpop.f32.mrb[0].mxu0
  %v913 = vpop.f32.mrb[0].mxu0
  %v914 = vadd.f32 0.0, %v913
  %v915 = vpop.f32.mrb[0].mxu0
  %916 = vmatprep.mubr.bf16.mxu0 %v658
  %917 = vmatmul.mubr.bf16.gmra.mrb[0].mxu0 %v657
  %v918 = vpop.f32.mrb[0].mxu0
  %v919 = vadd.f32 0.0, %v918
  %v920 = vpop.f32.mrb[0].mxu0
  %v921 = vpop.f32.mrb[0].mxu0
  %v922 = vadd.f32 0.0, %v921
  %v923 = vpop.f32.mrb[0].mxu0
  %924 = vdwg.mxu0
  %925 = vmatprep.subr.bf16.mxu0 0
  %926 = vmatpush1.bf16.msra.mxu0 %v784
  %927 = vmatprep.subr.bf16.mxu0 0
  %928 = vmatpush1.bf16.msra.mxu0 %v785
  %929 = vmatprep.subr.bf16.mxu0 0
  %930 = vmatpush1.bf16.msra.mxu0 0
  %931 = vmatprep.subr.bf16.mxu0 0
  %932 = vmatpush1.bf16.msra.mxu0 0
  %933 = vmatprep.subr.bf16.mxu0 0
  %934 = vmatpush1.bf16.msra.mxu0 0
  %935 = vmatprep.subr.bf16.mxu0 0
  %936 = vmatpush1.bf16.msra.mxu0 0
  %937 = vmatprep.subr.bf16.mxu0 0
  %938 = vmatpush1.bf16.msra.mxu0 0
  %939 = vmatprep.subr.bf16.mxu0 0
  %940 = vmatpush1.bf16.msra.mxu0 0
  %941 = vmatprep.subr.bf16.mxu0 0
  %942 = vmatpush1.bf16.msra.mxu0 0
  %943 = vmatprep.subr.bf16.mxu0 0
  %944 = vmatpush1.bf16.msra.mxu0 0
  %945 = vmatprep.subr.bf16.mxu0 0
  %946 = vmatpush1.bf16.msra.mxu0 0
  %947 = vmatprep.subr.bf16.mxu0 0
  %948 = vmatpush1.bf16.msra.mxu0 0
  %949 = vmatprep.subr.bf16.mxu0 0
  %950 = vmatpush1.bf16.msra.mxu0 0
  %951 = vmatprep.subr.bf16.mxu0 0
  %952 = vmatpush1.bf16.msra.mxu0 0
  %953 = vmatprep.subr.bf16.mxu0 0
  %954 = vmatpush1.bf16.msra.mxu0 0
  %955 = vmatprep.subr.bf16.mxu0 0
  %956 = vmatpush1.bf16.msra.mxu0 0
  %957 = vmatprep.mubr.bf16.mxu0 0
  %958 = vmatmul.mubr.bf16.gmra.mrb[0].mxu0 %v805
  %v959 = vpop.f32.mrb[0].mxu0
  %v960 = vadd.f32 %v863, %v959
  %v961 = vpop.f32.mrb[0].mxu0
  %v962 = vpop.f32.mrb[0].mxu0
  %v963 = vadd.f32 %v866, %v962
  %v964 = vpop.f32.mrb[0].mxu0
  %965 = vmatprep.mubr.bf16.mxu0 0
  %966 = vmatmul.mubr.bf16.gmra.mrb[0].mxu0 %v808
  %v967 = vpop.f32.mrb[0].mxu0
  %v968 = vadd.f32 %v871, %v967
  %v969 = vpop.f32.mrb[0].mxu0
  %v970 = vpop.f32.mrb[0].mxu0
  %v971 = vadd.f32 %v874, %v970
  %v972 = vpop.f32.mrb[0].mxu0
  %973 = vmatprep.mubr.bf16.mxu0 0
  %974 = vmatmul.mubr.bf16.gmra.mrb[0].mxu0 %v811
  %v975 = vpop.f32.mrb[0].mxu0
  %v976 = vadd.f32 %v879, %v975
  %v977 = vpop.f32.mrb[0].mxu0
  %v978 = vpop.f32.mrb[0].mxu0
  %v979 = vadd.f32 %v882, %v978
  %v980 = vpop.f32.mrb[0].mxu0
  %981 = vmatprep.mubr.bf16.mxu0 0
  %982 = vmatmul.mubr.bf16.gmra.mrb[0].mxu0 %v814
  %v983 = vpop.f32.mrb[0].mxu0
  %v984 = vadd.f32 %v887, %v983
  %v985 = vpop.f32.mrb[0].mxu0
  %v986 = vpop.f32.mrb[0].mxu0
  %v987 = vadd.f32 %v890, %v986
  %v988 = vpop.f32.mrb[0].mxu0
  %989 = vmatprep.mubr.bf16.mxu0 0
  %990 = vmatmul.mubr.bf16.gmra.mrb[0].mxu0 %v817
  %v991 = vpop.f32.mrb[0].mxu0
  %v992 = vadd.f32 %v895, %v991
  %v993 = vpop.f32.mrb[0].mxu0
  %v994 = vpop.f32.mrb[0].mxu0
  %v995 = vadd.f32 %v898, %v994
  %v996 = vpop.f32.mrb[0].mxu0
  %997 = vmatprep.mubr.bf16.mxu0 0
  %998 = vmatmul.mubr.bf16.gmra.mrb[0].mxu0 %v820
  %v999 = vpop.f32.mrb[0].mxu0
  %v1000 = vadd.f32 %v903, %v999
  %v1001 = vpop.f32.mrb[0].mxu0
  %v1002 = vpop.f32.mrb[0].mxu0
  %v1003 = vadd.f32 %v906, %v1002
  %v1004 = vpop.f32.mrb[0].mxu0
  %1005 = vmatprep.mubr.bf16.mxu0 0
  %1006 = vmatmul.mubr.bf16.gmra.mrb[0].mxu0 %v823
  %v1007 = vpop.f32.mrb[0].mxu0
  %v1008 = vadd.f32 %v911, %v1007
  %v1009 = vpop.f32.mrb[0].mxu0
  %v1010 = vpop.f32.mrb[0].mxu0
  %v1011 = vadd.f32 %v914, %v1010
  %v1012 = vpop.f32.mrb[0].mxu0
  %1013 = vmatprep.mubr.bf16.mxu0 0
  %1014 = vmatmul.mubr.bf16.gmra.mrb[0].mxu0 %v826
  %v1015 = vpop.f32.mrb[0].mxu0
  %v1016 = vadd.f32 %v919, %v1015
  %v1017 = vpop.f32.mrb[0].mxu0
  %v1018 = vpop.f32.mrb[0].mxu0
  %v1019 = vadd.f32 %v922, %v1018
  %v1020 = vpop.f32.mrb[0].mxu0
  %1021 = vdwg.mxu0
  %v1022 = vld [vmem:[%s3] sm:$0x1]
  %v1024 = vlaneseq
  %v1025 = vshrl.u32 %v1024, 7
  %v1026 = vsub.s32 0, %v1025
  %v1027 = vrot.slane %v1022, %v1026
  %v1029 = vmul.f32 %v960, %v1027
  %v1030 = vmul.f32 %v963, %v1027
  %v1031 = vmul.f32 %v968, %v1027
  %v1032 = vmul.f32 %v971, %v1027
  %v1033 = vmul.f32 %v976, %v1027
  %v1034 = vmul.f32 %v979, %v1027
  %v1035 = vmul.f32 %v984, %v1027
  %v1036 = vmul.f32 %v987, %v1027
  %v1037 = vmul.f32 %v992, %v1027
  %v1038 = vmul.f32 %v995, %v1027
  %v1039 = vmul.f32 %v1000, %v1027
  %v1040 = vmul.f32 %v1003, %v1027
  %v1041 = vmul.f32 %v1008, %v1027
  %v1042 = vmul.f32 %v1011, %v1027
  %v1043 = vmul.f32 %v1016, %v1027
  %v1044 = vmul.f32 %v1019, %v1027
  %v1045 = vld [vmem:[%s4] sm:$0x1]
  %v1047 = vlaneseq
  %v1048 = vshrl.u32 %v1047, 7
  %v1049 = vsub.s32 0, %v1048
  %v1050 = vrot.slane %v1045, %v1049
  %v1052 = vadd.f32 %v1029, %v1050
  %v1053 = vadd.f32 %v1030, %v1050
  %v1054 = vadd.f32 %v1031, %v1050
  %v1055 = vadd.f32 %v1032, %v1050
  %v1056 = vadd.f32 %v1033, %v1050
  %v1057 = vadd.f32 %v1034, %v1050
  %v1058 = vadd.f32 %v1035, %v1050
  %v1059 = vadd.f32 %v1036, %v1050
  %v1060 = vadd.f32 %v1037, %v1050
  %v1061 = vadd.f32 %v1038, %v1050
  %v1062 = vadd.f32 %v1039, %v1050
  %v1063 = vadd.f32 %v1040, %v1050
  %v1064 = vadd.f32 %v1041, %v1050
  %v1065 = vadd.f32 %v1042, %v1050
  %v1066 = vadd.f32 %v1043, %v1050
  %v1067 = vadd.f32 %v1044, %v1050
  %vm1068 = vcmp.ge.f32.partialorder %v1052, 0.0
  %vm1069 = vcmp.ge.f32.partialorder %v1053, 0.0
  %vm1070 = vcmp.ge.f32.partialorder %v1054, 0.0
  %vm1071 = vcmp.ge.f32.partialorder %v1055, 0.0
  %vm1072 = vcmp.ge.f32.partialorder %v1056, 0.0
  %vm1073 = vcmp.ge.f32.partialorder %v1057, 0.0
  %vm1074 = vcmp.ge.f32.partialorder %v1058, 0.0
  %vm1075 = vcmp.ge.f32.partialorder %v1059, 0.0
  %vm1076 = vcmp.ge.f32.partialorder %v1060, 0.0
  %vm1077 = vcmp.ge.f32.partialorder %v1061, 0.0
  %vm1078 = vcmp.ge.f32.partialorder %v1062, 0.0
  %vm1079 = vcmp.ge.f32.partialorder %v1063, 0.0
  %vm1080 = vcmp.ge.f32.partialorder %v1064, 0.0
  %vm1081 = vcmp.ge.f32.partialorder %v1065, 0.0
  %vm1082 = vcmp.ge.f32.partialorder %v1066, 0.0
  %vm1083 = vcmp.ge.f32.partialorder %v1067, 0.0
  %v1084 = vmul.f32 %v1052, 0.2
  %v1085 = vmul.f32 %v1053, 0.2
  %v1086 = vmul.f32 %v1054, 0.2
  %v1087 = vmul.f32 %v1055, 0.2
  %v1088 = vmul.f32 %v1056, 0.2
  %v1089 = vmul.f32 %v1057, 0.2
  %v1090 = vmul.f32 %v1058, 0.2
  %v1091 = vmul.f32 %v1059, 0.2
  %v1092 = vmul.f32 %v1060, 0.2
  %v1093 = vmul.f32 %v1061, 0.2
  %v1094 = vmul.f32 %v1062, 0.2
  %v1095 = vmul.f32 %v1063, 0.2
  %v1096 = vmul.f32 %v1064, 0.2
  %v1097 = vmul.f32 %v1065, 0.2
  %v1098 = vmul.f32 %v1066, 0.2
  %v1099 = vmul.f32 %v1067, 0.2
  %v1100 = vsel %vm1068, %v1052, %v1084
  %v1101 = vsel %vm1069, %v1053, %v1085
  %v1102 = vsel %vm1070, %v1054, %v1086
  %v1103 = vsel %vm1071, %v1055, %v1087
  %v1104 = vsel %vm1072, %v1056, %v1088
  %v1105 = vsel %vm1073, %v1057, %v1089
  %v1106 = vsel %vm1074, %v1058, %v1090
  %v1107 = vsel %vm1075, %v1059, %v1091
  %v1108 = vsel %vm1076, %v1060, %v1092
  %v1109 = vsel %vm1077, %v1061, %v1093
  %v1110 = vsel %vm1078, %v1062, %v1094
  %v1111 = vsel %vm1079, %v1063, %v1095
  %v1112 = vsel %vm1080, %v1064, %v1096
  %v1113 = vsel %vm1081, %v1065, %v1097
  %v1114 = vsel %vm1082, %v1066, %v1098
  %v1115 = vsel %vm1083, %v1067, %v1099
  %v1116 = vrot.slane %v1100, 7
  %v1117 = vrot.slane %v1101, 7
  %v1118 = vrot.slane %v1102, 7
  %v1119 = vrot.slane %v1103, 7
  %v1120 = vrot.slane %v1104, 7
  %v1121 = vrot.slane %v1105, 7
  %v1122 = vrot.slane %v1106, 7
  %v1123 = vrot.slane %v1107, 7
  %v1124 = vrot.slane %v1108, 7
  %v1125 = vrot.slane %v1109, 7
  %v1126 = vrot.slane %v1110, 7
  %v1127 = vrot.slane %v1111, 7
  %v1128 = vrot.slane %v1112, 7
  %v1129 = vrot.slane %v1113, 7
  %v1130 = vrot.slane %v1114, 7
  %v1131 = vrot.slane %v1115, 7
  %v1132 = vsel %vm103, %v1130, %v1131
  %v1133 = vsel %vm103, %v1129, %v1130
  %v1134 = vsel %vm103, %v1128, %v1129
  %v1135 = vsel %vm103, %v1127, %v1128
  %v1136 = vsel %vm103, %v1126, %v1127
  %v1137 = vsel %vm103, %v1125, %v1126
  %v1138 = vsel %vm103, %v1124, %v1125
  %v1139 = vsel %vm103, %v1123, %v1124
  %v1140 = vsel %vm103, %v1122, %v1123
  %v1141 = vsel %vm103, %v1121, %v1122
  %v1142 = vsel %vm103, %v1120, %v1121
  %v1143 = vsel %vm103, %v1119, %v1120
  %v1144 = vsel %vm103, %v1118, %v1119
  %v1145 = vsel %vm103, %v1117, %v1118
  %v1146 = vsel %vm103, %v1116, %v1117
  %v1147 = vsel %vm103, %v1131, %v1116
  %v1148 = vrot.slane %v1100, 1
  %v1149 = vrot.slane %v1101, 1
  %v1150 = vrot.slane %v1102, 1
  %v1151 = vrot.slane %v1103, 1
  %v1152 = vrot.slane %v1104, 1
  %v1153 = vrot.slane %v1105, 1
  %v1154 = vrot.slane %v1106, 1
  %v1155 = vrot.slane %v1107, 1
  %v1156 = vrot.slane %v1108, 1
  %v1157 = vrot.slane %v1109, 1
  %v1158 = vrot.slane %v1110, 1
  %v1159 = vrot.slane %v1111, 1
  %v1160 = vrot.slane %v1112, 1
  %v1161 = vrot.slane %v1113, 1
  %v1162 = vrot.slane %v1114, 1
  %v1163 = vrot.slane %v1115, 1
  %v1164 = vsel %vm136, %v1162, %v1163
  %v1165 = vsel %vm136, %v1161, %v1162
  %v1166 = vsel %vm136, %v1160, %v1161
  %v1167 = vsel %vm136, %v1159, %v1160
  %v1168 = vsel %vm136, %v1158, %v1159
  %v1169 = vsel %vm136, %v1157, %v1158
  %v1170 = vsel %vm136, %v1156, %v1157
  %v1171 = vsel %vm136, %v1155, %v1156
  %v1172 = vsel %vm136, %v1154, %v1155
  %v1173 = vsel %vm136, %v1153, %v1154
  %v1174 = vsel %vm136, %v1152, %v1153
  %v1175 = vsel %vm136, %v1151, %v1152
  %v1176 = vsel %vm136, %v1150, %v1151
  %v1177 = vsel %vm136, %v1149, %v1150
  %v1178 = vsel %vm136, %v1148, %v1149
  %v1179 = vsel %vm136, %v1163, %v1148
  %1196 = vrot.lane.b32.xlu0 %v1115, 32
  %v1197 = vpop.permute.xlu0 %1196
  %1198 = vrot.lane.b32.xlu0 %v1100, 32
  %v1199 = vpop.permute.xlu0 %1198
  %1200 = vrot.lane.b32.xlu0 %v1101, 32
  %v1201 = vpop.permute.xlu0 %1200
  %1202 = vrot.lane.b32.xlu0 %v1102, 32
  %v1203 = vpop.permute.xlu0 %1202
  %1204 = vrot.lane.b32.xlu0 %v1103, 32
  %v1205 = vpop.permute.xlu0 %1204
  %1206 = vrot.lane.b32.xlu0 %v1104, 32
  %v1207 = vpop.permute.xlu0 %1206
  %1208 = vrot.lane.b32.xlu0 %v1105, 32
  %v1209 = vpop.permute.xlu0 %1208
  %1210 = vrot.lane.b32.xlu0 %v1106, 32
  %v1211 = vpop.permute.xlu0 %1210
  %1212 = vrot.lane.b32.xlu0 %v1107, 32
  %v1213 = vpop.permute.xlu0 %1212
  %1214 = vrot.lane.b32.xlu0 %v1108, 32
  %v1215 = vpop.permute.xlu0 %1214
  %1216 = vrot.lane.b32.xlu0 %v1109, 32
  %v1217 = vpop.permute.xlu0 %1216
  %1218 = vrot.lane.b32.xlu0 %v1110, 32
  %v1219 = vpop.permute.xlu0 %1218
  %1220 = vrot.lane.b32.xlu0 %v1111, 32
  %v1221 = vpop.permute.xlu0 %1220
  %1222 = vrot.lane.b32.xlu0 %v1112, 32
  %v1223 = vpop.permute.xlu0 %1222
  %1224 = vrot.lane.b32.xlu0 %v1113, 32
  %v1225 = vpop.permute.xlu0 %1224
  %1226 = vrot.lane.b32.xlu0 %v1114, 32
  %v1227 = vpop.permute.xlu0 %1226
  %1260 = vrot.lane.b32.xlu0 %v1179, 64
  %v1261 = vpop.permute.xlu0 %1260
  %1262 = vrot.lane.b32.xlu0 %v1178, 64
  %v1263 = vpop.permute.xlu0 %1262
  %1264 = vrot.lane.b32.xlu0 %v1177, 64
  %v1265 = vpop.permute.xlu0 %1264
  %1266 = vrot.lane.b32.xlu0 %v1176, 64
  %v1267 = vpop.permute.xlu0 %1266
  %1268 = vrot.lane.b32.xlu0 %v1175, 64
  %v1269 = vpop.permute.xlu0 %1268
  %1270 = vrot.lane.b32.xlu0 %v1174, 64
  %v1271 = vpop.permute.xlu0 %1270
  %1272 = vrot.lane.b32.xlu0 %v1173, 64
  %v1273 = vpop.permute.xlu0 %1272
  %1274 = vrot.lane.b32.xlu0 %v1172, 64
  %v1275 = vpop.permute.xlu0 %1274
  %1276 = vrot.lane.b32.xlu0 %v1171, 64
  %v1277 = vpop.permute.xlu0 %1276
  %1278 = vrot.lane.b32.xlu0 %v1170, 64
  %v1279 = vpop.permute.xlu0 %1278
  %1280 = vrot.lane.b32.xlu0 %v1169, 64
  %v1281 = vpop.permute.xlu0 %1280
  %1282 = vrot.lane.b32.xlu0 %v1168, 64
  %v1283 = vpop.permute.xlu0 %1282
  %1284 = vrot.lane.b32.xlu0 %v1167, 64
  %v1285 = vpop.permute.xlu0 %1284
  %1286 = vrot.lane.b32.xlu0 %v1166, 64
  %v1287 = vpop.permute.xlu0 %1286
  %1288 = vrot.lane.b32.xlu0 %v1165, 64
  %v1289 = vpop.permute.xlu0 %1288
  %1290 = vrot.lane.b32.xlu0 %v1164, 64
  %v1291 = vpop.permute.xlu0 %1290
  %1324 = vrot.lane.b32.xlu0 %v1147, 96
  %v1325 = vpop.permute.xlu0 %1324
  %1326 = vrot.lane.b32.xlu0 %v1146, 96
  %v1327 = vpop.permute.xlu0 %1326
  %1328 = vrot.lane.b32.xlu0 %v1145, 96
  %v1329 = vpop.permute.xlu0 %1328
  %1330 = vrot.lane.b32.xlu0 %v1144, 96
  %v1331 = vpop.permute.xlu0 %1330
  %1332 = vrot.lane.b32.xlu0 %v1143, 96
  %v1333 = vpop.permute.xlu0 %1332
  %1334 = vrot.lane.b32.xlu0 %v1142, 96
  %v1335 = vpop.permute.xlu0 %1334
  %1336 = vrot.lane.b32.xlu0 %v1141, 96
  %v1337 = vpop.permute.xlu0 %1336
  %1338 = vrot.lane.b32.xlu0 %v1140, 96
  %v1339 = vpop.permute.xlu0 %1338
  %1340 = vrot.lane.b32.xlu0 %v1139, 96
  %v1341 = vpop.permute.xlu0 %1340
  %1342 = vrot.lane.b32.xlu0 %v1138, 96
  %v1343 = vpop.permute.xlu0 %1342
  %1344 = vrot.lane.b32.xlu0 %v1137, 96
  %v1345 = vpop.permute.xlu0 %1344
  %1346 = vrot.lane.b32.xlu0 %v1136, 96
  %v1347 = vpop.permute.xlu0 %1346
  %1348 = vrot.lane.b32.xlu0 %v1135, 96
  %v1349 = vpop.permute.xlu0 %1348
  %1350 = vrot.lane.b32.xlu0 %v1134, 96
  %v1351 = vpop.permute.xlu0 %1350
  %1352 = vrot.lane.b32.xlu0 %v1133, 96
  %v1353 = vpop.permute.xlu0 %1352
  %1354 = vrot.lane.b32.xlu0 %v1132, 96
  %v1355 = vpop.permute.xlu0 %1354
  %1372 = vrot.lane.b32.xlu0 %v1178, 32
  %v1373 = vpop.permute.xlu0 %1372
  %1374 = vrot.lane.b32.xlu0 %v1177, 32
  %v1375 = vpop.permute.xlu0 %1374
  %1376 = vrot.lane.b32.xlu0 %v1176, 32
  %v1377 = vpop.permute.xlu0 %1376
  %1378 = vrot.lane.b32.xlu0 %v1175, 32
  %v1379 = vpop.permute.xlu0 %1378
  %1380 = vrot.lane.b32.xlu0 %v1174, 32
  %v1381 = vpop.permute.xlu0 %1380
  %1382 = vrot.lane.b32.xlu0 %v1173, 32
  %v1383 = vpop.permute.xlu0 %1382
  %1384 = vrot.lane.b32.xlu0 %v1172, 32
  %v1385 = vpop.permute.xlu0 %1384
  %1386 = vrot.lane.b32.xlu0 %v1171, 32
  %v1387 = vpop.permute.xlu0 %1386
  %1388 = vrot.lane.b32.xlu0 %v1170, 32
  %v1389 = vpop.permute.xlu0 %1388
  %1390 = vrot.lane.b32.xlu0 %v1169, 32
  %v1391 = vpop.permute.xlu0 %1390
  %1392 = vrot.lane.b32.xlu0 %v1168, 32
  %v1393 = vpop.permute.xlu0 %1392
  %1394 = vrot.lane.b32.xlu0 %v1167, 32
  %v1395 = vpop.permute.xlu0 %1394
  %1396 = vrot.lane.b32.xlu0 %v1166, 32
  %v1397 = vpop.permute.xlu0 %1396
  %1398 = vrot.lane.b32.xlu0 %v1165, 32
  %v1399 = vpop.permute.xlu0 %1398
  %1400 = vrot.lane.b32.xlu0 %v1164, 32
  %v1401 = vpop.permute.xlu0 %1400
  %1402 = vrot.lane.b32.xlu0 %v1179, 32
  %v1403 = vpop.permute.xlu0 %1402
  %1420 = vrot.lane.b32.xlu0 %v1146, 64
  %v1421 = vpop.permute.xlu0 %1420
  %1422 = vrot.lane.b32.xlu0 %v1145, 64
  %v1423 = vpop.permute.xlu0 %1422
  %1424 = vrot.lane.b32.xlu0 %v1144, 64
  %v1425 = vpop.permute.xlu0 %1424
  %1426 = vrot.lane.b32.xlu0 %v1143, 64
  %v1427 = vpop.permute.xlu0 %1426
  %1428 = vrot.lane.b32.xlu0 %v1142, 64
  %v1429 = vpop.permute.xlu0 %1428
  %1430 = vrot.lane.b32.xlu0 %v1141, 64
  %v1431 = vpop.permute.xlu0 %1430
  %1432 = vrot.lane.b32.xlu0 %v1140, 64
  %v1433 = vpop.permute.xlu0 %1432
  %1434 = vrot.lane.b32.xlu0 %v1139, 64
  %v1435 = vpop.permute.xlu0 %1434
  %1436 = vrot.lane.b32.xlu0 %v1138, 64
  %v1437 = vpop.permute.xlu0 %1436
  %1438 = vrot.lane.b32.xlu0 %v1137, 64
  %v1439 = vpop.permute.xlu0 %1438
  %1440 = vrot.lane.b32.xlu0 %v1136, 64
  %v1441 = vpop.permute.xlu0 %1440
  %1442 = vrot.lane.b32.xlu0 %v1135, 64
  %v1443 = vpop.permute.xlu0 %1442
  %1444 = vrot.lane.b32.xlu0 %v1134, 64
  %v1445 = vpop.permute.xlu0 %1444
  %1446 = vrot.lane.b32.xlu0 %v1133, 64
  %v1447 = vpop.permute.xlu0 %1446
  %1448 = vrot.lane.b32.xlu0 %v1132, 64
  %v1449 = vpop.permute.xlu0 %1448
  %1450 = vrot.lane.b32.xlu0 %v1147, 64
  %v1451 = vpop.permute.xlu0 %1450
  %1468 = vrot.lane.b32.xlu0 %v1101, 96
  %v1469 = vpop.permute.xlu0 %1468
  %1470 = vrot.lane.b32.xlu0 %v1102, 96
  %v1471 = vpop.permute.xlu0 %1470
  %1472 = vrot.lane.b32.xlu0 %v1103, 96
  %v1473 = vpop.permute.xlu0 %1472
  %1474 = vrot.lane.b32.xlu0 %v1104, 96
  %v1475 = vpop.permute.xlu0 %1474
  %1476 = vrot.lane.b32.xlu0 %v1105, 96
  %v1477 = vpop.permute.xlu0 %1476
  %1478 = vrot.lane.b32.xlu0 %v1106, 96
  %v1479 = vpop.permute.xlu0 %1478
  %1480 = vrot.lane.b32.xlu0 %v1107, 96
  %v1481 = vpop.permute.xlu0 %1480
  %1482 = vrot.lane.b32.xlu0 %v1108, 96
  %v1483 = vpop.permute.xlu0 %1482
  %1484 = vrot.lane.b32.xlu0 %v1109, 96
  %v1485 = vpop.permute.xlu0 %1484
  %1486 = vrot.lane.b32.xlu0 %v1110, 96
  %v1487 = vpop.permute.xlu0 %1486
  %1488 = vrot.lane.b32.xlu0 %v1111, 96
  %v1489 = vpop.permute.xlu0 %1488
  %1490 = vrot.lane.b32.xlu0 %v1112, 96
  %v1491 = vpop.permute.xlu0 %1490
  %1492 = vrot.lane.b32.xlu0 %v1113, 96
  %v1493 = vpop.permute.xlu0 %1492
  %1494 = vrot.lane.b32.xlu0 %v1114, 96
  %v1495 = vpop.permute.xlu0 %1494
  %1496 = vrot.lane.b32.xlu0 %v1115, 96
  %v1497 = vpop.permute.xlu0 %1496
  %1498 = vrot.lane.b32.xlu0 %v1100, 96
  %v1499 = vpop.permute.xlu0 %1498
  %v1516 = vsel %vm489, %v1132, %v1197
  %v1517 = vsel %vm489, %v1147, %v1199
  %v1518 = vsel %vm489, %v1146, %v1201
  %v1519 = vsel %vm489, %v1145, %v1203
  %v1520 = vsel %vm489, %v1144, %v1205
  %v1521 = vsel %vm489, %v1143, %v1207
  %v1522 = vsel %vm489, %v1142, %v1209
  %v1523 = vsel %vm489, %v1141, %v1211
  %v1524 = vsel %vm489, %v1140, %v1213
  %v1525 = vsel %vm489, %v1139, %v1215
  %v1526 = vsel %vm489, %v1138, %v1217
  %v1527 = vsel %vm489, %v1137, %v1219
  %v1528 = vsel %vm489, %v1136, %v1221
  %v1529 = vsel %vm489, %v1135, %v1223
  %v1530 = vsel %vm489, %v1134, %v1225
  %v1531 = vsel %vm489, %v1133, %v1227
  %v1532 = vsel %vm506, %v1516, %v1261
  %v1533 = vsel %vm506, %v1517, %v1263
  %v1534 = vsel %vm506, %v1518, %v1265
  %v1535 = vsel %vm506, %v1519, %v1267
  %v1536 = vsel %vm506, %v1520, %v1269
  %v1537 = vsel %vm506, %v1521, %v1271
  %v1538 = vsel %vm506, %v1522, %v1273
  %v1539 = vsel %vm506, %v1523, %v1275
  %v1540 = vsel %vm506, %v1524, %v1277
  %v1541 = vsel %vm506, %v1525, %v1279
  %v1542 = vsel %vm506, %v1526, %v1281
  %v1543 = vsel %vm506, %v1527, %v1283
  %v1544 = vsel %vm506, %v1528, %v1285
  %v1545 = vsel %vm506, %v1529, %v1287
  %v1546 = vsel %vm506, %v1530, %v1289
  %v1547 = vsel %vm506, %v1531, %v1291
  %v1548 = vsel %vm523, %v1532, %v1325
  %v1549 = vsel %vm523, %v1533, %v1327
  %v1550 = vsel %vm523, %v1534, %v1329
  %v1551 = vsel %vm523, %v1535, %v1331
  %v1552 = vsel %vm523, %v1536, %v1333
  %v1553 = vsel %vm523, %v1537, %v1335
  %v1554 = vsel %vm523, %v1538, %v1337
  %v1555 = vsel %vm523, %v1539, %v1339
  %v1556 = vsel %vm523, %v1540, %v1341
  %v1557 = vsel %vm523, %v1541, %v1343
  %v1558 = vsel %vm523, %v1542, %v1345
  %v1559 = vsel %vm523, %v1543, %v1347
  %v1560 = vsel %vm523, %v1544, %v1349
  %v1561 = vsel %vm523, %v1545, %v1351
  %v1562 = vsel %vm523, %v1546, %v1353
  %v1563 = vsel %vm523, %v1547, %v1355
  %v1564 = vsel %vm489, %v1100, %v1373
  %v1565 = vsel %vm489, %v1101, %v1375
  %v1566 = vsel %vm489, %v1102, %v1377
  %v1567 = vsel %vm489, %v1103, %v1379
  %v1568 = vsel %vm489, %v1104, %v1381
  %v1569 = vsel %vm489, %v1105, %v1383
  %v1570 = vsel %vm489, %v1106, %v1385
  %v1571 = vsel %vm489, %v1107, %v1387
  %v1572 = vsel %vm489, %v1108, %v1389
  %v1573 = vsel %vm489, %v1109, %v1391
  %v1574 = vsel %vm489, %v1110, %v1393
  %v1575 = vsel %vm489, %v1111, %v1395
  %v1576 = vsel %vm489, %v1112, %v1397
  %v1577 = vsel %vm489, %v1113, %v1399
  %v1578 = vsel %vm489, %v1114, %v1401
  %v1579 = vsel %vm489, %v1115, %v1403
  %v1580 = vsel %vm506, %v1564, %v1421
  %v1581 = vsel %vm506, %v1565, %v1423
  %v1582 = vsel %vm506, %v1566, %v1425
  %v1583 = vsel %vm506, %v1567, %v1427
  %v1584 = vsel %vm506, %v1568, %v1429
  %v1585 = vsel %vm506, %v1569, %v1431
  %v1586 = vsel %vm506, %v1570, %v1433
  %v1587 = vsel %vm506, %v1571, %v1435
  %v1588 = vsel %vm506, %v1572, %v1437
  %v1589 = vsel %vm506, %v1573, %v1439
  %v1590 = vsel %vm506, %v1574, %v1441
  %v1591 = vsel %vm506, %v1575, %v1443
  %v1592 = vsel %vm506, %v1576, %v1445
  %v1593 = vsel %vm506, %v1577, %v1447
  %v1594 = vsel %vm506, %v1578, %v1449
  %v1595 = vsel %vm506, %v1579, %v1451
  %v1596 = vsel %vm523, %v1580, %v1469
  %v1597 = vsel %vm523, %v1581, %v1471
  %v1598 = vsel %vm523, %v1582, %v1473
  %v1599 = vsel %vm523, %v1583, %v1475
  %v1600 = vsel %vm523, %v1584, %v1477
  %v1601 = vsel %vm523, %v1585, %v1479
  %v1602 = vsel %vm523, %v1586, %v1481
  %v1603 = vsel %vm523, %v1587, %v1483
  %v1604 = vsel %vm523, %v1588, %v1485
  %v1605 = vsel %vm523, %v1589, %v1487
  %v1606 = vsel %vm523, %v1590, %v1489
  %v1607 = vsel %vm523, %v1591, %v1491
  %v1608 = vsel %vm523, %v1592, %v1493
  %v1609 = vsel %vm523, %v1593, %v1495
  %v1610 = vsel %vm523, %v1594, %v1497
  %v1611 = vsel %vm523, %v1595, %v1499
  %v1612 = vmul.f32 %v1548, %v37
  %v1613 = vmul.f32 %v1596, %v38
  %v1614 = vmul.f32 %v1177, %v39
  %v1615 = vmul.f32 %v1549, %v40
  %v1616 = vmul.f32 %v1597, %v41
  %v1617 = vmul.f32 %v1176, %v42
  %v1618 = vmul.f32 %v1550, %v43
  %v1619 = vmul.f32 %v1598, %v44
  %v1620 = vmul.f32 %v1175, %v45
  %v1621 = vmul.f32 %v1551, %v46
  %v1622 = vmul.f32 %v1599, %v47
  %v1623 = vmul.f32 %v1174, %v48
  %v1624 = vmul.f32 %v1552, %v49
  %v1625 = vmul.f32 %v1600, %v50
  %v1626 = vmul.f32 %v1173, %v51
  %v1627 = vmul.f32 %v1553, %v52
  %v1628 = vmul.f32 %v1601, %v53
  %v1629 = vmul.f32 %v1172, %v54
  %v1630 = vmul.f32 %v1554, %v55
  %v1631 = vmul.f32 %v1602, %v56
  %v1632 = vmul.f32 %v1171, %v57
  %v1633 = vmul.f32 %v1555, %v58
  %v1634 = vmul.f32 %v1603, %v59
  %v1635 = vmul.f32 %v1170, %v60
  %v1636 = vmul.f32 %v1556, %v61
  %v1637 = vmul.f32 %v1604, %v62
  %v1638 = vmul.f32 %v1169, %v63
  %v1639 = vmul.f32 %v1557, %v64
  %v1640 = vmul.f32 %v1605, %v65
  %v1641 = vmul.f32 %v1168, %v66
  %v1642 = vmul.f32 %v1558, %v67
  %v1643 = vmul.f32 %v1606, %v68
  %v1644 = vmul.f32 %v1167, %v69
  %v1645 = vmul.f32 %v1559, %v70
  %v1646 = vmul.f32 %v1607, %v71
  %v1647 = vmul.f32 %v1166, %v72
  %v1648 = vmul.f32 %v1560, %v73
  %v1649 = vmul.f32 %v1608, %v74
  %v1650 = vmul.f32 %v1165, %v75
  %v1651 = vmul.f32 %v1561, %v76
  %v1652 = vmul.f32 %v1609, %v77
  %v1653 = vmul.f32 %v1164, %v78
  %v1654 = vmul.f32 %v1562, %v79
  %v1655 = vmul.f32 %v1610, %v80
  %v1656 = vmul.f32 %v1179, %v81
  %v1657 = vmul.f32 %v1563, %v82
  %v1658 = vmul.f32 %v1611, %v83
  %v1659 = vmul.f32 %v1178, %v84
  %v1660 = vpack.c.bf16 %v1615, %v1612
  %v1661 = vpack.c.bf16 %v1616, %v1613
  %v1662 = vpack.c.bf16 %v1617, %v1614
  %v1663 = vpack.c.bf16 %v1621, %v1618
  %v1664 = vpack.c.bf16 %v1622, %v1619
  %v1665 = vpack.c.bf16 %v1623, %v1620
  %v1666 = vpack.c.bf16 %v1627, %v1624
  %v1667 = vpack.c.bf16 %v1628, %v1625
  %v1668 = vpack.c.bf16 %v1629, %v1626
  %v1669 = vpack.c.bf16 %v1633, %v1630
  %v1670 = vpack.c.bf16 %v1634, %v1631
  %v1671 = vpack.c.bf16 %v1635, %v1632
  %v1672 = vpack.c.bf16 %v1639, %v1636
  %v1673 = vpack.c.bf16 %v1640, %v1637
  %v1674 = vpack.c.bf16 %v1641, %v1638
  %v1675 = vpack.c.bf16 %v1645, %v1642
  %v1676 = vpack.c.bf16 %v1646, %v1643
  %v1677 = vpack.c.bf16 %v1647, %v1644
  %v1678 = vpack.c.bf16 %v1651, %v1648
  %v1679 = vpack.c.bf16 %v1652, %v1649
  %v1680 = vpack.c.bf16 %v1653, %v1650
  %v1681 = vpack.c.bf16 %v1657, %v1654
  %v1682 = vpack.c.bf16 %v1658, %v1655
  %v1683 = vpack.c.bf16 %v1659, %v1656
  %s1684 = scalar_lea.vmem %s2, 144
  %v1685 = vld [vmem:[%s1684] sm:$0xf]
  %v1686 = vld [vmem:[%s1684 + $0x4] sm:$0xf]
  %v1687 = vld [vmem:[%s1684 + $0x8] sm:$0xf]
  %v1688 = vld [vmem:[%s1684 + $0xc] sm:$0xf]
  %v1689 = vld [vmem:[%s1684 + $0x10] sm:$0xf]
  %v1690 = vld [vmem:[%s1684 + $0x14] sm:$0xf]
  %v1691 = vld [vmem:[%s1684 + $0x18] sm:$0xf]
  %v1692 = vld [vmem:[%s1684 + $0x1c] sm:$0xf]
  %v1693 = vld [vmem:[%s1684 + $0x20] sm:$0xf]
  %v1694 = vld [vmem:[%s1684 + $0x24] sm:$0xf]
  %v1695 = vld [vmem:[%s1684 + $0x28] sm:$0xf]
  %v1696 = vld [vmem:[%s1684 + $0x2c] sm:$0xf]
  %v1697 = vld [vmem:[%s1684 + $0x30] sm:$0xf]
  %v1698 = vld [vmem:[%s1684 + $0x34] sm:$0xf]
  %v1699 = vld [vmem:[%s1684 + $0x38] sm:$0xf]
  %v1700 = vld [vmem:[%s1684 + $0x3c] sm:$0xf]
  %v1701 = vld [vmem:[%s1684 + $0x40] sm:$0xf]
  %v1702 = vld [vmem:[%s1684 + $0x44] sm:$0xf]
  %v1703 = vld [vmem:[%s1684 + $0x48] sm:$0xf]
  %v1704 = vld [vmem:[%s1684 + $0x4c] sm:$0xf]
  %v1705 = vld [vmem:[%s1684 + $0x50] sm:$0xf]
  %v1706 = vld [vmem:[%s1684 + $0x54] sm:$0xf]
  %v1707 = vld [vmem:[%s1684 + $0x58] sm:$0xf]
  %v1708 = vld [vmem:[%s1684 + $0x5c] sm:$0xf]
  %v1709 = vld [vmem:[%s1684 + $0x60] sm:$0xf]
  %v1710 = vld [vmem:[%s1684 + $0x64] sm:$0xf]
  %v1711 = vld [vmem:[%s1684 + $0x68] sm:$0xf]
  %v1712 = vld [vmem:[%s1684 + $0x6c] sm:$0xf]
  %v1713 = vld [vmem:[%s1684 + $0x70] sm:$0xf]
  %v1714 = vld [vmem:[%s1684 + $0x74] sm:$0xf]
  %v1715 = vld [vmem:[%s1684 + $0x78] sm:$0xf]
  %v1716 = vld [vmem:[%s1684 + $0x7c] sm:$0xf]
  %v1717 = vld [vmem:[%s1684 + $0x80] sm:$0xf]
  %v1718 = vld [vmem:[%s1684 + $0x84] sm:$0xf]
  %v1719 = vld [vmem:[%s1684 + $0x88] sm:$0xf]
  %v1720 = vld [vmem:[%s1684 + $0x8c] sm:$0xf]
  %v1757 = vunpack.c.l.b16 %v1685
  %v1758 = vunpack.c.l.b16 %v1686
  %v1759 = vunpack.c.l.b16 %v1687
  %v1760 = vunpack.c.l.b16 %v1688
  %v1761 = vunpack.c.l.b16 %v1689
  %v1762 = vunpack.c.l.b16 %v1690
  %v1763 = vunpack.c.l.b16 %v1691
  %v1764 = vunpack.c.l.b16 %v1692
  %v1765 = vunpack.c.l.b16 %v1693
  %v1766 = vunpack.c.l.b16 %v1694
  %v1767 = vunpack.c.l.b16 %v1695
  %v1768 = vunpack.c.l.b16 %v1696
  %v1769 = vunpack.c.l.b16 %v1697
  %v1770 = vunpack.c.l.b16 %v1698
  %v1771 = vunpack.c.l.b16 %v1699
  %v1772 = vunpack.c.l.b16 %v1700
  %v1773 = vunpack.c.l.b16 %v1701
  %v1774 = vunpack.c.l.b16 %v1702
  %v1775 = vunpack.c.l.b16 %v1703
  %v1776 = vunpack.c.l.b16 %v1704
  %v1777 = vunpack.c.l.b16 %v1705
  %v1778 = vunpack.c.l.b16 %v1706
  %v1779 = vunpack.c.l.b16 %v1707
  %v1780 = vunpack.c.l.b16 %v1708
  %v1781 = vunpack.c.l.b16 %v1709
  %v1782 = vunpack.c.l.b16 %v1710
  %v1783 = vunpack.c.l.b16 %v1711
  %v1784 = vunpack.c.l.b16 %v1712
  %v1785 = vunpack.c.l.b16 %v1713
  %v1786 = vunpack.c.l.b16 %v1714
  %v1787 = vunpack.c.l.b16 %v1715
  %v1788 = vunpack.c.l.b16 %v1716
  %v1789 = vunpack.c.l.b16 %v1717
  %v1790 = vunpack.c.l.b16 %v1718
  %v1791 = vunpack.c.l.b16 %v1719
  %v1792 = vunpack.c.l.b16 %v1720
  %v1793 = vpack.c.b16 %v1758, %v1757
  %v1794 = vpack.c.b16 %v1760, %v1759
  %v1795 = vpack.c.b16 %v1762, %v1761
  %v1796 = vpack.c.b16 %v1764, %v1763
  %v1797 = vpack.c.b16 %v1766, %v1765
  %v1798 = vpack.c.b16 %v1768, %v1767
  %v1799 = vpack.c.b16 %v1770, %v1769
  %v1800 = vpack.c.b16 %v1772, %v1771
  %v1801 = vpack.c.b16 %v1774, %v1773
  %v1802 = vpack.c.b16 %v1776, %v1775
  %v1803 = vpack.c.b16 %v1778, %v1777
  %v1804 = vpack.c.b16 %v1780, %v1779
  %v1805 = vpack.c.b16 %v1782, %v1781
  %v1806 = vpack.c.b16 %v1784, %v1783
  %v1807 = vpack.c.b16 %v1786, %v1785
  %v1808 = vpack.c.b16 %v1788, %v1787
  %v1809 = vpack.c.b16 %v1790, %v1789
  %v1810 = vpack.c.b16 %v1792, %v1791
  %v1830 = vsel %vm489, %v1662, 0
  %v1833 = vsel %vm489, %v1665, 0
  %v1836 = vsel %vm489, %v1668, 0
  %v1839 = vsel %vm489, %v1671, 0
  %v1842 = vsel %vm489, %v1674, 0
  %v1845 = vsel %vm489, %v1677, 0
  %v1848 = vsel %vm489, %v1680, 0
  %v1851 = vsel %vm489, %v1683, 0
  %1853 = vmatprep.subr.bf16.mxu0 0
  %1854 = vmatpush1.bf16.msra.mxu0 %v1793
  %1855 = vmatprep.subr.bf16.mxu0 0
  %1856 = vmatpush1.bf16.msra.mxu0 %v1794
  %1857 = vmatprep.subr.bf16.mxu0 0
  %1858 = vmatpush1.bf16.msra.mxu0 %v1795
  %1859 = vmatprep.subr.bf16.mxu0 0
  %1860 = vmatpush1.bf16.msra.mxu0 %v1796
  %1861 = vmatprep.subr.bf16.mxu0 0
  %1862 = vmatpush1.bf16.msra.mxu0 %v1797
  %1863 = vmatprep.subr.bf16.mxu0 0
  %1864 = vmatpush1.bf16.msra.mxu0 %v1798
  %1865 = vmatprep.subr.bf16.mxu0 0
  %1866 = vmatpush1.bf16.msra.mxu0 %v1799
  %1867 = vmatprep.subr.bf16.mxu0 0
  %1868 = vmatpush1.bf16.msra.mxu0 %v1800
  %1869 = vmatprep.subr.bf16.mxu0 0
  %1870 = vmatpush1.bf16.msra.mxu0 %v1801
  %1871 = vmatprep.subr.bf16.mxu0 0
  %1872 = vmatpush1.bf16.msra.mxu0 %v1802
  %1873 = vmatprep.subr.bf16.mxu0 0
  %1874 = vmatpush1.bf16.msra.mxu0 %v1803
  %1875 = vmatprep.subr.bf16.mxu0 0
  %1876 = vmatpush1.bf16.msra.mxu0 %v1804
  %1877 = vmatprep.subr.bf16.mxu0 0
  %1878 = vmatpush1.bf16.msra.mxu0 %v1805
  %1879 = vmatprep.subr.bf16.mxu0 0
  %1880 = vmatpush1.bf16.msra.mxu0 %v1806
  %1881 = vmatprep.subr.bf16.mxu0 0
  %1882 = vmatpush1.bf16.msra.mxu0 %v1807
  %1883 = vmatprep.subr.bf16.mxu0 0
  %1884 = vmatpush1.bf16.msra.mxu0 %v1808
  %1885 = vmatprep.mubr.bf16.mxu0 %v1661
  %1886 = vmatmul.mubr.bf16.gmra.mrb[0].mxu0 %v1660
  %v1887 = vpop.f32.mrb[0].mxu0
  %v1888 = vadd.f32 0.0, %v1887
  %v1889 = vpop.f32.mrb[0].mxu0
  %v1890 = vpop.f32.mrb[0].mxu0
  %v1891 = vadd.f32 0.0, %v1890
  %v1892 = vpop.f32.mrb[0].mxu0
  %1893 = vmatprep.mubr.bf16.mxu0 %v1664
  %1894 = vmatmul.mubr.bf16.gmra.mrb[0].mxu0 %v1663
  %v1895 = vpop.f32.mrb[0].mxu0
  %v1896 = vadd.f32 0.0, %v1895
  %v1897 = vpop.f32.mrb[0].mxu0
  %v1898 = vpop.f32.mrb[0].mxu0
  %v1899 = vadd.f32 0.0, %v1898
  %v1900 = vpop.f32.mrb[0].mxu0
  %1901 = vmatprep.mubr.bf16.mxu0 %v1667
  %1902 = vmatmul.mubr.bf16.gmra.mrb[0].mxu0 %v1666
  %v1903 = vpop.f32.mrb[0].mxu0
  %v1904 = vadd.f32 0.0, %v1903
  %v1905 = vpop.f32.mrb[0].mxu0
  %v1906 = vpop.f32.mrb[0].mxu0
  %v1907 = vadd.f32 0.0, %v1906
  %v1908 = vpop.f32.mrb[0].mxu0
  %1909 = vmatprep.mubr.bf16.mxu0 %v1670
  %1910 = vmatmul.mubr.bf16.gmra.mrb[0].mxu0 %v1669
  %v1911 = vpop.f32.mrb[0].mxu0
  %v1912 = vadd.f32 0.0, %v1911
  %v1913 = vpop.f32.mrb[0].mxu0
  %v1914 = vpop.f32.mrb[0].mxu0
  %v1915 = vadd.f32 0.0, %v1914
  %v1916 = vpop.f32.mrb[0].mxu0
  %1917 = vmatprep.mubr.bf16.mxu0 %v1673
  %1918 = vmatmul.mubr.bf16.gmra.mrb[0].mxu0 %v1672
  %v1919 = vpop.f32.mrb[0].mxu0
  %v1920 = vadd.f32 0.0, %v1919
  %v1921 = vpop.f32.mrb[0].mxu0
  %v1922 = vpop.f32.mrb[0].mxu0
  %v1923 = vadd.f32 0.0, %v1922
  %v1924 = vpop.f32.mrb[0].mxu0
  %1925 = vmatprep.mubr.bf16.mxu0 %v1676
  %1926 = vmatmul.mubr.bf16.gmra.mrb[0].mxu0 %v1675
  %v1927 = vpop.f32.mrb[0].mxu0
  %v1928 = vadd.f32 0.0, %v1927
  %v1929 = vpop.f32.mrb[0].mxu0
  %v1930 = vpop.f32.mrb[0].mxu0
  %v1931 = vadd.f32 0.0, %v1930
  %v1932 = vpop.f32.mrb[0].mxu0
  %1933 = vmatprep.mubr.bf16.mxu0 %v1679
  %1934 = vmatmul.mubr.bf16.gmra.mrb[0].mxu0 %v1678
  %v1935 = vpop.f32.mrb[0].mxu0
  %v1936 = vadd.f32 0.0, %v1935
  %v1937 = vpop.f32.mrb[0].mxu0
  %v1938 = vpop.f32.mrb[0].mxu0
  %v1939 = vadd.f32 0.0, %v1938
  %v1940 = vpop.f32.mrb[0].mxu0
  %1941 = vmatprep.mubr.bf16.mxu0 %v1682
  %1942 = vmatmul.mubr.bf16.gmra.mrb[0].mxu0 %v1681
  %v1943 = vpop.f32.mrb[0].mxu0
  %v1944 = vadd.f32 0.0, %v1943
  %v1945 = vpop.f32.mrb[0].mxu0
  %v1946 = vpop.f32.mrb[0].mxu0
  %v1947 = vadd.f32 0.0, %v1946
  %v1948 = vpop.f32.mrb[0].mxu0
  %1949 = vdwg.mxu0
  %1950 = vmatprep.subr.bf16.mxu0 0
  %1951 = vmatpush1.bf16.msra.mxu0 %v1809
  %1952 = vmatprep.subr.bf16.mxu0 0
  %1953 = vmatpush1.bf16.msra.mxu0 %v1810
  %1954 = vmatprep.subr.bf16.mxu0 0
  %1955 = vmatpush1.bf16.msra.mxu0 0
  %1956 = vmatprep.subr.bf16.mxu0 0
  %1957 = vmatpush1.bf16.msra.mxu0 0
  %1958 = vmatprep.subr.bf16.mxu0 0
  %1959 = vmatpush1.bf16.msra.mxu0 0
  %1960 = vmatprep.subr.bf16.mxu0 0
  %1961 = vmatpush1.bf16.msra.mxu0 0
  %1962 = vmatprep.subr.bf16.mxu0 0
  %1963 = vmatpush1.bf16.msra.mxu0 0
  %1964 = vmatprep.subr.bf16.mxu0 0
  %1965 = vmatpush1.bf16.msra.mxu0 0
  %1966 = vmatprep.subr.bf16.mxu0 0
  %1967 = vmatpush1.bf16.msra.mxu0 0
  %1968 = vmatprep.subr.bf16.mxu0 0
  %1969 = vmatpush1.bf16.msra.mxu0 0
  %1970 = vmatprep.subr.bf16.mxu0 0
  %1971 = vmatpush1.bf16.msra.mxu0 0
  %1972 = vmatprep.subr.bf16.mxu0 0
  %1973 = vmatpush1.bf16.msra.mxu0 0
  %1974 = vmatprep.subr.bf16.mxu0 0
  %1975 = vmatpush1.bf16.msra.mxu0 0
  %1976 = vmatprep.subr.bf16.mxu0 0
  %1977 = vmatpush1.bf16.msra.mxu0 0
  %1978 = vmatprep.subr.bf16.mxu0 0
  %1979 = vmatpush1.bf16.msra.mxu0 0
  %1980 = vmatprep.subr.bf16.mxu0 0
  %1981 = vmatpush1.bf16.msra.mxu0 0
  %1982 = vmatprep.mubr.bf16.mxu0 0
  %1983 = vmatmul.mubr.bf16.gmra.mrb[0].mxu0 %v1830
  %v1984 = vpop.f32.mrb[0].mxu0
  %v1985 = vadd.f32 %v1888, %v1984
  %v1986 = vpop.f32.mrb[0].mxu0
  %v1987 = vpop.f32.mrb[0].mxu0
  %v1988 = vadd.f32 %v1891, %v1987
  %v1989 = vpop.f32.mrb[0].mxu0
  %1990 = vmatprep.mubr.bf16.mxu0 0
  %1991 = vmatmul.mubr.bf16.gmra.mrb[0].mxu0 %v1833
  %v1992 = vpop.f32.mrb[0].mxu0
  %v1993 = vadd.f32 %v1896, %v1992
  %v1994 = vpop.f32.mrb[0].mxu0
  %v1995 = vpop.f32.mrb[0].mxu0
  %v1996 = vadd.f32 %v1899, %v1995
  %v1997 = vpop.f32.mrb[0].mxu0
  %1998 = vmatprep.mubr.bf16.mxu0 0
  %1999 = vmatmul.mubr.bf16.gmra.mrb[0].mxu0 %v1836
  %v2000 = vpop.f32.mrb[0].mxu0
  %v2001 = vadd.f32 %v1904, %v2000
  %v2002 = vpop.f32.mrb[0].mxu0
  %v2003 = vpop.f32.mrb[0].mxu0
  %v2004 = vadd.f32 %v1907, %v2003
  %v2005 = vpop.f32.mrb[0].mxu0
  %2006 = vmatprep.mubr.bf16.mxu0 0
  %2007 = vmatmul.mubr.bf16.gmra.mrb[0].mxu0 %v1839
  %v2008 = vpop.f32.mrb[0].mxu0
  %v2009 = vadd.f32 %v1912, %v2008
  %v2010 = vpop.f32.mrb[0].mxu0
  %v2011 = vpop.f32.mrb[0].mxu0
  %v2012 = vadd.f32 %v1915, %v2011
  %v2013 = vpop.f32.mrb[0].mxu0
  %2014 = vmatprep.mubr.bf16.mxu0 0
  %2015 = vmatmul.mubr.bf16.gmra.mrb[0].mxu0 %v1842
  %v2016 = vpop.f32.mrb[0].mxu0
  %v2017 = vadd.f32 %v1920, %v2016
  %v2018 = vpop.f32.mrb[0].mxu0
  %v2019 = vpop.f32.mrb[0].mxu0
  %v2020 = vadd.f32 %v1923, %v2019
  %v2021 = vpop.f32.mrb[0].mxu0
  %2022 = vmatprep.mubr.bf16.mxu0 0
  %2023 = vmatmul.mubr.bf16.gmra.mrb[0].mxu0 %v1845
  %v2024 = vpop.f32.mrb[0].mxu0
  %v2025 = vadd.f32 %v1928, %v2024
  %v2026 = vpop.f32.mrb[0].mxu0
  %v2027 = vpop.f32.mrb[0].mxu0
  %v2028 = vadd.f32 %v1931, %v2027
  %v2029 = vpop.f32.mrb[0].mxu0
  %2030 = vmatprep.mubr.bf16.mxu0 0
  %2031 = vmatmul.mubr.bf16.gmra.mrb[0].mxu0 %v1848
  %v2032 = vpop.f32.mrb[0].mxu0
  %v2033 = vadd.f32 %v1936, %v2032
  %v2034 = vpop.f32.mrb[0].mxu0
  %v2035 = vpop.f32.mrb[0].mxu0
  %v2036 = vadd.f32 %v1939, %v2035
  %v2037 = vpop.f32.mrb[0].mxu0
  %2038 = vmatprep.mubr.bf16.mxu0 0
  %2039 = vmatmul.mubr.bf16.gmra.mrb[0].mxu0 %v1851
  %v2040 = vpop.f32.mrb[0].mxu0
  %v2041 = vadd.f32 %v1944, %v2040
  %v2042 = vpop.f32.mrb[0].mxu0
  %v2043 = vpop.f32.mrb[0].mxu0
  %v2044 = vadd.f32 %v1947, %v2043
  %v2045 = vpop.f32.mrb[0].mxu0
  %2046 = vdwg.mxu0
  %s2047 = scalar_lea.vmem %s3, 1
  %v2048 = vld [vmem:[%s2047] sm:$0x1]
  %v2050 = vlaneseq
  %v2051 = vshrl.u32 %v2050, 7
  %v2052 = vsub.s32 0, %v2051
  %v2053 = vrot.slane %v2048, %v2052
  %v2055 = vmul.f32 %v1985, %v2053
  %v2056 = vmul.f32 %v1988, %v2053
  %v2057 = vmul.f32 %v1993, %v2053
  %v2058 = vmul.f32 %v1996, %v2053
  %v2059 = vmul.f32 %v2001, %v2053
  %v2060 = vmul.f32 %v2004, %v2053
  %v2061 = vmul.f32 %v2009, %v2053
  %v2062 = vmul.f32 %v2012, %v2053
  %v2063 = vmul.f32 %v2017, %v2053
  %v2064 = vmul.f32 %v2020, %v2053
  %v2065 = vmul.f32 %v2025, %v2053
  %v2066 = vmul.f32 %v2028, %v2053
  %v2067 = vmul.f32 %v2033, %v2053
  %v2068 = vmul.f32 %v2036, %v2053
  %v2069 = vmul.f32 %v2041, %v2053
  %v2070 = vmul.f32 %v2044, %v2053
  %s2071 = scalar_lea.vmem %s4, 1
  %v2072 = vld [vmem:[%s2071] sm:$0x1]
  %v2074 = vlaneseq
  %v2075 = vshrl.u32 %v2074, 7
  %v2076 = vsub.s32 0, %v2075
  %v2077 = vrot.slane %v2072, %v2076
  %v2079 = vadd.f32 %v2055, %v2077
  %v2080 = vadd.f32 %v2056, %v2077
  %v2081 = vadd.f32 %v2057, %v2077
  %v2082 = vadd.f32 %v2058, %v2077
  %v2083 = vadd.f32 %v2059, %v2077
  %v2084 = vadd.f32 %v2060, %v2077
  %v2085 = vadd.f32 %v2061, %v2077
  %v2086 = vadd.f32 %v2062, %v2077
  %v2087 = vadd.f32 %v2063, %v2077
  %v2088 = vadd.f32 %v2064, %v2077
  %v2089 = vadd.f32 %v2065, %v2077
  %v2090 = vadd.f32 %v2066, %v2077
  %v2091 = vadd.f32 %v2067, %v2077
  %v2092 = vadd.f32 %v2068, %v2077
  %v2093 = vadd.f32 %v2069, %v2077
  %v2094 = vadd.f32 %v2070, %v2077
  %vm2095 = vcmp.ge.f32.partialorder %v2079, 0.0
  %vm2096 = vcmp.ge.f32.partialorder %v2080, 0.0
  %vm2097 = vcmp.ge.f32.partialorder %v2081, 0.0
  %vm2098 = vcmp.ge.f32.partialorder %v2082, 0.0
  %vm2099 = vcmp.ge.f32.partialorder %v2083, 0.0
  %vm2100 = vcmp.ge.f32.partialorder %v2084, 0.0
  %vm2101 = vcmp.ge.f32.partialorder %v2085, 0.0
  %vm2102 = vcmp.ge.f32.partialorder %v2086, 0.0
  %vm2103 = vcmp.ge.f32.partialorder %v2087, 0.0
  %vm2104 = vcmp.ge.f32.partialorder %v2088, 0.0
  %vm2105 = vcmp.ge.f32.partialorder %v2089, 0.0
  %vm2106 = vcmp.ge.f32.partialorder %v2090, 0.0
  %vm2107 = vcmp.ge.f32.partialorder %v2091, 0.0
  %vm2108 = vcmp.ge.f32.partialorder %v2092, 0.0
  %vm2109 = vcmp.ge.f32.partialorder %v2093, 0.0
  %vm2110 = vcmp.ge.f32.partialorder %v2094, 0.0
  %v2111 = vmul.f32 %v2079, 0.2
  %v2112 = vmul.f32 %v2080, 0.2
  %v2113 = vmul.f32 %v2081, 0.2
  %v2114 = vmul.f32 %v2082, 0.2
  %v2115 = vmul.f32 %v2083, 0.2
  %v2116 = vmul.f32 %v2084, 0.2
  %v2117 = vmul.f32 %v2085, 0.2
  %v2118 = vmul.f32 %v2086, 0.2
  %v2119 = vmul.f32 %v2087, 0.2
  %v2120 = vmul.f32 %v2088, 0.2
  %v2121 = vmul.f32 %v2089, 0.2
  %v2122 = vmul.f32 %v2090, 0.2
  %v2123 = vmul.f32 %v2091, 0.2
  %v2124 = vmul.f32 %v2092, 0.2
  %v2125 = vmul.f32 %v2093, 0.2
  %v2126 = vmul.f32 %v2094, 0.2
  %v2127 = vsel %vm2095, %v2079, %v2111
  %v2128 = vsel %vm2096, %v2080, %v2112
  %v2129 = vsel %vm2097, %v2081, %v2113
  %v2130 = vsel %vm2098, %v2082, %v2114
  %v2131 = vsel %vm2099, %v2083, %v2115
  %v2132 = vsel %vm2100, %v2084, %v2116
  %v2133 = vsel %vm2101, %v2085, %v2117
  %v2134 = vsel %vm2102, %v2086, %v2118
  %v2135 = vsel %vm2103, %v2087, %v2119
  %v2136 = vsel %vm2104, %v2088, %v2120
  %v2137 = vsel %vm2105, %v2089, %v2121
  %v2138 = vsel %vm2106, %v2090, %v2122
  %v2139 = vsel %vm2107, %v2091, %v2123
  %v2140 = vsel %vm2108, %v2092, %v2124
  %v2141 = vsel %vm2109, %v2093, %v2125
  %v2142 = vsel %vm2110, %v2094, %v2126
  %v2143 = vrot.slane %v2127, 7
  %v2144 = vrot.slane %v2128, 7
  %v2145 = vrot.slane %v2129, 7
  %v2146 = vrot.slane %v2130, 7
  %v2147 = vrot.slane %v2131, 7
  %v2148 = vrot.slane %v2132, 7
  %v2149 = vrot.slane %v2133, 7
  %v2150 = vrot.slane %v2134, 7
  %v2151 = vrot.slane %v2135, 7
  %v2152 = vrot.slane %v2136, 7
  %v2153 = vrot.slane %v2137, 7
  %v2154 = vrot.slane %v2138, 7
  %v2155 = vrot.slane %v2139, 7
  %v2156 = vrot.slane %v2140, 7
  %v2157 = vrot.slane %v2141, 7
  %v2158 = vrot.slane %v2142, 7
  %v2159 = vsel %vm103, %v2157, %v2158
  %v2160 = vsel %vm103, %v2156, %v2157
  %v2161 = vsel %vm103, %v2155, %v2156
  %v2162 = vsel %vm103, %v2154, %v2155
  %v2163 = vsel %vm103, %v2153, %v2154
  %v2164 = vsel %vm103, %v2152, %v2153
  %v2165 = vsel %vm103, %v2151, %v2152
  %v2166 = vsel %vm103, %v2150, %v2151
  %v2167 = vsel %vm103, %v2149, %v2150
  %v2168 = vsel %vm103, %v2148, %v2149
  %v2169 = vsel %vm103, %v2147, %v2148
  %v2170 = vsel %vm103, %v2146, %v2147
  %v2171 = vsel %vm103, %v2145, %v2146
  %v2172 = vsel %vm103, %v2144, %v2145
  %v2173 = vsel %vm103, %v2143, %v2144
  %v2174 = vsel %vm103, %v2158, %v2143
  %v2175 = vrot.slane %v2127, 1
  %v2176 = vrot.slane %v2128, 1
  %v2177 = vrot.slane %v2129, 1
  %v2178 = vrot.slane %v2130, 1
  %v2179 = vrot.slane %v2131, 1
  %v2180 = vrot.slane %v2132, 1
  %v2181 = vrot.slane %v2133, 1
  %v2182 = vrot.slane %v2134, 1
  %v2183 = vrot.slane %v2135, 1
  %v2184 = vrot.slane %v2136, 1
  %v2185 = vrot.slane %v2137, 1
  %v2186 = vrot.slane %v2138, 1
  %v2187 = vrot.slane %v2139, 1
  %v2188 = vrot.slane %v2140, 1
  %v2189 = vrot.slane %v2141, 1
  %v2190 = vrot.slane %v2142, 1
  %v2191 = vsel %vm136, %v2189, %v2190
  %v2192 = vsel %vm136, %v2188, %v2189
  %v2193 = vsel %vm136, %v2187, %v2188
  %v2194 = vsel %vm136, %v2186, %v2187
  %v2195 = vsel %vm136, %v2185, %v2186
  %v2196 = vsel %vm136, %v2184, %v2185
  %v2197 = vsel %vm136, %v2183, %v2184
  %v2198 = vsel %vm136, %v2182, %v2183
  %v2199 = vsel %vm136, %v2181, %v2182
  %v2200 = vsel %vm136, %v2180, %v2181
  %v2201 = vsel %vm136, %v2179, %v2180
  %v2202 = vsel %vm136, %v2178, %v2179
  %v2203 = vsel %vm136, %v2177, %v2178
  %v2204 = vsel %vm136, %v2176, %v2177
  %v2205 = vsel %vm136, %v2175, %v2176
  %v2206 = vsel %vm136, %v2190, %v2175
  %2223 = vrot.lane.b32.xlu0 %v2142, 32
  %v2224 = vpop.permute.xlu0 %2223
  %2225 = vrot.lane.b32.xlu0 %v2127, 32
  %v2226 = vpop.permute.xlu0 %2225
  %2227 = vrot.lane.b32.xlu0 %v2128, 32
  %v2228 = vpop.permute.xlu0 %2227
  %2229 = vrot.lane.b32.xlu0 %v2129, 32
  %v2230 = vpop.permute.xlu0 %2229
  %2231 = vrot.lane.b32.xlu0 %v2130, 32
  %v2232 = vpop.permute.xlu0 %2231
  %2233 = vrot.lane.b32.xlu0 %v2131, 32
  %v2234 = vpop.permute.xlu0 %2233
  %2235 = vrot.lane.b32.xlu0 %v2132, 32
  %v2236 = vpop.permute.xlu0 %2235
  %2237 = vrot.lane.b32.xlu0 %v2133, 32
  %v2238 = vpop.permute.xlu0 %2237
  %2239 = vrot.lane.b32.xlu0 %v2134, 32
  %v2240 = vpop.permute.xlu0 %2239
  %2241 = vrot.lane.b32.xlu0 %v2135, 32
  %v2242 = vpop.permute.xlu0 %2241
  %2243 = vrot.lane.b32.xlu0 %v2136, 32
  %v2244 = vpop.permute.xlu0 %2243
  %2245 = vrot.lane.b32.xlu0 %v2137, 32
  %v2246 = vpop.permute.xlu0 %2245
  %2247 = vrot.lane.b32.xlu0 %v2138, 32
  %v2248 = vpop.permute.xlu0 %2247
  %2249 = vrot.lane.b32.xlu0 %v2139, 32
  %v2250 = vpop.permute.xlu0 %2249
  %2251 = vrot.lane.b32.xlu0 %v2140, 32
  %v2252 = vpop.permute.xlu0 %2251
  %2253 = vrot.lane.b32.xlu0 %v2141, 32
  %v2254 = vpop.permute.xlu0 %2253
  %2287 = vrot.lane.b32.xlu0 %v2206, 64
  %v2288 = vpop.permute.xlu0 %2287
  %2289 = vrot.lane.b32.xlu0 %v2205, 64
  %v2290 = vpop.permute.xlu0 %2289
  %2291 = vrot.lane.b32.xlu0 %v2204, 64
  %v2292 = vpop.permute.xlu0 %2291
  %2293 = vrot.lane.b32.xlu0 %v2203, 64
  %v2294 = vpop.permute.xlu0 %2293
  %2295 = vrot.lane.b32.xlu0 %v2202, 64
  %v2296 = vpop.permute.xlu0 %2295
  %2297 = vrot.lane.b32.xlu0 %v2201, 64
  %v2298 = vpop.permute.xlu0 %2297
  %2299 = vrot.lane.b32.xlu0 %v2200, 64
  %v2300 = vpop.permute.xlu0 %2299
  %2301 = vrot.lane.b32.xlu0 %v2199, 64
  %v2302 = vpop.permute.xlu0 %2301
  %2303 = vrot.lane.b32.xlu0 %v2198, 64
  %v2304 = vpop.permute.xlu0 %2303
  %2305 = vrot.lane.b32.xlu0 %v2197, 64
  %v2306 = vpop.permute.xlu0 %2305
  %2307 = vrot.lane.b32.xlu0 %v2196, 64
  %v2308 = vpop.permute.xlu0 %2307
  %2309 = vrot.lane.b32.xlu0 %v2195, 64
  %v2310 = vpop.permute.xlu0 %2309
  %2311 = vrot.lane.b32.xlu0 %v2194, 64
  %v2312 = vpop.permute.xlu0 %2311
  %2313 = vrot.lane.b32.xlu0 %v2193, 64
  %v2314 = vpop.permute.xlu0 %2313
  %2315 = vrot.lane.b32.xlu0 %v2192, 64
  %v2316 = vpop.permute.xlu0 %2315
  %2317 = vrot.lane.b32.xlu0 %v2191, 64
  %v2318 = vpop.permute.xlu0 %2317
  %2351 = vrot.lane.b32.xlu0 %v2174, 96
  %v2352 = vpop.permute.xlu0 %2351
  %2353 = vrot.lane.b32.xlu0 %v2173, 96
  %v2354 = vpop.permute.xlu0 %2353
  %2355 = vrot.lane.b32.xlu0 %v2172, 96
  %v2356 = vpop.permute.xlu0 %2355
  %2357 = vrot.lane.b32.xlu0 %v2171, 96
  %v2358 = vpop.permute.xlu0 %2357
  %2359 = vrot.lane.b32.xlu0 %v2170, 96
  %v2360 = vpop.permute.xlu0 %2359
  %2361 = vrot.lane.b32.xlu0 %v2169, 96
  %v2362 = vpop.permute.xlu0 %2361
  %2363 = vrot.lane.b32.xlu0 %v2168, 96
  %v2364 = vpop.permute.xlu0 %2363
  %2365 = vrot.lane.b32.xlu0 %v2167, 96
  %v2366 = vpop.permute.xlu0 %2365
  %2367 = vrot.lane.b32.xlu0 %v2166, 96
  %v2368 = vpop.permute.xlu0 %2367
  %2369 = vrot.lane.b32.xlu0 %v2165, 96
  %v2370 = vpop.permute.xlu0 %2369
  %2371 = vrot.lane.b32.xlu0 %v2164, 96
  %v2372 = vpop.permute.xlu0 %2371
  %2373 = vrot.lane.b32.xlu0 %v2163, 96
  %v2374 = vpop.permute.xlu0 %2373
  %2375 = vrot.lane.b32.xlu0 %v2162, 96
  %v2376 = vpop.permute.xlu0 %2375
  %2377 = vrot.lane.b32.xlu0 %v2161, 96
  %v2378 = vpop.permute.xlu0 %2377
  %2379 = vrot.lane.b32.xlu0 %v2160, 96
  %v2380 = vpop.permute.xlu0 %2379
  %2381 = vrot.lane.b32.xlu0 %v2159, 96
  %v2382 = vpop.permute.xlu0 %2381
  %2399 = vrot.lane.b32.xlu0 %v2205, 32
  %v2400 = vpop.permute.xlu0 %2399
  %2401 = vrot.lane.b32.xlu0 %v2204, 32
  %v2402 = vpop.permute.xlu0 %2401
  %2403 = vrot.lane.b32.xlu0 %v2203, 32
  %v2404 = vpop.permute.xlu0 %2403
  %2405 = vrot.lane.b32.xlu0 %v2202, 32
  %v2406 = vpop.permute.xlu0 %2405
  %2407 = vrot.lane.b32.xlu0 %v2201, 32
  %v2408 = vpop.permute.xlu0 %2407
  %2409 = vrot.lane.b32.xlu0 %v2200, 32
  %v2410 = vpop.permute.xlu0 %2409
  %2411 = vrot.lane.b32.xlu0 %v2199, 32
  %v2412 = vpop.permute.xlu0 %2411
  %2413 = vrot.lane.b32.xlu0 %v2198, 32
  %v2414 = vpop.permute.xlu0 %2413
  %2415 = vrot.lane.b32.xlu0 %v2197, 32
  %v2416 = vpop.permute.xlu0 %2415
  %2417 = vrot.lane.b32.xlu0 %v2196, 32
  %v2418 = vpop.permute.xlu0 %2417
  %2419 = vrot.lane.b32.xlu0 %v2195, 32
  %v2420 = vpop.permute.xlu0 %2419
  %2421 = vrot.lane.b32.xlu0 %v2194, 32
  %v2422 = vpop.permute.xlu0 %2421
  %2423 = vrot.lane.b32.xlu0 %v2193, 32
  %v2424 = vpop.permute.xlu0 %2423
  %2425 = vrot.lane.b32.xlu0 %v2192, 32
  %v2426 = vpop.permute.xlu0 %2425
  %2427 = vrot.lane.b32.xlu0 %v2191, 32
  %v2428 = vpop.permute.xlu0 %2427
  %2429 = vrot.lane.b32.xlu0 %v2206, 32
  %v2430 = vpop.permute.xlu0 %2429
  %2447 = vrot.lane.b32.xlu0 %v2173, 64
  %v2448 = vpop.permute.xlu0 %2447
  %2449 = vrot.lane.b32.xlu0 %v2172, 64
  %v2450 = vpop.permute.xlu0 %2449
  %2451 = vrot.lane.b32.xlu0 %v2171, 64
  %v2452 = vpop.permute.xlu0 %2451
  %2453 = vrot.lane.b32.xlu0 %v2170, 64
  %v2454 = vpop.permute.xlu0 %2453
  %2455 = vrot.lane.b32.xlu0 %v2169, 64
  %v2456 = vpop.permute.xlu0 %2455
  %2457 = vrot.lane.b32.xlu0 %v2168, 64
  %v2458 = vpop.permute.xlu0 %2457
  %2459 = vrot.lane.b32.xlu0 %v2167, 64
  %v2460 = vpop.permute.xlu0 %2459
  %2461 = vrot.lane.b32.xlu0 %v2166, 64
  %v2462 = vpop.permute.xlu0 %2461
  %2463 = vrot.lane.b32.xlu0 %v2165, 64
  %v2464 = vpop.permute.xlu0 %2463
  %2465 = vrot.lane.b32.xlu0 %v2164, 64
  %v2466 = vpop.permute.xlu0 %2465
  %2467 = vrot.lane.b32.xlu0 %v2163, 64
  %v2468 = vpop.permute.xlu0 %2467
  %2469 = vrot.lane.b32.xlu0 %v2162, 64
  %v2470 = vpop.permute.xlu0 %2469
  %2471 = vrot.lane.b32.xlu0 %v2161, 64
  %v2472 = vpop.permute.xlu0 %2471
  %2473 = vrot.lane.b32.xlu0 %v2160, 64
  %v2474 = vpop.permute.xlu0 %2473
  %2475 = vrot.lane.b32.xlu0 %v2159, 64
  %v2476 = vpop.permute.xlu0 %2475
  %2477 = vrot.lane.b32.xlu0 %v2174, 64
  %v2478 = vpop.permute.xlu0 %2477
  %2495 = vrot.lane.b32.xlu0 %v2128, 96
  %v2496 = vpop.permute.xlu0 %2495
  %2497 = vrot.lane.b32.xlu0 %v2129, 96
  %v2498 = vpop.permute.xlu0 %2497
  %2499 = vrot.lane.b32.xlu0 %v2130, 96
  %v2500 = vpop.permute.xlu0 %2499
  %2501 = vrot.lane.b32.xlu0 %v2131, 96
  %v2502 = vpop.permute.xlu0 %2501
  %2503 = vrot.lane.b32.xlu0 %v2132, 96
  %v2504 = vpop.permute.xlu0 %2503
  %2505 = vrot.lane.b32.xlu0 %v2133, 96
  %v2506 = vpop.permute.xlu0 %2505
  %2507 = vrot.lane.b32.xlu0 %v2134, 96
  %v2508 = vpop.permute.xlu0 %2507
  %2509 = vrot.lane.b32.xlu0 %v2135, 96
  %v2510 = vpop.permute.xlu0 %2509
  %2511 = vrot.lane.b32.xlu0 %v2136, 96
  %v2512 = vpop.permute.xlu0 %2511
  %2513 = vrot.lane.b32.xlu0 %v2137, 96
  %v2514 = vpop.permute.xlu0 %2513
  %2515 = vrot.lane.b32.xlu0 %v2138, 96
  %v2516 = vpop.permute.xlu0 %2515
  %2517 = vrot.lane.b32.xlu0 %v2139, 96
  %v2518 = vpop.permute.xlu0 %2517
  %2519 = vrot.lane.b32.xlu0 %v2140, 96
  %v2520 = vpop.permute.xlu0 %2519
  %2521 = vrot.lane.b32.xlu0 %v2141, 96
  %v2522 = vpop.permute.xlu0 %2521
  %2523 = vrot.lane.b32.xlu0 %v2142, 96
  %v2524 = vpop.permute.xlu0 %2523
  %2525 = vrot.lane.b32.xlu0 %v2127, 96
  %v2526 = vpop.permute.xlu0 %2525
  %v2543 = vsel %vm489, %v2159, %v2224
  %v2544 = vsel %vm489, %v2174, %v2226
  %v2545 = vsel %vm489, %v2173, %v2228
  %v2546 = vsel %vm489, %v2172, %v2230
  %v2547 = vsel %vm489, %v2171, %v2232
  %v2548 = vsel %vm489, %v2170, %v2234
  %v2549 = vsel %vm489, %v2169, %v2236
  %v2550 = vsel %vm489, %v2168, %v2238
  %v2551 = vsel %vm489, %v2167, %v2240
  %v2552 = vsel %vm489, %v2166, %v2242
  %v2553 = vsel %vm489, %v2165, %v2244
  %v2554 = vsel %vm489, %v2164, %v2246
  %v2555 = vsel %vm489, %v2163, %v2248
  %v2556 = vsel %vm489, %v2162, %v2250
  %v2557 = vsel %vm489, %v2161, %v2252
  %v2558 = vsel %vm489, %v2160, %v2254
  %v2559 = vsel %vm506, %v2543, %v2288
  %v2560 = vsel %vm506, %v2544, %v2290
  %v2561 = vsel %vm506, %v2545, %v2292
  %v2562 = vsel %vm506, %v2546, %v2294
  %v2563 = vsel %vm506, %v2547, %v2296
  %v2564 = vsel %vm506, %v2548, %v2298
  %v2565 = vsel %vm506, %v2549, %v2300
  %v2566 = vsel %vm506, %v2550, %v2302
  %v2567 = vsel %vm506, %v2551, %v2304
  %v2568 = vsel %vm506, %v2552, %v2306
  %v2569 = vsel %vm506, %v2553, %v2308
  %v2570 = vsel %vm506, %v2554, %v2310
  %v2571 = vsel %vm506, %v2555, %v2312
  %v2572 = vsel %vm506, %v2556, %v2314
  %v2573 = vsel %vm506, %v2557, %v2316
  %v2574 = vsel %vm506, %v2558, %v2318
  %v2575 = vsel %vm523, %v2559, %v2352
  %v2576 = vsel %vm523, %v2560, %v2354
  %v2577 = vsel %vm523, %v2561, %v2356
  %v2578 = vsel %vm523, %v2562, %v2358
  %v2579 = vsel %vm523, %v2563, %v2360
  %v2580 = vsel %vm523, %v2564, %v2362
  %v2581 = vsel %vm523, %v2565, %v2364
  %v2582 = vsel %vm523, %v2566, %v2366
  %v2583 = vsel %vm523, %v2567, %v2368
  %v2584 = vsel %vm523, %v2568, %v2370
  %v2585 = vsel %vm523, %v2569, %v2372
  %v2586 = vsel %vm523, %v2570, %v2374
  %v2587 = vsel %vm523, %v2571, %v2376
  %v2588 = vsel %vm523, %v2572, %v2378
  %v2589 = vsel %vm523, %v2573, %v2380
  %v2590 = vsel %vm523, %v2574, %v2382
  %v2591 = vsel %vm489, %v2127, %v2400
  %v2592 = vsel %vm489, %v2128, %v2402
  %v2593 = vsel %vm489, %v2129, %v2404
  %v2594 = vsel %vm489, %v2130, %v2406
  %v2595 = vsel %vm489, %v2131, %v2408
  %v2596 = vsel %vm489, %v2132, %v2410
  %v2597 = vsel %vm489, %v2133, %v2412
  %v2598 = vsel %vm489, %v2134, %v2414
  %v2599 = vsel %vm489, %v2135, %v2416
  %v2600 = vsel %vm489, %v2136, %v2418
  %v2601 = vsel %vm489, %v2137, %v2420
  %v2602 = vsel %vm489, %v2138, %v2422
  %v2603 = vsel %vm489, %v2139, %v2424
  %v2604 = vsel %vm489, %v2140, %v2426
  %v2605 = vsel %vm489, %v2141, %v2428
  %v2606 = vsel %vm489, %v2142, %v2430
  %v2607 = vsel %vm506, %v2591, %v2448
  %v2608 = vsel %vm506, %v2592, %v2450
  %v2609 = vsel %vm506, %v2593, %v2452
  %v2610 = vsel %vm506, %v2594, %v2454
  %v2611 = vsel %vm506, %v2595, %v2456
  %v2612 = vsel %vm506, %v2596, %v2458
  %v2613 = vsel %vm506, %v2597, %v2460
  %v2614 = vsel %vm506, %v2598, %v2462
  %v2615 = vsel %vm506, %v2599, %v2464
  %v2616 = vsel %vm506, %v2600, %v2466
  %v2617 = vsel %vm506, %v2601, %v2468
  %v2618 = vsel %vm506, %v2602, %v2470
  %v2619 = vsel %vm506, %v2603, %v2472
  %v2620 = vsel %vm506, %v2604, %v2474
  %v2621 = vsel %vm506, %v2605, %v2476
  %v2622 = vsel %vm506, %v2606, %v2478
  %v2623 = vsel %vm523, %v2607, %v2496
  %v2624 = vsel %vm523, %v2608, %v2498
  %v2625 = vsel %vm523, %v2609, %v2500
  %v2626 = vsel %vm523, %v2610, %v2502
  %v2627 = vsel %vm523, %v2611, %v2504
  %v2628 = vsel %vm523, %v2612, %v2506
  %v2629 = vsel %vm523, %v2613, %v2508
  %v2630 = vsel %vm523, %v2614, %v2510
  %v2631 = vsel %vm523, %v2615, %v2512
  %v2632 = vsel %vm523, %v2616, %v2514
  %v2633 = vsel %vm523, %v2617, %v2516
  %v2634 = vsel %vm523, %v2618, %v2518
  %v2635 = vsel %vm523, %v2619, %v2520
  %v2636 = vsel %vm523, %v2620, %v2522
  %v2637 = vsel %vm523, %v2621, %v2524
  %v2638 = vsel %vm523, %v2622, %v2526
  %v2639 = vmul.f32 %v2575, %v37
  %v2640 = vmul.f32 %v2623, %v38
  %v2641 = vmul.f32 %v2204, %v39
  %v2642 = vmul.f32 %v2576, %v40
  %v2643 = vmul.f32 %v2624, %v41
  %v2644 = vmul.f32 %v2203, %v42
  %v2645 = vmul.f32 %v2577, %v43
  %v2646 = vmul.f32 %v2625, %v44
  %v2647 = vmul.f32 %v2202, %v45
  %v2648 = vmul.f32 %v2578, %v46
  %v2649 = vmul.f32 %v2626, %v47
  %v2650 = vmul.f32 %v2201, %v48
  %v2651 = vmul.f32 %v2579, %v49
  %v2652 = vmul.f32 %v2627, %v50
  %v2653 = vmul.f32 %v2200, %v51
  %v2654 = vmul.f32 %v2580, %v52
  %v2655 = vmul.f32 %v2628, %v53
  %v2656 = vmul.f32 %v2199, %v54
  %v2657 = vmul.f32 %v2581, %v55
  %v2658 = vmul.f32 %v2629, %v56
  %v2659 = vmul.f32 %v2198, %v57
  %v2660 = vmul.f32 %v2582, %v58
  %v2661 = vmul.f32 %v2630, %v59
  %v2662 = vmul.f32 %v2197, %v60
  %v2663 = vmul.f32 %v2583, %v61
  %v2664 = vmul.f32 %v2631, %v62
  %v2665 = vmul.f32 %v2196, %v63
  %v2666 = vmul.f32 %v2584, %v64
  %v2667 = vmul.f32 %v2632, %v65
  %v2668 = vmul.f32 %v2195, %v66
  %v2669 = vmul.f32 %v2585, %v67
  %v2670 = vmul.f32 %v2633, %v68
  %v2671 = vmul.f32 %v2194, %v69
  %v2672 = vmul.f32 %v2586, %v70
  %v2673 = vmul.f32 %v2634, %v71
  %v2674 = vmul.f32 %v2193, %v72
  %v2675 = vmul.f32 %v2587, %v73
  %v2676 = vmul.f32 %v2635, %v74
  %v2677 = vmul.f32 %v2192, %v75
  %v2678 = vmul.f32 %v2588, %v76
  %v2679 = vmul.f32 %v2636, %v77
  %v2680 = vmul.f32 %v2191, %v78
  %v2681 = vmul.f32 %v2589, %v79
  %v2682 = vmul.f32 %v2637, %v80
  %v2683 = vmul.f32 %v2206, %v81
  %v2684 = vmul.f32 %v2590, %v82
  %v2685 = vmul.f32 %v2638, %v83
  %v2686 = vmul.f32 %v2205, %v84
  %v2687 = vpack.c.bf16 %v2642, %v2639
  %v2688 = vpack.c.bf16 %v2643, %v2640
  %v2689 = vpack.c.bf16 %v2644, %v2641
  %v2690 = vpack.c.bf16 %v2648, %v2645
  %v2691 = vpack.c.bf16 %v2649, %v2646
  %v2692 = vpack.c.bf16 %v2650, %v2647
  %v2693 = vpack.c.bf16 %v2654, %v2651
  %v2694 = vpack.c.bf16 %v2655, %v2652
  %v2695 = vpack.c.bf16 %v2656, %v2653
  %v2696 = vpack.c.bf16 %v2660, %v2657
  %v2697 = vpack.c.bf16 %v2661, %v2658
  %v2698 = vpack.c.bf16 %v2662, %v2659
  %v2699 = vpack.c.bf16 %v2666, %v2663
  %v2700 = vpack.c.bf16 %v2667, %v2664
  %v2701 = vpack.c.bf16 %v2668, %v2665
  %v2702 = vpack.c.bf16 %v2672, %v2669
  %v2703 = vpack.c.bf16 %v2673, %v2670
  %v2704 = vpack.c.bf16 %v2674, %v2671
  %v2705 = vpack.c.bf16 %v2678, %v2675
  %v2706 = vpack.c.bf16 %v2679, %v2676
  %v2707 = vpack.c.bf16 %v2680, %v2677
  %v2708 = vpack.c.bf16 %v2684, %v2681
  %v2709 = vpack.c.bf16 %v2685, %v2682
  %v2710 = vpack.c.bf16 %v2686, %v2683
  %s2711 = scalar_lea.vmem %s2, 288
  %v2712 = vld [vmem:[%s2711] sm:$0xf]
  %v2713 = vld [vmem:[%s2711 + $0x4] sm:$0xf]
  %v2714 = vld [vmem:[%s2711 + $0x8] sm:$0xf]
  %v2715 = vld [vmem:[%s2711 + $0xc] sm:$0xf]
  %v2716 = vld [vmem:[%s2711 + $0x10] sm:$0xf]
  %v2717 = vld [vmem:[%s2711 + $0x14] sm:$0xf]
  %v2718 = vld [vmem:[%s2711 + $0x18] sm:$0xf]
  %v2719 = vld [vmem:[%s2711 + $0x1c] sm:$0xf]
  %v2720 = vld [vmem:[%s2711 + $0x20] sm:$0xf]
  %v2721 = vld [vmem:[%s2711 + $0x24] sm:$0xf]
  %v2722 = vld [vmem:[%s2711 + $0x28] sm:$0xf]
  %v2723 = vld [vmem:[%s2711 + $0x2c] sm:$0xf]
  %v2724 = vld [vmem:[%s2711 + $0x30] sm:$0xf]
  %v2725 = vld [vmem:[%s2711 + $0x34] sm:$0xf]
  %v2726 = vld [vmem:[%s2711 + $0x38] sm:$0xf]
  %v2727 = vld [vmem:[%s2711 + $0x3c] sm:$0xf]
  %v2728 = vld [vmem:[%s2711 + $0x40] sm:$0xf]
  %v2729 = vld [vmem:[%s2711 + $0x44] sm:$0xf]
  %v2730 = vld [vmem:[%s2711 + $0x48] sm:$0xf]
  %v2731 = vld [vmem:[%s2711 + $0x4c] sm:$0xf]
  %v2732 = vld [vmem:[%s2711 + $0x50] sm:$0xf]
  %v2733 = vld [vmem:[%s2711 + $0x54] sm:$0xf]
  %v2734 = vld [vmem:[%s2711 + $0x58] sm:$0xf]
  %v2735 = vld [vmem:[%s2711 + $0x5c] sm:$0xf]
  %v2736 = vld [vmem:[%s2711 + $0x60] sm:$0xf]
  %v2737 = vld [vmem:[%s2711 + $0x64] sm:$0xf]
  %v2738 = vld [vmem:[%s2711 + $0x68] sm:$0xf]
  %v2739 = vld [vmem:[%s2711 + $0x6c] sm:$0xf]
  %v2740 = vld [vmem:[%s2711 + $0x70] sm:$0xf]
  %v2741 = vld [vmem:[%s2711 + $0x74] sm:$0xf]
  %v2742 = vld [vmem:[%s2711 + $0x78] sm:$0xf]
  %v2743 = vld [vmem:[%s2711 + $0x7c] sm:$0xf]
  %v2744 = vld [vmem:[%s2711 + $0x80] sm:$0xf]
  %v2745 = vld [vmem:[%s2711 + $0x84] sm:$0xf]
  %v2746 = vld [vmem:[%s2711 + $0x88] sm:$0xf]
  %v2747 = vld [vmem:[%s2711 + $0x8c] sm:$0xf]
  %v2784 = vunpack.c.l.b16 %v2712
  %v2785 = vunpack.c.l.b16 %v2713
  %v2786 = vunpack.c.l.b16 %v2714
  %v2787 = vunpack.c.l.b16 %v2715
  %v2788 = vunpack.c.l.b16 %v2716
  %v2789 = vunpack.c.l.b16 %v2717
  %v2790 = vunpack.c.l.b16 %v2718
  %v2791 = vunpack.c.l.b16 %v2719
  %v2792 = vunpack.c.l.b16 %v2720
  %v2793 = vunpack.c.l.b16 %v2721
  %v2794 = vunpack.c.l.b16 %v2722
  %v2795 = vunpack.c.l.b16 %v2723
  %v2796 = vunpack.c.l.b16 %v2724
  %v2797 = vunpack.c.l.b16 %v2725
  %v2798 = vunpack.c.l.b16 %v2726
  %v2799 = vunpack.c.l.b16 %v2727
  %v2800 = vunpack.c.l.b16 %v2728
  %v2801 = vunpack.c.l.b16 %v2729
  %v2802 = vunpack.c.l.b16 %v2730
  %v2803 = vunpack.c.l.b16 %v2731
  %v2804 = vunpack.c.l.b16 %v2732
  %v2805 = vunpack.c.l.b16 %v2733
  %v2806 = vunpack.c.l.b16 %v2734
  %v2807 = vunpack.c.l.b16 %v2735
  %v2808 = vunpack.c.l.b16 %v2736
  %v2809 = vunpack.c.l.b16 %v2737
  %v2810 = vunpack.c.l.b16 %v2738
  %v2811 = vunpack.c.l.b16 %v2739
  %v2812 = vunpack.c.l.b16 %v2740
  %v2813 = vunpack.c.l.b16 %v2741
  %v2814 = vunpack.c.l.b16 %v2742
  %v2815 = vunpack.c.l.b16 %v2743
  %v2816 = vunpack.c.l.b16 %v2744
  %v2817 = vunpack.c.l.b16 %v2745
  %v2818 = vunpack.c.l.b16 %v2746
  %v2819 = vunpack.c.l.b16 %v2747
  %v2820 = vpack.c.b16 %v2785, %v2784
  %v2821 = vpack.c.b16 %v2787, %v2786
  %v2822 = vpack.c.b16 %v2789, %v2788
  %v2823 = vpack.c.b16 %v2791, %v2790
  %v2824 = vpack.c.b16 %v2793, %v2792
  %v2825 = vpack.c.b16 %v2795, %v2794
  %v2826 = vpack.c.b16 %v2797, %v2796
  %v2827 = vpack.c.b16 %v2799, %v2798
  %v2828 = vpack.c.b16 %v2801, %v2800
  %v2829 = vpack.c.b16 %v2803, %v2802
  %v2830 = vpack.c.b16 %v2805, %v2804
  %v2831 = vpack.c.b16 %v2807, %v2806
  %v2832 = vpack.c.b16 %v2809, %v2808
  %v2833 = vpack.c.b16 %v2811, %v2810
  %v2834 = vpack.c.b16 %v2813, %v2812
  %v2835 = vpack.c.b16 %v2815, %v2814
  %v2836 = vpack.c.b16 %v2817, %v2816
  %v2837 = vpack.c.b16 %v2819, %v2818
  %v2857 = vsel %vm489, %v2689, 0
  %v2860 = vsel %vm489, %v2692, 0
  %v2863 = vsel %vm489, %v2695, 0
  %v2866 = vsel %vm489, %v2698, 0
  %v2869 = vsel %vm489, %v2701, 0
  %v2872 = vsel %vm489, %v2704, 0
  %v2875 = vsel %vm489, %v2707, 0
  %v2878 = vsel %vm489, %v2710, 0
  %2880 = vmatprep.subr.bf16.mxu0 0
  %2881 = vmatpush1.bf16.msra.mxu0 %v2820
  %2882 = vmatprep.subr.bf16.mxu0 0
  %2883 = vmatpush1.bf16.msra.mxu0 %v2821
  %2884 = vmatprep.subr.bf16.mxu0 0
  %2885 = vmatpush1.bf16.msra.mxu0 %v2822
  %2886 = vmatprep.subr.bf16.mxu0 0
  %2887 = vmatpush1.bf16.msra.mxu0 %v2823
  %2888 = vmatprep.subr.bf16.mxu0 0
  %2889 = vmatpush1.bf16.msra.mxu0 %v2824
  %2890 = vmatprep.subr.bf16.mxu0 0
  %2891 = vmatpush1.bf16.msra.mxu0 %v2825
  %2892 = vmatprep.subr.bf16.mxu0 0
  %2893 = vmatpush1.bf16.msra.mxu0 %v2826
  %2894 = vmatprep.subr.bf16.mxu0 0
  %2895 = vmatpush1.bf16.msra.mxu0 %v2827
  %2896 = vmatprep.subr.bf16.mxu0 0
  %2897 = vmatpush1.bf16.msra.mxu0 %v2828
  %2898 = vmatprep.subr.bf16.mxu0 0
  %2899 = vmatpush1.bf16.msra.mxu0 %v2829
  %2900 = vmatprep.subr.bf16.mxu0 0
  %2901 = vmatpush1.bf16.msra.mxu0 %v2830
  %2902 = vmatprep.subr.bf16.mxu0 0
  %2903 = vmatpush1.bf16.msra.mxu0 %v2831
  %2904 = vmatprep.subr.bf16.mxu0 0
  %2905 = vmatpush1.bf16.msra.mxu0 %v2832
  %2906 = vmatprep.subr.bf16.mxu0 0
  %2907 = vmatpush1.bf16.msra.mxu0 %v2833
  %2908 = vmatprep.subr.bf16.mxu0 0
  %2909 = vmatpush1.bf16.msra.mxu0 %v2834
  %2910 = vmatprep.subr.bf16.mxu0 0
  %2911 = vmatpush1.bf16.msra.mxu0 %v2835
  %2912 = vmatprep.mubr.bf16.mxu0 %v2688
  %2913 = vmatmul.mubr.bf16.gmra.mrb[0].mxu0 %v2687
  %v2914 = vpop.f32.mrb[0].mxu0
  %v2915 = vadd.f32 0.0, %v2914
  %v2916 = vpop.f32.mrb[0].mxu0
  %v2917 = vpop.f32.mrb[0].mxu0
  %v2918 = vadd.f32 0.0, %v2917
  %v2919 = vpop.f32.mrb[0].mxu0
  %2920 = vmatprep.mubr.bf16.mxu0 %v2691
  %2921 = vmatmul.mubr.bf16.gmra.mrb[0].mxu0 %v2690
  %v2922 = vpop.f32.mrb[0].mxu0
  %v2923 = vadd.f32 0.0, %v2922
  %v2924 = vpop.f32.mrb[0].mxu0
  %v2925 = vpop.f32.mrb[0].mxu0
  %v2926 = vadd.f32 0.0, %v2925
  %v2927 = vpop.f32.mrb[0].mxu0
  %2928 = vmatprep.mubr.bf16.mxu0 %v2694
  %2929 = vmatmul.mubr.bf16.gmra.mrb[0].mxu0 %v2693
  %v2930 = vpop.f32.mrb[0].mxu0
  %v2931 = vadd.f32 0.0, %v2930
  %v2932 = vpop.f32.mrb[0].mxu0
  %v2933 = vpop.f32.mrb[0].mxu0
  %v2934 = vadd.f32 0.0, %v2933
  %v2935 = vpop.f32.mrb[0].mxu0
  %2936 = vmatprep.mubr.bf16.mxu0 %v2697
  %2937 = vmatmul.mubr.bf16.gmra.mrb[0].mxu0 %v2696
  %v2938 = vpop.f32.mrb[0].mxu0
  %v2939 = vadd.f32 0.0, %v2938
  %v2940 = vpop.f32.mrb[0].mxu0
  %v2941 = vpop.f32.mrb[0].mxu0
  %v2942 = vadd.f32 0.0, %v2941
  %v2943 = vpop.f32.mrb[0].mxu0
  %2944 = vmatprep.mubr.bf16.mxu0 %v2700
  %2945 = vmatmul.mubr.bf16.gmra.mrb[0].mxu0 %v2699
  %v2946 = vpop.f32.mrb[0].mxu0
  %v2947 = vadd.f32 0.0, %v2946
  %v2948 = vpop.f32.mrb[0].mxu0
  %v2949 = vpop.f32.mrb[0].mxu0
  %v2950 = vadd.f32 0.0, %v2949
  %v2951 = vpop.f32.mrb[0].mxu0
  %2952 = vmatprep.mubr.bf16.mxu0 %v2703
  %2953 = vmatmul.mubr.bf16.gmra.mrb[0].mxu0 %v2702
  %v2954 = vpop.f32.mrb[0].mxu0
  %v2955 = vadd.f32 0.0, %v2954
  %v2956 = vpop.f32.mrb[0].mxu0
  %v2957 = vpop.f32.mrb[0].mxu0
  %v2958 = vadd.f32 0.0, %v2957
  %v2959 = vpop.f32.mrb[0].mxu0
  %2960 = vmatprep.mubr.bf16.mxu0 %v2706
  %2961 = vmatmul.mubr.bf16.gmra.mrb[0].mxu0 %v2705
  %v2962 = vpop.f32.mrb[0].mxu0
  %v2963 = vadd.f32 0.0, %v2962
  %v2964 = vpop.f32.mrb[0].mxu0
  %v2965 = vpop.f32.mrb[0].mxu0
  %v2966 = vadd.f32 0.0, %v2965
  %v2967 = vpop.f32.mrb[0].mxu0
  %2968 = vmatprep.mubr.bf16.mxu0 %v2709
  %2969 = vmatmul.mubr.bf16.gmra.mrb[0].mxu0 %v2708
  %v2970 = vpop.f32.mrb[0].mxu0
  %v2971 = vadd.f32 0.0, %v2970
  %v2972 = vpop.f32.mrb[0].mxu0
  %v2973 = vpop.f32.mrb[0].mxu0
  %v2974 = vadd.f32 0.0, %v2973
  %v2975 = vpop.f32.mrb[0].mxu0
  %2976 = vdwg.mxu0
  %2977 = vmatprep.subr.bf16.mxu0 0
  %2978 = vmatpush1.bf16.msra.mxu0 %v2836
  %2979 = vmatprep.subr.bf16.mxu0 0
  %2980 = vmatpush1.bf16.msra.mxu0 %v2837
  %2981 = vmatprep.subr.bf16.mxu0 0
  %2982 = vmatpush1.bf16.msra.mxu0 0
  %2983 = vmatprep.subr.bf16.mxu0 0
  %2984 = vmatpush1.bf16.msra.mxu0 0
  %2985 = vmatprep.subr.bf16.mxu0 0
  %2986 = vmatpush1.bf16.msra.mxu0 0
  %2987 = vmatprep.subr.bf16.mxu0 0
  %2988 = vmatpush1.bf16.msra.mxu0 0
  %2989 = vmatprep.subr.bf16.mxu0 0
  %2990 = vmatpush1.bf16.msra.mxu0 0
  %2991 = vmatprep.subr.bf16.mxu0 0
  %2992 = vmatpush1.bf16.msra.mxu0 0
  %2993 = vmatprep.subr.bf16.mxu0 0
  %2994 = vmatpush1.bf16.msra.mxu0 0
  %2995 = vmatprep.subr.bf16.mxu0 0
  %2996 = vmatpush1.bf16.msra.mxu0 0
  %2997 = vmatprep.subr.bf16.mxu0 0
  %2998 = vmatpush1.bf16.msra.mxu0 0
  %2999 = vmatprep.subr.bf16.mxu0 0
  %3000 = vmatpush1.bf16.msra.mxu0 0
  %3001 = vmatprep.subr.bf16.mxu0 0
  %3002 = vmatpush1.bf16.msra.mxu0 0
  %3003 = vmatprep.subr.bf16.mxu0 0
  %3004 = vmatpush1.bf16.msra.mxu0 0
  %3005 = vmatprep.subr.bf16.mxu0 0
  %3006 = vmatpush1.bf16.msra.mxu0 0
  %3007 = vmatprep.subr.bf16.mxu0 0
  %3008 = vmatpush1.bf16.msra.mxu0 0
  %3009 = vmatprep.mubr.bf16.mxu0 0
  %3010 = vmatmul.mubr.bf16.gmra.mrb[0].mxu0 %v2857
  %v3011 = vpop.f32.mrb[0].mxu0
  %v3012 = vadd.f32 %v2915, %v3011
  %v3013 = vpop.f32.mrb[0].mxu0
  %v3014 = vpop.f32.mrb[0].mxu0
  %v3015 = vadd.f32 %v2918, %v3014
  %v3016 = vpop.f32.mrb[0].mxu0
  %3017 = vmatprep.mubr.bf16.mxu0 0
  %3018 = vmatmul.mubr.bf16.gmra.mrb[0].mxu0 %v2860
  %v3019 = vpop.f32.mrb[0].mxu0
  %v3020 = vadd.f32 %v2923, %v3019
  %v3021 = vpop.f32.mrb[0].mxu0
  %v3022 = vpop.f32.mrb[0].mxu0
  %v3023 = vadd.f32 %v2926, %v3022
  %v3024 = vpop.f32.mrb[0].mxu0
  %3025 = vmatprep.mubr.bf16.mxu0 0
  %3026 = vmatmul.mubr.bf16.gmra.mrb[0].mxu0 %v2863
  %v3027 = vpop.f32.mrb[0].mxu0
  %v3028 = vadd.f32 %v2931, %v3027
  %v3029 = vpop.f32.mrb[0].mxu0
  %v3030 = vpop.f32.mrb[0].mxu0
  %v3031 = vadd.f32 %v2934, %v3030
  %v3032 = vpop.f32.mrb[0].mxu0
  %3033 = vmatprep.mubr.bf16.mxu0 0
  %3034 = vmatmul.mubr.bf16.gmra.mrb[0].mxu0 %v2866
  %v3035 = vpop.f32.mrb[0].mxu0
  %v3036 = vadd.f32 %v2939, %v3035
  %v3037 = vpop.f32.mrb[0].mxu0
  %v3038 = vpop.f32.mrb[0].mxu0
  %v3039 = vadd.f32 %v2942, %v3038
  %v3040 = vpop.f32.mrb[0].mxu0
  %3041 = vmatprep.mubr.bf16.mxu0 0
  %3042 = vmatmul.mubr.bf16.gmra.mrb[0].mxu0 %v2869
  %v3043 = vpop.f32.mrb[0].mxu0
  %v3044 = vadd.f32 %v2947, %v3043
  %v3045 = vpop.f32.mrb[0].mxu0
  %v3046 = vpop.f32.mrb[0].mxu0
  %v3047 = vadd.f32 %v2950, %v3046
  %v3048 = vpop.f32.mrb[0].mxu0
  %3049 = vmatprep.mubr.bf16.mxu0 0
  %3050 = vmatmul.mubr.bf16.gmra.mrb[0].mxu0 %v2872
  %v3051 = vpop.f32.mrb[0].mxu0
  %v3052 = vadd.f32 %v2955, %v3051
  %v3053 = vpop.f32.mrb[0].mxu0
  %v3054 = vpop.f32.mrb[0].mxu0
  %v3055 = vadd.f32 %v2958, %v3054
  %v3056 = vpop.f32.mrb[0].mxu0
  %3057 = vmatprep.mubr.bf16.mxu0 0
  %3058 = vmatmul.mubr.bf16.gmra.mrb[0].mxu0 %v2875
  %v3059 = vpop.f32.mrb[0].mxu0
  %v3060 = vadd.f32 %v2963, %v3059
  %v3061 = vpop.f32.mrb[0].mxu0
  %v3062 = vpop.f32.mrb[0].mxu0
  %v3063 = vadd.f32 %v2966, %v3062
  %v3064 = vpop.f32.mrb[0].mxu0
  %3065 = vmatprep.mubr.bf16.mxu0 0
  %3066 = vmatmul.mubr.bf16.gmra.mrb[0].mxu0 %v2878
  %v3067 = vpop.f32.mrb[0].mxu0
  %v3068 = vadd.f32 %v2971, %v3067
  %v3069 = vpop.f32.mrb[0].mxu0
  %v3070 = vpop.f32.mrb[0].mxu0
  %v3071 = vadd.f32 %v2974, %v3070
  %v3072 = vpop.f32.mrb[0].mxu0
  %3073 = vdwg.mxu0
  %s3074 = scalar_lea.vmem %s3, 2
  %v3075 = vld [vmem:[%s3074] sm:$0x1]
  %v3077 = vlaneseq
  %v3078 = vshrl.u32 %v3077, 7
  %v3079 = vsub.s32 0, %v3078
  %v3080 = vrot.slane %v3075, %v3079
  %v3082 = vmul.f32 %v3012, %v3080
  %v3083 = vmul.f32 %v3015, %v3080
  %v3084 = vmul.f32 %v3020, %v3080
  %v3085 = vmul.f32 %v3023, %v3080
  %v3086 = vmul.f32 %v3028, %v3080
  %v3087 = vmul.f32 %v3031, %v3080
  %v3088 = vmul.f32 %v3036, %v3080
  %v3089 = vmul.f32 %v3039, %v3080
  %v3090 = vmul.f32 %v3044, %v3080
  %v3091 = vmul.f32 %v3047, %v3080
  %v3092 = vmul.f32 %v3052, %v3080
  %v3093 = vmul.f32 %v3055, %v3080
  %v3094 = vmul.f32 %v3060, %v3080
  %v3095 = vmul.f32 %v3063, %v3080
  %v3096 = vmul.f32 %v3068, %v3080
  %v3097 = vmul.f32 %v3071, %v3080
  %s3098 = scalar_lea.vmem %s4, 2
  %v3099 = vld [vmem:[%s3098] sm:$0x1]
  %v3101 = vlaneseq
  %v3102 = vshrl.u32 %v3101, 7
  %v3103 = vsub.s32 0, %v3102
  %v3104 = vrot.slane %v3099, %v3103
  %v3106 = vadd.f32 %v3082, %v3104
  %v3107 = vadd.f32 %v3083, %v3104
  %v3108 = vadd.f32 %v3084, %v3104
  %v3109 = vadd.f32 %v3085, %v3104
  %v3110 = vadd.f32 %v3086, %v3104
  %v3111 = vadd.f32 %v3087, %v3104
  %v3112 = vadd.f32 %v3088, %v3104
  %v3113 = vadd.f32 %v3089, %v3104
  %v3114 = vadd.f32 %v3090, %v3104
  %v3115 = vadd.f32 %v3091, %v3104
  %v3116 = vadd.f32 %v3092, %v3104
  %v3117 = vadd.f32 %v3093, %v3104
  %v3118 = vadd.f32 %v3094, %v3104
  %v3119 = vadd.f32 %v3095, %v3104
  %v3120 = vadd.f32 %v3096, %v3104
  %v3121 = vadd.f32 %v3097, %v3104
  %vm3122 = vcmp.ge.f32.partialorder %v3106, 0.0
  %vm3123 = vcmp.ge.f32.partialorder %v3107, 0.0
  %vm3124 = vcmp.ge.f32.partialorder %v3108, 0.0
  %vm3125 = vcmp.ge.f32.partialorder %v3109, 0.0
  %vm3126 = vcmp.ge.f32.partialorder %v3110, 0.0
  %vm3127 = vcmp.ge.f32.partialorder %v3111, 0.0
  %vm3128 = vcmp.ge.f32.partialorder %v3112, 0.0
  %vm3129 = vcmp.ge.f32.partialorder %v3113, 0.0
  %vm3130 = vcmp.ge.f32.partialorder %v3114, 0.0
  %vm3131 = vcmp.ge.f32.partialorder %v3115, 0.0
  %vm3132 = vcmp.ge.f32.partialorder %v3116, 0.0
  %vm3133 = vcmp.ge.f32.partialorder %v3117, 0.0
  %vm3134 = vcmp.ge.f32.partialorder %v3118, 0.0
  %vm3135 = vcmp.ge.f32.partialorder %v3119, 0.0
  %vm3136 = vcmp.ge.f32.partialorder %v3120, 0.0
  %vm3137 = vcmp.ge.f32.partialorder %v3121, 0.0
  %v3138 = vmul.f32 %v3106, 0.2
  %v3139 = vmul.f32 %v3107, 0.2
  %v3140 = vmul.f32 %v3108, 0.2
  %v3141 = vmul.f32 %v3109, 0.2
  %v3142 = vmul.f32 %v3110, 0.2
  %v3143 = vmul.f32 %v3111, 0.2
  %v3144 = vmul.f32 %v3112, 0.2
  %v3145 = vmul.f32 %v3113, 0.2
  %v3146 = vmul.f32 %v3114, 0.2
  %v3147 = vmul.f32 %v3115, 0.2
  %v3148 = vmul.f32 %v3116, 0.2
  %v3149 = vmul.f32 %v3117, 0.2
  %v3150 = vmul.f32 %v3118, 0.2
  %v3151 = vmul.f32 %v3119, 0.2
  %v3152 = vmul.f32 %v3120, 0.2
  %v3153 = vmul.f32 %v3121, 0.2
  %v3154 = vsel %vm3122, %v3106, %v3138
  %v3155 = vsel %vm3123, %v3107, %v3139
  %v3156 = vsel %vm3124, %v3108, %v3140
  %v3157 = vsel %vm3125, %v3109, %v3141
  %v3158 = vsel %vm3126, %v3110, %v3142
  %v3159 = vsel %vm3127, %v3111, %v3143
  %v3160 = vsel %vm3128, %v3112, %v3144
  %v3161 = vsel %vm3129, %v3113, %v3145
  %v3162 = vsel %vm3130, %v3114, %v3146
  %v3163 = vsel %vm3131, %v3115, %v3147
  %v3164 = vsel %vm3132, %v3116, %v3148
  %v3165 = vsel %vm3133, %v3117, %v3149
  %v3166 = vsel %vm3134, %v3118, %v3150
  %v3167 = vsel %vm3135, %v3119, %v3151
  %v3168 = vsel %vm3136, %v3120, %v3152
  %v3169 = vsel %vm3137, %v3121, %v3153
  %3170 = vst.msk [vmem:[%s5] sm:$0xff] %vm489, %v3154
  %3171 = vst.msk [vmem:[%s5 + $0x8] sm:$0xff] %vm489, %v3155
  %3172 = vst.msk [vmem:[%s5 + $0x10] sm:$0xff] %vm489, %v3156
  %3173 = vst.msk [vmem:[%s5 + $0x18] sm:$0xff] %vm489, %v3157
  %3174 = vst.msk [vmem:[%s5 + $0x20] sm:$0xff] %vm489, %v3158
  %3175 = vst.msk [vmem:[%s5 + $0x28] sm:$0xff] %vm489, %v3159
  %3176 = vst.msk [vmem:[%s5 + $0x30] sm:$0xff] %vm489, %v3160
  %3177 = vst.msk [vmem:[%s5 + $0x38] sm:$0xff] %vm489, %v3161
  %3178 = vst.msk [vmem:[%s5 + $0x40] sm:$0xff] %vm489, %v3162
  %3179 = vst.msk [vmem:[%s5 + $0x48] sm:$0xff] %vm489, %v3163
  %3180 = vst.msk [vmem:[%s5 + $0x50] sm:$0xff] %vm489, %v3164
  %3181 = vst.msk [vmem:[%s5 + $0x58] sm:$0xff] %vm489, %v3165
  %3182 = vst.msk [vmem:[%s5 + $0x60] sm:$0xff] %vm489, %v3166
  %3183 = vst.msk [vmem:[%s5 + $0x68] sm:$0xff] %vm489, %v3167
  %3184 = vst.msk [vmem:[%s5 + $0x70] sm:$0xff] %vm489, %v3168
  %3185 = vst.msk [vmem:[%s5 + $0x78] sm:$0xff] %vm489, %v3169
  // Predicated region
  $region22: #{smoe_ae_forward.2} parent=0 // pred_check
    _
  $region23: #{smoe_ae_forward.2} parent=0 // pred_check_branch
    %3187 = sbr.rel (0) target = $region25
  $region24: #{smoe_ae_forward.2} parent=0 // pred_region
    _
  $region25: #{smoe_ae_forward.2} parent=0 // pred_fallthru
    _
  // Predicated region
  $region26: #{smoe_ae_forward.2} parent=0 // pred_check
    _
  $region27: #{smoe_ae_forward.2} parent=0 // pred_check_branch
    %3189 = sbr.rel (0) target = $region29
  $region28: #{smoe_ae_forward.2} parent=0 // pred_region
    _
  $region29: #{smoe_ae_forward.2} parent=0 // pred_fallthru
    _

</llo_original>
